<compile_context>
chip_gen: v5e
topology: v5e:2x2
jax: 0.10.0
libtpu: 0.0.40
codegen_flags: <defaults>
</compile_context>

<pallas_src>
import numpy as np
import jax
import jax.numpy as jnp
from jax.experimental import pallas as pl
from jax.experimental.pallas import tpu as pltpu

# ---------------- configuration (mirrors LSTNetBase.__init__ arguments) ----------------
NUM_SERIES  = 4      # num_series
CHANNELS    = 6      # conv1d channels (divisible by skip_size)
KERNEL_SIZE = 3
RNN_CELLS   = 10     # rnn_num_cells      (rnn_cell_type='GRU')
SKIP_CELLS  = 5      # skip_rnn_num_cells (skip_rnn_cell_type='GRU')
SKIP_SIZE   = 2
AR_WINDOW   = 4
CONTEXT_LEN = 16
HORIZON     = 3      # horizon path => prediction_length=None, ar_fc = Linear(ar_window, 1)

CONV_OUT  = CONTEXT_LEN - KERNEL_SIZE        # as defined in the torch module (13)
CONV_SKIP = CONV_OUT // SKIP_SIZE            # 6
CONV_LEN  = CONTEXT_LEN - KERNEL_SIZE + 1    # true conv output length along time (14)

BATCH   = 8                                  # >= 8 to fill the f32 sublanes
TOTAL_T = 20                                 # history length fed in (>= context_length)

_MIN_SCALE = 1e-10                           # MeanScaler minimum_scale

# ---------------- packed-parameter slab layout ----------------
GATE       = 128                             # lane stride per GRU gate (vreg aligned)
NGATES     = 3
SLAB_LANES = NGATES * GATE                   # 384

# 8-aligned row offsets inside the (SLAB_ROWS, SLAB_LANES) parameter slab
R_WIH_M, R_WHH_M, R_BIH_M, R_BHN_M = 0, 8, 24, 32      # main GRU
R_WIH_S, R_WHH_S, R_BIH_S, R_BHN_S = 40, 48, 56, 64    # skip GRU
R_CW, R_CB, R_FCW, R_FCB = 72, 88, 96, 120             # conv / fc
SLAB_ROWS = 128


def _sigmoid(x):
    # single EUP transcendental (tanh) instead of exp + reciprocal
    return 0.5 * jnp.tanh(0.5 * x) + 0.5


# ---------------------------------- kernel ----------------------------------
def _lstnet_kernel(x_ref, obs_ref, ft_ref, slab_ref, ar_ref,
                   loss_ref, gi_main_ref, gi_skip_ref):
    B, N, C = BATCH, NUM_SERIES, CHANNELS
    L, K = CONV_LEN, KERNEL_SIZE
    Hr, Hs = RNN_CELLS, SKIP_CELLS
    ss, cs = SKIP_SIZE, CONV_SKIP
    Gt = GATE

    x = x_ref[...]            # (ctx, B, N) time-major
    obs = obs_ref[...]

    # ---- MeanScaler (per item, per series, over time; keepdim) ----
    num_obs = jnp.sum(obs, axis=0)                                   # (B, N)
    sum_abs = jnp.sum(jnp.abs(x) * obs, axis=0)                      # (B, N)
    total_obs = jnp.sum(num_obs, axis=0, keepdims=True)              # (1, N)
    default_scale = jnp.sum(sum_abs, axis=0, keepdims=True) / jnp.maximum(total_obs, 1.0)
    item_scale = sum_abs / jnp.maximum(num_obs, 1.0)
    scale = jnp.where(sum_abs > 0.0, item_scale,
                      jnp.broadcast_to(default_scale, (B, N)))
    scale = jnp.maximum(scale, _MIN_SCALE)                           # (B, N)
    inv_scale = 1.0 / scale                                          # one (B,N) divide
    scaled = x * inv_scale[None, :, :]                               # (ctx, B, N)

    # ---- Conv2d(1, C, (num_series, K)) + ReLU as a single im2col matmul ----
    x_stack = jnp.concatenate(
        [scaled[k:k + L].reshape(L * B, N) for k in range(K)], axis=1)   # (L*B, K*N)
    cw = slab_ref[R_CW:R_CW + K * N, 0:C]                                 # (K*N, C)
    cb = slab_ref[R_CB:R_CB + 1, 0:C]                                     # (1, C)
    c_all = jnp.maximum(
        jnp.dot(x_stack, cw, preferred_element_type=jnp.float32) + cb, 0.0)   # (L*B, C)

    # ---- hoisted input projections (off the recurrent critical path) ----
    w_ih_m = slab_ref[R_WIH_M:R_WIH_M + C, :]                             # (C, 3*GATE)
    b_ih_m = slab_ref[R_BIH_M:R_BIH_M + 1, :]                             # (1, 3*GATE)
    gi_main_ref[...] = jnp.dot(c_all, w_ih_m,
                               preferred_element_type=jnp.float32) + b_ih_m   # (L*B, 384)

    w_ih_s = slab_ref[R_WIH_S:R_WIH_S + C, :]
    b_ih_s = slab_ref[R_BIH_S:R_BIH_S + 1, :]
    skip_x = c_all[(L - cs * ss) * B:, :]                                 # (cs*ss*B, C)
    gi_skip_ref[...] = jnp.dot(skip_x, w_ih_s,
                               preferred_element_type=jnp.float32) + b_ih_s   # (cs*ss*B, 384)

    # recurrent weights (loaded once)
    w_hh_m = slab_ref[R_WHH_M:R_WHH_M + Hr, :]                            # (Hr, 3*GATE)
    b_hn_m = slab_ref[R_BHN_M:R_BHN_M + 1, 2 * Gt:2 * Gt + Hr]            # (1, Hr)
    w_hh_s = slab_ref[R_WHH_S:R_WHH_S + Hs, :]                            # (Hs, 3*GATE)
    b_hn_s = slab_ref[R_BHN_S:R_BHN_S + 1, 2 * Gt:2 * Gt + Hs]            # (1, Hs)

    def gru_step(gi_t, h, w_hh, b_hn, H):
        # only matmul on the sequential chain; gate slices are vreg-aligned (stride GATE)
        gh = jnp.dot(h, w_hh, preferred_element_type=jnp.float32)         # (rows, 3*GATE)
        r = _sigmoid(gi_t[:, 0:H] + gh[:, 0:H])
        z = _sigmoid(gi_t[:, Gt:Gt + H] + gh[:, Gt:Gt + H])
        n = jnp.tanh(gi_t[:, 2 * Gt:2 * Gt + H] + r * (gh[:, 2 * Gt:2 * Gt + H] + b_hn))
        return (1.0 - z) * n + z * h

    # ---- main GRU over the L conv time steps (h0 = 0), fully unrolled ----
    h_r = jnp.zeros((B, Hr), jnp.float32)
    for t in range(L):
        h_r = gru_step(gi_main_ref[t * B:(t + 1) * B, :], h_r, w_hh_m, b_hn_m, Hr)

    # ---- skip GRU: both phases fused into one virtual batch of ss*B rows, unrolled ----
    h_s = jnp.zeros((ss * B, Hs), jnp.float32)
    for s in range(cs):
        h_s = gru_step(gi_skip_ref[s * ss * B:(s + 1) * ss * B, :], h_s, w_hh_s, b_hn_s, Hs)

    # ---- fully connected head ----
    # virtual-batch rows are (phase j)*B + b; per batch b the feature is [h(b,0), h(b,1), ...]
    feat = jnp.concatenate([h_r] + [h_s[j * B:(j + 1) * B, :] for j in range(ss)], axis=1)
    fc_w = slab_ref[R_FCW:R_FCW + Hr + ss * Hs, 0:N]                      # (D, N)
    fc_b = slab_ref[R_FCB:R_FCB + 1, 0:N]                                 # (1, N)
    res = jnp.dot(feat, fc_w, preferred_element_type=jnp.float32) + fc_b  # (B, N)

    # ---- autoregressive highway: Linear(ar_window, 1) applied per series ----
    ar = jnp.zeros((B, N), jnp.float32)
    for w in range(AR_WINDOW):
        ar = ar + ar_ref[0, w] * scaled[CONTEXT_LEN - AR_WINDOW + w]
    ar = ar + ar_ref[0, AR_WINDOW]

    out = res + ar                                                        # output_activation=None
    pred = out * scale                                                    # ret * scale
    loss_ref[0, 0] = jnp.mean(jnp.abs(pred - ft_ref[...]))                # nn.L1Loss (mean)


# ------------------------------ parameter packing ------------------------------
def _pad_gate_cols(w, H):
    """w: (in_dim, 3*H), gates (r, z, n) along columns -> (in_dim, SLAB_LANES),
    gate g occupying lanes [g*GATE, g*GATE + H)."""
    in_dim = w.shape[0]
    out = jnp.zeros((in_dim, SLAB_LANES), jnp.float32)
    for g in range(NGATES):
        out = out.at[:, g * GATE:g * GATE + H].set(w[:, g * H:(g + 1) * H])
    return out


def _pack_params(p):
    slab = jnp.zeros((SLAB_ROWS, SLAB_LANES), jnp.float32)

    def pack_gru(slab, w_ih, w_hh, b_ih, b_hh, H, r_wih, r_whh, r_bih, r_bhn):
        w_ih = w_ih.astype(jnp.float32); w_hh = w_hh.astype(jnp.float32)
        b_ih = b_ih.astype(jnp.float32); b_hh = b_hh.astype(jnp.float32)
        # fold the r/z parts of b_hh into the hoisted input bias; keep only b_hn separate
        b_fold = jnp.concatenate([b_ih[0:2 * H] + b_hh[0:2 * H], b_ih[2 * H:3 * H]])
        b_hn = jnp.concatenate([jnp.zeros((2 * H,), jnp.float32), b_hh[2 * H:3 * H]])
        slab = slab.at[r_wih:r_wih + w_ih.shape[1]].set(_pad_gate_cols(w_ih.T, H))
        slab = slab.at[r_whh:r_whh + H].set(_pad_gate_cols(w_hh.T, H))
        slab = slab.at[r_bih].set(_pad_gate_cols(b_fold[None, :], H)[0])
        slab = slab.at[r_bhn].set(_pad_gate_cols(b_hn[None, :], H)[0])
        return slab

    slab = pack_gru(slab, p["rnn_w_ih"], p["rnn_w_hh"], p["rnn_b_ih"], p["rnn_b_hh"],
                    RNN_CELLS, R_WIH_M, R_WHH_M, R_BIH_M, R_BHN_M)
    slab = pack_gru(slab, p["skip_w_ih"], p["skip_w_hh"], p["skip_b_ih"], p["skip_b_hh"],
                    SKIP_CELLS, R_WIH_S, R_WHH_S, R_BIH_S, R_BHN_S)

    # conv weight in im2col layout: row k*N + n, col = channel
    cw = jnp.transpose(p["cnn_w"][:, 0].astype(jnp.float32), (2, 1, 0)).reshape(
        KERNEL_SIZE * NUM_SERIES, CHANNELS)
    slab = slab.at[R_CW:R_CW + KERNEL_SIZE * NUM_SERIES, 0:CHANNELS].set(cw)
    slab = slab.at[R_CB, 0:CHANNELS].set(p["cnn_b"].astype(jnp.float32))

    D = RNN_CELLS + SKIP_SIZE * SKIP_CELLS
    slab = slab.at[R_FCW:R_FCW + D, 0:NUM_SERIES].set(p["fc_w"].T.astype(jnp.float32))
    slab = slab.at[R_FCB, 0:NUM_SERIES].set(p["fc_b"].astype(jnp.float32))

    ar = jnp.zeros((1, 8), jnp.float32)
    ar = ar.at[0, 0:AR_WINDOW].set(p["ar_w"][0].astype(jnp.float32))
    ar = ar.at[0, AR_WINDOW].set(p["ar_b"][0].astype(jnp.float32))
    return slab, ar


# ------------------------------------ wrapper ------------------------------------
@jax.jit
def lstnet_train_loss(past_target, past_observed_values, future_target, params):
    """Inputs follow the PyTorch layout: (batch, num_series, time)."""
    ctx = CONTEXT_LEN
    x = jnp.transpose(past_target[..., -ctx:], (2, 0, 1)).astype(jnp.float32)
    obs = jnp.transpose(past_observed_values[..., -ctx:], (2, 0, 1)).astype(jnp.float32)
    ft = future_target[..., -1].astype(jnp.float32)                  # horizon path: last step

    slab, ar = _pack_params(params)

    vmem = pl.BlockSpec(memory_space=pltpu.MemorySpace.VMEM)
    smem = pl.BlockSpec(memory_space=pltpu.MemorySpace.SMEM)

    loss = pl.pallas_call(
        _lstnet_kernel,
        out_shape=jax.ShapeDtypeStruct((1, 1), jnp.float32),
        in_specs=[vmem, vmem, vmem, vmem, smem],
        out_specs=smem,
        scratch_shapes=[
            pltpu.VMEM((CONV_LEN * BATCH, SLAB_LANES), jnp.float32),             # main-GRU gi
            pltpu.VMEM((CONV_SKIP * SKIP_SIZE * BATCH, SLAB_LANES), jnp.float32),  # skip-GRU gi
        ],
    )(x, obs, ft, slab, ar)
    return loss[0, 0]


# -------------------------------- params / reference --------------------------------
def init_params(key):
    ks = jax.random.split(key, 12)

    def nrm(k, shape, s=0.1):
        return (s * jax.random.normal(k, shape)).astype(jnp.float32)

    D = RNN_CELLS + SKIP_SIZE * SKIP_CELLS
    return {
        "cnn_w":    nrm(ks[0], (CHANNELS, 1, NUM_SERIES, KERNEL_SIZE)),
        "cnn_b":    nrm(ks[1], (CHANNELS,)),
        "rnn_w_ih": nrm(ks[2], (3 * RNN_CELLS, CHANNELS)),
        "rnn_w_hh": nrm(ks[3], (3 * RNN_CELLS, RNN_CELLS)),
        "rnn_b_ih": nrm(ks[4], (3 * RNN_CELLS,)),
        "rnn_b_hh": nrm(ks[5], (3 * RNN_CELLS,)),
        "skip_w_ih": nrm(ks[6], (3 * SKIP_CELLS, CHANNELS)),
        "skip_w_hh": nrm(ks[7], (3 * SKIP_CELLS, SKIP_CELLS)),
        "skip_b_ih": nrm(ks[8], (3 * SKIP_CELLS,)),
        "skip_b_hh": nrm(ks[9], (3 * SKIP_CELLS,)),
        "fc_w":     nrm(ks[10], (NUM_SERIES, D)),
        "fc_b":     nrm(ks[11], (NUM_SERIES,)),
        "ar_w":     nrm(jax.random.fold_in(key, 100), (1, AR_WINDOW)),
        "ar_b":     nrm(jax.random.fold_in(key, 101), (1,)),
    }


def reference_loss(past_target, past_observed_values, future_target, p):
    """Pure-JAX mirror of the PyTorch forward (for validation)."""
    ctx, K, L = CONTEXT_LEN, KERNEL_SIZE, CONV_LEN
    B, N, C = BATCH, NUM_SERIES, CHANNELS
    Hr, Hs, ss, cs = RNN_CELLS, SKIP_CELLS, SKIP_SIZE, CONV_SKIP

    x = past_target[..., -ctx:]
    obs = past_observed_values[..., -ctx:]
    num_obs = obs.sum(axis=2); sum_abs = (jnp.abs(x) * obs).sum(axis=2)
    total_obs = num_obs.sum(axis=0)
    default_scale = sum_abs.sum(axis=0) / jnp.maximum(total_obs, 1.0)
    item_scale = sum_abs / jnp.maximum(num_obs, 1.0)
    scale = jnp.where(sum_abs > 0.0, item_scale, default_scale[None, :])
    scale = jnp.maximum(scale, _MIN_SCALE)                           # (B, N)
    scaled = x / scale[:, :, None]                                   # (B, N, ctx)

    w = p["cnn_w"][:, 0]                                             # (C, N, K)
    c = jnp.stack([jnp.einsum("bnk,cnk->bc", scaled[:, :, t:t + K], w) for t in range(L)], axis=2)
    c = jnp.maximum(c + p["cnn_b"][None, :, None], 0.0)              # (B, C, L)

    def gru(x_t, h, w_ih, w_hh, b_ih, b_hh, H):
        gi = x_t @ w_ih.T + b_ih
        gh = h @ w_hh.T + b_hh
        r = jax.nn.sigmoid(gi[:, :H] + gh[:, :H])
        z = jax.nn.sigmoid(gi[:, H:2 * H] + gh[:, H:2 * H])
        n = jnp.tanh(gi[:, 2 * H:] + r * gh[:, 2 * H:])
        return (1 - z) * n + z * h

    h = jnp.zeros((B, Hr), jnp.float32)
    for t in range(L):
        h = gru(c[:, :, t], h, p["rnn_w_ih"], p["rnn_w_hh"], p["rnn_b_ih"], p["rnn_b_hh"], Hr)

    skip = c[:, :, L - cs * ss:].reshape(B, C, cs, ss)
    skip = jnp.transpose(skip, (2, 0, 3, 1)).reshape(cs, B * ss, C)
    hs = jnp.zeros((B * ss, Hs), jnp.float32)
    for s in range(cs):
        hs = gru(skip[s], hs, p["skip_w_ih"], p["skip_w_hh"], p["skip_b_ih"], p["skip_b_hh"], Hs)
    hs = hs.reshape(B, ss * Hs)

    feat = jnp.concatenate([h, hs], axis=1)
    res = feat @ p["fc_w"].T + p["fc_b"]                             # (B, N)
    ar_x = scaled[:, :, -AR_WINDOW:].reshape(B * N, AR_WINDOW)
    ar = (ar_x @ p["ar_w"].T + p["ar_b"]).reshape(B, N)
    out = res + ar
    ft = future_target[..., -1]
    return jnp.mean(jnp.abs(out * scale - ft))


if __name__ == "__main__":
    key = jax.random.PRNGKey(0)
    k1, k2, k3, kp = jax.random.split(key, 4)
    past_target = jax.random.normal(k1, (BATCH, NUM_SERIES, TOTAL_T), dtype=jnp.float32)
    past_observed = (jax.random.uniform(k2, (BATCH, NUM_SERIES, TOTAL_T)) > 0.1).astype(jnp.float32)
    future_target = jax.random.normal(k3, (BATCH, NUM_SERIES, HORIZON), dtype=jnp.float32)
    params = init_params(kp)

    loss = jax.block_until_ready(
        lstnet_train_loss(past_target, past_observed, future_target, params))
    ref = jax.block_until_ready(
        reference_loss(past_target, past_observed, future_target, params))

    assert np.isfinite(float(loss))
    np.testing.assert_allclose(float(loss), float(ref), rtol=2e-3, atol=2e-3)
    print("KERNEL_OK")
</pallas_src>

<mosaic_0001>
module attributes {stable_mosaic.version = 11 : i64} {
  func.func @_lstnet_kernel(%arg0: memref<16x8x4xf32, #tpu.memory_space<vmem>>, %arg1: memref<16x8x4xf32, #tpu.memory_space<vmem>>, %arg2: memref<8x4xf32, #tpu.memory_space<vmem>>, %arg3: memref<128x384xf32, #tpu.memory_space<vmem>>, %arg4: memref<1x8xf32, #tpu.memory_space<smem>>, %arg5: memref<1x1xf32, #tpu.memory_space<smem>>, %arg6: memref<112x384xf32, #tpu.memory_space<vmem>>, %arg7: memref<96x384xf32, #tpu.memory_space<vmem>>) attributes {dimension_semantics = [], scalar_prefetch = 0 : i64, scratch_operands = 2 : i64, tpu.core_type = #tpu.core_type<tc>} {
    %c0 = arith.constant 0 : index
    %c0_0 = arith.constant 0 : index
    %c0_1 = arith.constant 0 : index
    %0 = vector.load %arg0[%c0, %c0_0, %c0_1] : memref<16x8x4xf32, #tpu.memory_space<vmem>>, vector<16x8x4xf32>
    %c0_2 = arith.constant 0 : index
    %c0_3 = arith.constant 0 : index
    %c0_4 = arith.constant 0 : index
    %1 = vector.load %arg1[%c0_2, %c0_3, %c0_4] : memref<16x8x4xf32, #tpu.memory_space<vmem>>, vector<16x8x4xf32>
    %cst = arith.constant dense<0.000000e+00> : vector<8x4xf32>
    %2 = vector.multi_reduction <add>, %1, %cst [0] : vector<16x8x4xf32> to vector<8x4xf32>
    %3 = math.absf %0 : vector<16x8x4xf32>
    %4 = arith.mulf %3, %1 : vector<16x8x4xf32>
    %cst_5 = arith.constant dense<0.000000e+00> : vector<8x4xf32>
    %5 = vector.multi_reduction <add>, %4, %cst_5 [0] : vector<16x8x4xf32> to vector<8x4xf32>
    %cst_6 = arith.constant dense<0.000000e+00> : vector<4xf32>
    %6 = vector.multi_reduction <add>, %2, %cst_6 [0] : vector<8x4xf32> to vector<4xf32>
    %7 = vector.shape_cast %6 : vector<4xf32> to vector<1x4xf32>
    %cst_7 = arith.constant dense<0.000000e+00> : vector<4xf32>
    %8 = vector.multi_reduction <add>, %5, %cst_7 [0] : vector<8x4xf32> to vector<4xf32>
    %9 = vector.shape_cast %8 : vector<4xf32> to vector<1x4xf32>
    %cst_8 = arith.constant 1.000000e+00 : f32
    %10 = vector.broadcast %cst_8 : f32 to vector<1x4xf32>
    %11 = arith.maximumf %7, %10 : vector<1x4xf32>
    %12 = arith.divf %9, %11 : vector<1x4xf32>
    %cst_9 = arith.constant 1.000000e+00 : f32
    %13 = vector.broadcast %cst_9 : f32 to vector<8x4xf32>
    %14 = arith.maximumf %2, %13 : vector<8x4xf32>
    %15 = arith.divf %5, %14 : vector<8x4xf32>
    %cst_10 = arith.constant 0.000000e+00 : f32
    %16 = vector.broadcast %cst_10 : f32 to vector<8x4xf32>
    %17 = arith.cmpf ogt, %5, %16 : vector<8x4xf32>
    %18 = vector.shape_cast %12 : vector<1x4xf32> to vector<1x4xf32>
    %19 = vector.broadcast %18 : vector<1x4xf32> to vector<8x4xf32>
    %20 = arith.select %17, %15, %19 : vector<8x4xi1>, vector<8x4xf32>
    %cst_11 = arith.constant 1.000000e-10 : f32
    %21 = vector.broadcast %cst_11 : f32 to vector<8x4xf32>
    %22 = arith.maximumf %20, %21 : vector<8x4xf32>
    %cst_12 = arith.constant 1.000000e+00 : f32
    %23 = vector.broadcast %cst_12 : f32 to vector<8x4xf32>
    %24 = arith.divf %23, %22 : vector<8x4xf32>
    %25 = vector.shape_cast %24 : vector<8x4xf32> to vector<1x8x4xf32>
    %26 = vector.broadcast %25 : vector<1x8x4xf32> to vector<16x8x4xf32>
    %27 = arith.mulf %0, %26 : vector<16x8x4xf32>
    %28 = vector.extract_strided_slice %27 {offsets = [0, 0, 0], sizes = [14, 8, 4], strides = [1, 1, 1]} : vector<16x8x4xf32> to vector<14x8x4xf32>
    %29 = vector.shape_cast %28 : vector<14x8x4xf32> to vector<112x4xf32>
    %30 = vector.extract_strided_slice %27 {offsets = [1, 0, 0], sizes = [14, 8, 4], strides = [1, 1, 1]} : vector<16x8x4xf32> to vector<14x8x4xf32>
    %31 = vector.shape_cast %30 : vector<14x8x4xf32> to vector<112x4xf32>
    %32 = vector.extract_strided_slice %27 {offsets = [2, 0, 0], sizes = [14, 8, 4], strides = [1, 1, 1]} : vector<16x8x4xf32> to vector<14x8x4xf32>
    %33 = vector.shape_cast %32 : vector<14x8x4xf32> to vector<112x4xf32>
    %34 = tpu.concatenate %29, %31, %33 in 1 : vector<112x4xf32>, vector<112x4xf32>, vector<112x4xf32> -> vector<112x12xf32>
    %c72 = arith.constant 72 : index
    %c0_13 = arith.constant 0 : index
    %35 = vector.load %arg3[%c72, %c0_13] : memref<128x384xf32, #tpu.memory_space<vmem>>, vector<12x6xf32>
    %c88 = arith.constant 88 : index
    %c0_14 = arith.constant 0 : index
    %36 = vector.load %arg3[%c88, %c0_14] : memref<128x384xf32, #tpu.memory_space<vmem>>, vector<1x6xf32>
    %cst_15 = arith.constant dense<0.000000e+00> : vector<112x6xf32>
    %37 = tpu.matmul %34, %35, %cst_15 {dimension_numbers = #tpu.dot_dimension_numbers<[1], [0], [0], [1], [0, 0, 1, 1], [], []>} : vector<112x12xf32>, vector<12x6xf32>, vector<112x6xf32> -> vector<112x6xf32>
    %38 = vector.broadcast %36 : vector<1x6xf32> to vector<112x6xf32>
    %39 = arith.addf %37, %38 : vector<112x6xf32>
    %cst_16 = arith.constant 0.000000e+00 : f32
    %40 = vector.broadcast %cst_16 : f32 to vector<112x6xf32>
    %41 = arith.maximumf %39, %40 : vector<112x6xf32>
    %c0_17 = arith.constant 0 : index
    %c0_18 = arith.constant 0 : index
    %42 = vector.load %arg3[%c0_17, %c0_18] : memref<128x384xf32, #tpu.memory_space<vmem>>, vector<6x384xf32>
    %c24 = arith.constant 24 : index
    %c0_19 = arith.constant 0 : index
    %43 = vector.load %arg3[%c24, %c0_19] : memref<128x384xf32, #tpu.memory_space<vmem>>, vector<1x384xf32>
    %cst_20 = arith.constant dense<0.000000e+00> : vector<112x384xf32>
    %44 = tpu.matmul %41, %42, %cst_20 {dimension_numbers = #tpu.dot_dimension_numbers<[1], [0], [0], [1], [0, 0, 1, 1], [], []>} : vector<112x6xf32>, vector<6x384xf32>, vector<112x384xf32> -> vector<112x384xf32>
    %45 = vector.broadcast %43 : vector<1x384xf32> to vector<112x384xf32>
    %46 = arith.addf %44, %45 : vector<112x384xf32>
    %c0_21 = arith.constant 0 : index
    %c0_22 = arith.constant 0 : index
    %47 = vector.load %arg6[%c0_21, %c0_22] : memref<112x384xf32, #tpu.memory_space<vmem>>, vector<112x384xf32>
    tpu.vector_store %arg6[%c0_21, %c0_22], %46 {strides = array<i32>} : memref<112x384xf32, #tpu.memory_space<vmem>>, vector<112x384xf32>,
    %c40 = arith.constant 40 : index
    %c0_23 = arith.constant 0 : index
    %48 = vector.load %arg3[%c40, %c0_23] : memref<128x384xf32, #tpu.memory_space<vmem>>, vector<6x384xf32>
    %c56 = arith.constant 56 : index
    %c0_24 = arith.constant 0 : index
    %49 = vector.load %arg3[%c56, %c0_24] : memref<128x384xf32, #tpu.memory_space<vmem>>, vector<1x384xf32>
    %50 = vector.extract_strided_slice %41 {offsets = [16, 0], sizes = [96, 6], strides = [1, 1]} : vector<112x6xf32> to vector<96x6xf32>
    %cst_25 = arith.constant dense<0.000000e+00> : vector<96x384xf32>
    %51 = tpu.matmul %50, %48, %cst_25 {dimension_numbers = #tpu.dot_dimension_numbers<[1], [0], [0], [1], [0, 0, 1, 1], [], []>} : vector<96x6xf32>, vector<6x384xf32>, vector<96x384xf32> -> vector<96x384xf32>
    %52 = vector.broadcast %49 : vector<1x384xf32> to vector<96x384xf32>
    %53 = arith.addf %51, %52 : vector<96x384xf32>
    %c0_26 = arith.constant 0 : index
    %c0_27 = arith.constant 0 : index
    %54 = vector.load %arg7[%c0_26, %c0_27] : memref<96x384xf32, #tpu.memory_space<vmem>>, vector<96x384xf32>
    tpu.vector_store %arg7[%c0_26, %c0_27], %53 {strides = array<i32>} : memref<96x384xf32, #tpu.memory_space<vmem>>, vector<96x384xf32>,
    %c8 = arith.constant 8 : index
    %c0_28 = arith.constant 0 : index
    %55 = vector.load %arg3[%c8, %c0_28] : memref<128x384xf32, #tpu.memory_space<vmem>>, vector<10x384xf32>
    %c32 = arith.constant 32 : index
    %c256 = arith.constant 256 : index
    %56 = vector.load %arg3[%c32, %c256] : memref<128x384xf32, #tpu.memory_space<vmem>>, vector<1x10xf32>
    %c48 = arith.constant 48 : index
    %c0_29 = arith.constant 0 : index
    %57 = vector.load %arg3[%c48, %c0_29] : memref<128x384xf32, #tpu.memory_space<vmem>>, vector<5x384xf32>
    %c64 = arith.constant 64 : index
    %c256_30 = arith.constant 256 : index
    %58 = vector.load %arg3[%c64, %c256_30] : memref<128x384xf32, #tpu.memory_space<vmem>>, vector<1x5xf32>
    %cst_31 = arith.constant 0.000000e+00 : f32
    %59 = vector.broadcast %cst_31 : f32 to vector<8x10xf32>
    %c0_32 = arith.constant 0 : index
    %c0_33 = arith.constant 0 : index
    %60 = vector.load %arg6[%c0_32, %c0_33] : memref<112x384xf32, #tpu.memory_space<vmem>>, vector<8x384xf32>
    %cst_34 = arith.constant dense<0.000000e+00> : vector<8x384xf32>
    %61 = tpu.matmul %59, %55, %cst_34 {dimension_numbers = #tpu.dot_dimension_numbers<[1], [0], [0], [1], [0, 0, 1, 1], [], []>} : vector<8x10xf32>, vector<10x384xf32>, vector<8x384xf32> -> vector<8x384xf32>
    %62 = vector.extract_strided_slice %60 {offsets = [0, 0], sizes = [8, 10], strides = [1, 1]} : vector<8x384xf32> to vector<8x10xf32>
    %63 = vector.extract_strided_slice %61 {offsets = [0, 0], sizes = [8, 10], strides = [1, 1]} : vector<8x384xf32> to vector<8x10xf32>
    %64 = arith.addf %62, %63 : vector<8x10xf32>
    %cst_35 = arith.constant 5.000000e-01 : f32
    %65 = vector.broadcast %cst_35 : f32 to vector<8x10xf32>
    %66 = arith.mulf %65, %64 : vector<8x10xf32>
    %67 = math.tanh %66 : vector<8x10xf32>
    %cst_36 = arith.constant 5.000000e-01 : f32
    %68 = vector.broadcast %cst_36 : f32 to vector<8x10xf32>
    %69 = arith.mulf %68, %67 : vector<8x10xf32>
    %cst_37 = arith.constant 5.000000e-01 : f32
    %70 = vector.broadcast %cst_37 : f32 to vector<8x10xf32>
    %71 = arith.addf %69, %70 : vector<8x10xf32>
    %72 = vector.extract_strided_slice %60 {offsets = [0, 128], sizes = [8, 10], strides = [1, 1]} : vector<8x384xf32> to vector<8x10xf32>
    %73 = vector.extract_strided_slice %61 {offsets = [0, 128], sizes = [8, 10], strides = [1, 1]} : vector<8x384xf32> to vector<8x10xf32>
    %74 = arith.addf %72, %73 : vector<8x10xf32>
    %cst_38 = arith.constant 5.000000e-01 : f32
    %75 = vector.broadcast %cst_38 : f32 to vector<8x10xf32>
    %76 = arith.mulf %75, %74 : vector<8x10xf32>
    %77 = math.tanh %76 : vector<8x10xf32>
    %cst_39 = arith.constant 5.000000e-01 : f32
    %78 = vector.broadcast %cst_39 : f32 to vector<8x10xf32>
    %79 = arith.mulf %78, %77 : vector<8x10xf32>
    %cst_40 = arith.constant 5.000000e-01 : f32
    %80 = vector.broadcast %cst_40 : f32 to vector<8x10xf32>
    %81 = arith.addf %79, %80 : vector<8x10xf32>
    %82 = vector.extract_strided_slice %60 {offsets = [0, 256], sizes = [8, 10], strides = [1, 1]} : vector<8x384xf32> to vector<8x10xf32>
    %83 = vector.extract_strided_slice %61 {offsets = [0, 256], sizes = [8, 10], strides = [1, 1]} : vector<8x384xf32> to vector<8x10xf32>
    %84 = vector.broadcast %56 : vector<1x10xf32> to vector<8x10xf32>
    %85 = arith.addf %83, %84 : vector<8x10xf32>
    %86 = arith.mulf %71, %85 : vector<8x10xf32>
    %87 = arith.addf %82, %86 : vector<8x10xf32>
    %88 = math.tanh %87 : vector<8x10xf32>
    %cst_41 = arith.constant 1.000000e+00 : f32
    %89 = vector.broadcast %cst_41 : f32 to vector<8x10xf32>
    %90 = arith.subf %89, %81 : vector<8x10xf32>
    %91 = arith.mulf %90, %88 : vector<8x10xf32>
    %92 = arith.mulf %81, %59 : vector<8x10xf32>
    %93 = arith.addf %91, %92 : vector<8x10xf32>
    %c8_42 = arith.constant 8 : index
    %c0_43 = arith.constant 0 : index
    %94 = vector.load %arg6[%c8_42, %c0_43] : memref<112x384xf32, #tpu.memory_space<vmem>>, vector<8x384xf32>
    %cst_44 = arith.constant dense<0.000000e+00> : vector<8x384xf32>
    %95 = tpu.matmul %93, %55, %cst_44 {dimension_numbers = #tpu.dot_dimension_numbers<[1], [0], [0], [1], [0, 0, 1, 1], [], []>} : vector<8x10xf32>, vector<10x384xf32>, vector<8x384xf32> -> vector<8x384xf32>
    %96 = vector.extract_strided_slice %94 {offsets = [0, 0], sizes = [8, 10], strides = [1, 1]} : vector<8x384xf32> to vector<8x10xf32>
    %97 = vector.extract_strided_slice %95 {offsets = [0, 0], sizes = [8, 10], strides = [1, 1]} : vector<8x384xf32> to vector<8x10xf32>
    %98 = arith.addf %96, %97 : vector<8x10xf32>
    %cst_45 = arith.constant 5.000000e-01 : f32
    %99 = vector.broadcast %cst_45 : f32 to vector<8x10xf32>
    %100 = arith.mulf %99, %98 : vector<8x10xf32>
    %101 = math.tanh %100 : vector<8x10xf32>
    %cst_46 = arith.constant 5.000000e-01 : f32
    %102 = vector.broadcast %cst_46 : f32 to vector<8x10xf32>
    %103 = arith.mulf %102, %101 : vector<8x10xf32>
    %cst_47 = arith.constant 5.000000e-01 : f32
    %104 = vector.broadcast %cst_47 : f32 to vector<8x10xf32>
    %105 = arith.addf %103, %104 : vector<8x10xf32>
    %106 = vector.extract_strided_slice %94 {offsets = [0, 128], sizes = [8, 10], strides = [1, 1]} : vector<8x384xf32> to vector<8x10xf32>
    %107 = vector.extract_strided_slice %95 {offsets = [0, 128], sizes = [8, 10], strides = [1, 1]} : vector<8x384xf32> to vector<8x10xf32>
    %108 = arith.addf %106, %107 : vector<8x10xf32>
    %cst_48 = arith.constant 5.000000e-01 : f32
    %109 = vector.broadcast %cst_48 : f32 to vector<8x10xf32>
    %110 = arith.mulf %109, %108 : vector<8x10xf32>
    %111 = math.tanh %110 : vector<8x10xf32>
    %cst_49 = arith.constant 5.000000e-01 : f32
    %112 = vector.broadcast %cst_49 : f32 to vector<8x10xf32>
    %113 = arith.mulf %112, %111 : vector<8x10xf32>
    %cst_50 = arith.constant 5.000000e-01 : f32
    %114 = vector.broadcast %cst_50 : f32 to vector<8x10xf32>
    %115 = arith.addf %113, %114 : vector<8x10xf32>
    %116 = vector.extract_strided_slice %94 {offsets = [0, 256], sizes = [8, 10], strides = [1, 1]} : vector<8x384xf32> to vector<8x10xf32>
    %117 = vector.extract_strided_slice %95 {offsets = [0, 256], sizes = [8, 10], strides = [1, 1]} : vector<8x384xf32> to vector<8x10xf32>
    %118 = vector.broadcast %56 : vector<1x10xf32> to vector<8x10xf32>
    %119 = arith.addf %117, %118 : vector<8x10xf32>
    %120 = arith.mulf %105, %119 : vector<8x10xf32>
    %121 = arith.addf %116, %120 : vector<8x10xf32>
    %122 = math.tanh %121 : vector<8x10xf32>
    %cst_51 = arith.constant 1.000000e+00 : f32
    %123 = vector.broadcast %cst_51 : f32 to vector<8x10xf32>
    %124 = arith.subf %123, %115 : vector<8x10xf32>
    %125 = arith.mulf %124, %122 : vector<8x10xf32>
    %126 = arith.mulf %115, %93 : vector<8x10xf32>
    %127 = arith.addf %125, %126 : vector<8x10xf32>
    %c16 = arith.constant 16 : index
    %c0_52 = arith.constant 0 : index
    %128 = vector.load %arg6[%c16, %c0_52] : memref<112x384xf32, #tpu.memory_space<vmem>>, vector<8x384xf32>
    %cst_53 = arith.constant dense<0.000000e+00> : vector<8x384xf32>
    %129 = tpu.matmul %127, %55, %cst_53 {dimension_numbers = #tpu.dot_dimension_numbers<[1], [0], [0], [1], [0, 0, 1, 1], [], []>} : vector<8x10xf32>, vector<10x384xf32>, vector<8x384xf32> -> vector<8x384xf32>
    %130 = vector.extract_strided_slice %128 {offsets = [0, 0], sizes = [8, 10], strides = [1, 1]} : vector<8x384xf32> to vector<8x10xf32>
    %131 = vector.extract_strided_slice %129 {offsets = [0, 0], sizes = [8, 10], strides = [1, 1]} : vector<8x384xf32> to vector<8x10xf32>
    %132 = arith.addf %130, %131 : vector<8x10xf32>
    %cst_54 = arith.constant 5.000000e-01 : f32
    %133 = vector.broadcast %cst_54 : f32 to vector<8x10xf32>
    %134 = arith.mulf %133, %132 : vector<8x10xf32>
    %135 = math.tanh %134 : vector<8x10xf32>
    %cst_55 = arith.constant 5.000000e-01 : f32
    %136 = vector.broadcast %cst_55 : f32 to vector<8x10xf32>
    %137 = arith.mulf %136, %135 : vector<8x10xf32>
    %cst_56 = arith.constant 5.000000e-01 : f32
    %138 = vector.broadcast %cst_56 : f32 to vector<8x10xf32>
    %139 = arith.addf %137, %138 : vector<8x10xf32>
    %140 = vector.extract_strided_slice %128 {offsets = [0, 128], sizes = [8, 10], strides = [1, 1]} : vector<8x384xf32> to vector<8x10xf32>
    %141 = vector.extract_strided_slice %129 {offsets = [0, 128], sizes = [8, 10], strides = [1, 1]} : vector<8x384xf32> to vector<8x10xf32>
    %142 = arith.addf %140, %141 : vector<8x10xf32>
    %cst_57 = arith.constant 5.000000e-01 : f32
    %143 = vector.broadcast %cst_57 : f32 to vector<8x10xf32>
    %144 = arith.mulf %143, %142 : vector<8x10xf32>
    %145 = math.tanh %144 : vector<8x10xf32>
    %cst_58 = arith.constant 5.000000e-01 : f32
    %146 = vector.broadcast %cst_58 : f32 to vector<8x10xf32>
    %147 = arith.mulf %146, %145 : vector<8x10xf32>
    %cst_59 = arith.constant 5.000000e-01 : f32
    %148 = vector.broadcast %cst_59 : f32 to vector<8x10xf32>
    %149 = arith.addf %147, %148 : vector<8x10xf32>
    %150 = vector.extract_strided_slice %128 {offsets = [0, 256], sizes = [8, 10], strides = [1, 1]} : vector<8x384xf32> to vector<8x10xf32>
    %151 = vector.extract_strided_slice %129 {offsets = [0, 256], sizes = [8, 10], strides = [1, 1]} : vector<8x384xf32> to vector<8x10xf32>
    %152 = vector.broadcast %56 : vector<1x10xf32> to vector<8x10xf32>
    %153 = arith.addf %151, %152 : vector<8x10xf32>
    %154 = arith.mulf %139, %153 : vector<8x10xf32>
    %155 = arith.addf %150, %154 : vector<8x10xf32>
    %156 = math.tanh %155 : vector<8x10xf32>
    %cst_60 = arith.constant 1.000000e+00 : f32
    %157 = vector.broadcast %cst_60 : f32 to vector<8x10xf32>
    %158 = arith.subf %157, %149 : vector<8x10xf32>
    %159 = arith.mulf %158, %156 : vector<8x10xf32>
    %160 = arith.mulf %149, %127 : vector<8x10xf32>
    %161 = arith.addf %159, %160 : vector<8x10xf32>
    %c24_61 = arith.constant 24 : index
    %c0_62 = arith.constant 0 : index
    %162 = vector.load %arg6[%c24_61, %c0_62] : memref<112x384xf32, #tpu.memory_space<vmem>>, vector<8x384xf32>
    %cst_63 = arith.constant dense<0.000000e+00> : vector<8x384xf32>
    %163 = tpu.matmul %161, %55, %cst_63 {dimension_numbers = #tpu.dot_dimension_numbers<[1], [0], [0], [1], [0, 0, 1, 1], [], []>} : vector<8x10xf32>, vector<10x384xf32>, vector<8x384xf32> -> vector<8x384xf32>
    %164 = vector.extract_strided_slice %162 {offsets = [0, 0], sizes = [8, 10], strides = [1, 1]} : vector<8x384xf32> to vector<8x10xf32>
    %165 = vector.extract_strided_slice %163 {offsets = [0, 0], sizes = [8, 10], strides = [1, 1]} : vector<8x384xf32> to vector<8x10xf32>
    %166 = arith.addf %164, %165 : vector<8x10xf32>
    %cst_64 = arith.constant 5.000000e-01 : f32
    %167 = vector.broadcast %cst_64 : f32 to vector<8x10xf32>
    %168 = arith.mulf %167, %166 : vector<8x10xf32>
    %169 = math.tanh %168 : vector<8x10xf32>
    %cst_65 = arith.constant 5.000000e-01 : f32
    %170 = vector.broadcast %cst_65 : f32 to vector<8x10xf32>
    %171 = arith.mulf %170, %169 : vector<8x10xf32>
    %cst_66 = arith.constant 5.000000e-01 : f32
    %172 = vector.broadcast %cst_66 : f32 to vector<8x10xf32>
    %173 = arith.addf %171, %172 : vector<8x10xf32>
    %174 = vector.extract_strided_slice %162 {offsets = [0, 128], sizes = [8, 10], strides = [1, 1]} : vector<8x384xf32> to vector<8x10xf32>
    %175 = vector.extract_strided_slice %163 {offsets = [0, 128], sizes = [8, 10], strides = [1, 1]} : vector<8x384xf32> to vector<8x10xf32>
    %176 = arith.addf %174, %175 : vector<8x10xf32>
    %cst_67 = arith.constant 5.000000e-01 : f32
    %177 = vector.broadcast %cst_67 : f32 to vector<8x10xf32>
    %178 = arith.mulf %177, %176 : vector<8x10xf32>
    %179 = math.tanh %178 : vector<8x10xf32>
    %cst_68 = arith.constant 5.000000e-01 : f32
    %180 = vector.broadcast %cst_68 : f32 to vector<8x10xf32>
    %181 = arith.mulf %180, %179 : vector<8x10xf32>
    %cst_69 = arith.constant 5.000000e-01 : f32
    %182 = vector.broadcast %cst_69 : f32 to vector<8x10xf32>
    %183 = arith.addf %181, %182 : vector<8x10xf32>
    %184 = vector.extract_strided_slice %162 {offsets = [0, 256], sizes = [8, 10], strides = [1, 1]} : vector<8x384xf32> to vector<8x10xf32>
    %185 = vector.extract_strided_slice %163 {offsets = [0, 256], sizes = [8, 10], strides = [1, 1]} : vector<8x384xf32> to vector<8x10xf32>
    %186 = vector.broadcast %56 : vector<1x10xf32> to vector<8x10xf32>
    %187 = arith.addf %185, %186 : vector<8x10xf32>
    %188 = arith.mulf %173, %187 : vector<8x10xf32>
    %189 = arith.addf %184, %188 : vector<8x10xf32>
    %190 = math.tanh %189 : vector<8x10xf32>
    %cst_70 = arith.constant 1.000000e+00 : f32
    %191 = vector.broadcast %cst_70 : f32 to vector<8x10xf32>
    %192 = arith.subf %191, %183 : vector<8x10xf32>
    %193 = arith.mulf %192, %190 : vector<8x10xf32>
    %194 = arith.mulf %183, %161 : vector<8x10xf32>
    %195 = arith.addf %193, %194 : vector<8x10xf32>
    %c32_71 = arith.constant 32 : index
    %c0_72 = arith.constant 0 : index
    %196 = vector.load %arg6[%c32_71, %c0_72] : memref<112x384xf32, #tpu.memory_space<vmem>>, vector<8x384xf32>
    %cst_73 = arith.constant dense<0.000000e+00> : vector<8x384xf32>
    %197 = tpu.matmul %195, %55, %cst_73 {dimension_numbers = #tpu.dot_dimension_numbers<[1], [0], [0], [1], [0, 0, 1, 1], [], []>} : vector<8x10xf32>, vector<10x384xf32>, vector<8x384xf32> -> vector<8x384xf32>
    %198 = vector.extract_strided_slice %196 {offsets = [0, 0], sizes = [8, 10], strides = [1, 1]} : vector<8x384xf32> to vector<8x10xf32>
    %199 = vector.extract_strided_slice %197 {offsets = [0, 0], sizes = [8, 10], strides = [1, 1]} : vector<8x384xf32> to vector<8x10xf32>
    %200 = arith.addf %198, %199 : vector<8x10xf32>
    %cst_74 = arith.constant 5.000000e-01 : f32
    %201 = vector.broadcast %cst_74 : f32 to vector<8x10xf32>
    %202 = arith.mulf %201, %200 : vector<8x10xf32>
    %203 = math.tanh %202 : vector<8x10xf32>
    %cst_75 = arith.constant 5.000000e-01 : f32
    %204 = vector.broadcast %cst_75 : f32 to vector<8x10xf32>
    %205 = arith.mulf %204, %203 : vector<8x10xf32>
    %cst_76 = arith.constant 5.000000e-01 : f32
    %206 = vector.broadcast %cst_76 : f32 to vector<8x10xf32>
    %207 = arith.addf %205, %206 : vector<8x10xf32>
    %208 = vector.extract_strided_slice %196 {offsets = [0, 128], sizes = [8, 10], strides = [1, 1]} : vector<8x384xf32> to vector<8x10xf32>
    %209 = vector.extract_strided_slice %197 {offsets = [0, 128], sizes = [8, 10], strides = [1, 1]} : vector<8x384xf32> to vector<8x10xf32>
    %210 = arith.addf %208, %209 : vector<8x10xf32>
    %cst_77 = arith.constant 5.000000e-01 : f32
    %211 = vector.broadcast %cst_77 : f32 to vector<8x10xf32>
    %212 = arith.mulf %211, %210 : vector<8x10xf32>
    %213 = math.tanh %212 : vector<8x10xf32>
    %cst_78 = arith.constant 5.000000e-01 : f32
    %214 = vector.broadcast %cst_78 : f32 to vector<8x10xf32>
    %215 = arith.mulf %214, %213 : vector<8x10xf32>
    %cst_79 = arith.constant 5.000000e-01 : f32
    %216 = vector.broadcast %cst_79 : f32 to vector<8x10xf32>
    %217 = arith.addf %215, %216 : vector<8x10xf32>
    %218 = vector.extract_strided_slice %196 {offsets = [0, 256], sizes = [8, 10], strides = [1, 1]} : vector<8x384xf32> to vector<8x10xf32>
    %219 = vector.extract_strided_slice %197 {offsets = [0, 256], sizes = [8, 10], strides = [1, 1]} : vector<8x384xf32> to vector<8x10xf32>
    %220 = vector.broadcast %56 : vector<1x10xf32> to vector<8x10xf32>
    %221 = arith.addf %219, %220 : vector<8x10xf32>
    %222 = arith.mulf %207, %221 : vector<8x10xf32>
    %223 = arith.addf %218, %222 : vector<8x10xf32>
    %224 = math.tanh %223 : vector<8x10xf32>
    %cst_80 = arith.constant 1.000000e+00 : f32
    %225 = vector.broadcast %cst_80 : f32 to vector<8x10xf32>
    %226 = arith.subf %225, %217 : vector<8x10xf32>
    %227 = arith.mulf %226, %224 : vector<8x10xf32>
    %228 = arith.mulf %217, %195 : vector<8x10xf32>
    %229 = arith.addf %227, %228 : vector<8x10xf32>
    %c40_81 = arith.constant 40 : index
    %c0_82 = arith.constant 0 : index
    %230 = vector.load %arg6[%c40_81, %c0_82] : memref<112x384xf32, #tpu.memory_space<vmem>>, vector<8x384xf32>
    %cst_83 = arith.constant dense<0.000000e+00> : vector<8x384xf32>
    %231 = tpu.matmul %229, %55, %cst_83 {dimension_numbers = #tpu.dot_dimension_numbers<[1], [0], [0], [1], [0, 0, 1, 1], [], []>} : vector<8x10xf32>, vector<10x384xf32>, vector<8x384xf32> -> vector<8x384xf32>
    %232 = vector.extract_strided_slice %230 {offsets = [0, 0], sizes = [8, 10], strides = [1, 1]} : vector<8x384xf32> to vector<8x10xf32>
    %233 = vector.extract_strided_slice %231 {offsets = [0, 0], sizes = [8, 10], strides = [1, 1]} : vector<8x384xf32> to vector<8x10xf32>
    %234 = arith.addf %232, %233 : vector<8x10xf32>
    %cst_84 = arith.constant 5.000000e-01 : f32
    %235 = vector.broadcast %cst_84 : f32 to vector<8x10xf32>
    %236 = arith.mulf %235, %234 : vector<8x10xf32>
    %237 = math.tanh %236 : vector<8x10xf32>
    %cst_85 = arith.constant 5.000000e-01 : f32
    %238 = vector.broadcast %cst_85 : f32 to vector<8x10xf32>
    %239 = arith.mulf %238, %237 : vector<8x10xf32>
    %cst_86 = arith.constant 5.000000e-01 : f32
    %240 = vector.broadcast %cst_86 : f32 to vector<8x10xf32>
    %241 = arith.addf %239, %240 : vector<8x10xf32>
    %242 = vector.extract_strided_slice %230 {offsets = [0, 128], sizes = [8, 10], strides = [1, 1]} : vector<8x384xf32> to vector<8x10xf32>
    %243 = vector.extract_strided_slice %231 {offsets = [0, 128], sizes = [8, 10], strides = [1, 1]} : vector<8x384xf32> to vector<8x10xf32>
    %244 = arith.addf %242, %243 : vector<8x10xf32>
    %cst_87 = arith.constant 5.000000e-01 : f32
    %245 = vector.broadcast %cst_87 : f32 to vector<8x10xf32>
    %246 = arith.mulf %245, %244 : vector<8x10xf32>
    %247 = math.tanh %246 : vector<8x10xf32>
    %cst_88 = arith.constant 5.000000e-01 : f32
    %248 = vector.broadcast %cst_88 : f32 to vector<8x10xf32>
    %249 = arith.mulf %248, %247 : vector<8x10xf32>
    %cst_89 = arith.constant 5.000000e-01 : f32
    %250 = vector.broadcast %cst_89 : f32 to vector<8x10xf32>
    %251 = arith.addf %249, %250 : vector<8x10xf32>
    %252 = vector.extract_strided_slice %230 {offsets = [0, 256], sizes = [8, 10], strides = [1, 1]} : vector<8x384xf32> to vector<8x10xf32>
    %253 = vector.extract_strided_slice %231 {offsets = [0, 256], sizes = [8, 10], strides = [1, 1]} : vector<8x384xf32> to vector<8x10xf32>
    %254 = vector.broadcast %56 : vector<1x10xf32> to vector<8x10xf32>
    %255 = arith.addf %253, %254 : vector<8x10xf32>
    %256 = arith.mulf %241, %255 : vector<8x10xf32>
    %257 = arith.addf %252, %256 : vector<8x10xf32>
    %258 = math.tanh %257 : vector<8x10xf32>
    %cst_90 = arith.constant 1.000000e+00 : f32
    %259 = vector.broadcast %cst_90 : f32 to vector<8x10xf32>
    %260 = arith.subf %259, %251 : vector<8x10xf32>
    %261 = arith.mulf %260, %258 : vector<8x10xf32>
    %262 = arith.mulf %251, %229 : vector<8x10xf32>
    %263 = arith.addf %261, %262 : vector<8x10xf32>
    %c48_91 = arith.constant 48 : index
    %c0_92 = arith.constant 0 : index
    %264 = vector.load %arg6[%c48_91, %c0_92] : memref<112x384xf32, #tpu.memory_space<vmem>>, vector<8x384xf32>
    %cst_93 = arith.constant dense<0.000000e+00> : vector<8x384xf32>
    %265 = tpu.matmul %263, %55, %cst_93 {dimension_numbers = #tpu.dot_dimension_numbers<[1], [0], [0], [1], [0, 0, 1, 1], [], []>} : vector<8x10xf32>, vector<10x384xf32>, vector<8x384xf32> -> vector<8x384xf32>
    %266 = vector.extract_strided_slice %264 {offsets = [0, 0], sizes = [8, 10], strides = [1, 1]} : vector<8x384xf32> to vector<8x10xf32>
    %267 = vector.extract_strided_slice %265 {offsets = [0, 0], sizes = [8, 10], strides = [1, 1]} : vector<8x384xf32> to vector<8x10xf32>
    %268 = arith.addf %266, %267 : vector<8x10xf32>
    %cst_94 = arith.constant 5.000000e-01 : f32
    %269 = vector.broadcast %cst_94 : f32 to vector<8x10xf32>
    %270 = arith.mulf %269, %268 : vector<8x10xf32>
    %271 = math.tanh %270 : vector<8x10xf32>
    %cst_95 = arith.constant 5.000000e-01 : f32
    %272 = vector.broadcast %cst_95 : f32 to vector<8x10xf32>
    %273 = arith.mulf %272, %271 : vector<8x10xf32>
    %cst_96 = arith.constant 5.000000e-01 : f32
    %274 = vector.broadcast %cst_96 : f32 to vector<8x10xf32>
    %275 = arith.addf %273, %274 : vector<8x10xf32>
    %276 = vector.extract_strided_slice %264 {offsets = [0, 128], sizes = [8, 10], strides = [1, 1]} : vector<8x384xf32> to vector<8x10xf32>
    %277 = vector.extract_strided_slice %265 {offsets = [0, 128], sizes = [8, 10], strides = [1, 1]} : vector<8x384xf32> to vector<8x10xf32>
    %278 = arith.addf %276, %277 : vector<8x10xf32>
    %cst_97 = arith.constant 5.000000e-01 : f32
    %279 = vector.broadcast %cst_97 : f32 to vector<8x10xf32>
    %280 = arith.mulf %279, %278 : vector<8x10xf32>
    %281 = math.tanh %280 : vector<8x10xf32>
    %cst_98 = arith.constant 5.000000e-01 : f32
    %282 = vector.broadcast %cst_98 : f32 to vector<8x10xf32>
    %283 = arith.mulf %282, %281 : vector<8x10xf32>
    %cst_99 = arith.constant 5.000000e-01 : f32
    %284 = vector.broadcast %cst_99 : f32 to vector<8x10xf32>
    %285 = arith.addf %283, %284 : vector<8x10xf32>
    %286 = vector.extract_strided_slice %264 {offsets = [0, 256], sizes = [8, 10], strides = [1, 1]} : vector<8x384xf32> to vector<8x10xf32>
    %287 = vector.extract_strided_slice %265 {offsets = [0, 256], sizes = [8, 10], strides = [1, 1]} : vector<8x384xf32> to vector<8x10xf32>
    %288 = vector.broadcast %56 : vector<1x10xf32> to vector<8x10xf32>
    %289 = arith.addf %287, %288 : vector<8x10xf32>
    %290 = arith.mulf %275, %289 : vector<8x10xf32>
    %291 = arith.addf %286, %290 : vector<8x10xf32>
    %292 = math.tanh %291 : vector<8x10xf32>
    %cst_100 = arith.constant 1.000000e+00 : f32
    %293 = vector.broadcast %cst_100 : f32 to vector<8x10xf32>
    %294 = arith.subf %293, %285 : vector<8x10xf32>
    %295 = arith.mulf %294, %292 : vector<8x10xf32>
    %296 = arith.mulf %285, %263 : vector<8x10xf32>
    %297 = arith.addf %295, %296 : vector<8x10xf32>
    %c56_101 = arith.constant 56 : index
    %c0_102 = arith.constant 0 : index
    %298 = vector.load %arg6[%c56_101, %c0_102] : memref<112x384xf32, #tpu.memory_space<vmem>>, vector<8x384xf32>
    %cst_103 = arith.constant dense<0.000000e+00> : vector<8x384xf32>
    %299 = tpu.matmul %297, %55, %cst_103 {dimension_numbers = #tpu.dot_dimension_numbers<[1], [0], [0], [1], [0, 0, 1, 1], [], []>} : vector<8x10xf32>, vector<10x384xf32>, vector<8x384xf32> -> vector<8x384xf32>
    %300 = vector.extract_strided_slice %298 {offsets = [0, 0], sizes = [8, 10], strides = [1, 1]} : vector<8x384xf32> to vector<8x10xf32>
    %301 = vector.extract_strided_slice %299 {offsets = [0, 0], sizes = [8, 10], strides = [1, 1]} : vector<8x384xf32> to vector<8x10xf32>
    %302 = arith.addf %300, %301 : vector<8x10xf32>
    %cst_104 = arith.constant 5.000000e-01 : f32
    %303 = vector.broadcast %cst_104 : f32 to vector<8x10xf32>
    %304 = arith.mulf %303, %302 : vector<8x10xf32>
    %305 = math.tanh %304 : vector<8x10xf32>
    %cst_105 = arith.constant 5.000000e-01 : f32
    %306 = vector.broadcast %cst_105 : f32 to vector<8x10xf32>
    %307 = arith.mulf %306, %305 : vector<8x10xf32>
    %cst_106 = arith.constant 5.000000e-01 : f32
    %308 = vector.broadcast %cst_106 : f32 to vector<8x10xf32>
    %309 = arith.addf %307, %308 : vector<8x10xf32>
    %310 = vector.extract_strided_slice %298 {offsets = [0, 128], sizes = [8, 10], strides = [1, 1]} : vector<8x384xf32> to vector<8x10xf32>
    %311 = vector.extract_strided_slice %299 {offsets = [0, 128], sizes = [8, 10], strides = [1, 1]} : vector<8x384xf32> to vector<8x10xf32>
    %312 = arith.addf %310, %311 : vector<8x10xf32>
    %cst_107 = arith.constant 5.000000e-01 : f32
    %313 = vector.broadcast %cst_107 : f32 to vector<8x10xf32>
    %314 = arith.mulf %313, %312 : vector<8x10xf32>
    %315 = math.tanh %314 : vector<8x10xf32>
    %cst_108 = arith.constant 5.000000e-01 : f32
    %316 = vector.broadcast %cst_108 : f32 to vector<8x10xf32>
    %317 = arith.mulf %316, %315 : vector<8x10xf32>
    %cst_109 = arith.constant 5.000000e-01 : f32
    %318 = vector.broadcast %cst_109 : f32 to vector<8x10xf32>
    %319 = arith.addf %317, %318 : vector<8x10xf32>
    %320 = vector.extract_strided_slice %298 {offsets = [0, 256], sizes = [8, 10], strides = [1, 1]} : vector<8x384xf32> to vector<8x10xf32>
    %321 = vector.extract_strided_slice %299 {offsets = [0, 256], sizes = [8, 10], strides = [1, 1]} : vector<8x384xf32> to vector<8x10xf32>
    %322 = vector.broadcast %56 : vector<1x10xf32> to vector<8x10xf32>
    %323 = arith.addf %321, %322 : vector<8x10xf32>
    %324 = arith.mulf %309, %323 : vector<8x10xf32>
    %325 = arith.addf %320, %324 : vector<8x10xf32>
    %326 = math.tanh %325 : vector<8x10xf32>
    %cst_110 = arith.constant 1.000000e+00 : f32
    %327 = vector.broadcast %cst_110 : f32 to vector<8x10xf32>
    %328 = arith.subf %327, %319 : vector<8x10xf32>
    %329 = arith.mulf %328, %326 : vector<8x10xf32>
    %330 = arith.mulf %319, %297 : vector<8x10xf32>
    %331 = arith.addf %329, %330 : vector<8x10xf32>
    %c64_111 = arith.constant 64 : index
    %c0_112 = arith.constant 0 : index
    %332 = vector.load %arg6[%c64_111, %c0_112] : memref<112x384xf32, #tpu.memory_space<vmem>>, vector<8x384xf32>
    %cst_113 = arith.constant dense<0.000000e+00> : vector<8x384xf32>
    %333 = tpu.matmul %331, %55, %cst_113 {dimension_numbers = #tpu.dot_dimension_numbers<[1], [0], [0], [1], [0, 0, 1, 1], [], []>} : vector<8x10xf32>, vector<10x384xf32>, vector<8x384xf32> -> vector<8x384xf32>
    %334 = vector.extract_strided_slice %332 {offsets = [0, 0], sizes = [8, 10], strides = [1, 1]} : vector<8x384xf32> to vector<8x10xf32>
    %335 = vector.extract_strided_slice %333 {offsets = [0, 0], sizes = [8, 10], strides = [1, 1]} : vector<8x384xf32> to vector<8x10xf32>
    %336 = arith.addf %334, %335 : vector<8x10xf32>
    %cst_114 = arith.constant 5.000000e-01 : f32
    %337 = vector.broadcast %cst_114 : f32 to vector<8x10xf32>
    %338 = arith.mulf %337, %336 : vector<8x10xf32>
    %339 = math.tanh %338 : vector<8x10xf32>
    %cst_115 = arith.constant 5.000000e-01 : f32
    %340 = vector.broadcast %cst_115 : f32 to vector<8x10xf32>
    %341 = arith.mulf %340, %339 : vector<8x10xf32>
    %cst_116 = arith.constant 5.000000e-01 : f32
    %342 = vector.broadcast %cst_116 : f32 to vector<8x10xf32>
    %343 = arith.addf %341, %342 : vector<8x10xf32>
    %344 = vector.extract_strided_slice %332 {offsets = [0, 128], sizes = [8, 10], strides = [1, 1]} : vector<8x384xf32> to vector<8x10xf32>
    %345 = vector.extract_strided_slice %333 {offsets = [0, 128], sizes = [8, 10], strides = [1, 1]} : vector<8x384xf32> to vector<8x10xf32>
    %346 = arith.addf %344, %345 : vector<8x10xf32>
    %cst_117 = arith.constant 5.000000e-01 : f32
    %347 = vector.broadcast %cst_117 : f32 to vector<8x10xf32>
    %348 = arith.mulf %347, %346 : vector<8x10xf32>
    %349 = math.tanh %348 : vector<8x10xf32>
    %cst_118 = arith.constant 5.000000e-01 : f32
    %350 = vector.broadcast %cst_118 : f32 to vector<8x10xf32>
    %351 = arith.mulf %350, %349 : vector<8x10xf32>
    %cst_119 = arith.constant 5.000000e-01 : f32
    %352 = vector.broadcast %cst_119 : f32 to vector<8x10xf32>
    %353 = arith.addf %351, %352 : vector<8x10xf32>
    %354 = vector.extract_strided_slice %332 {offsets = [0, 256], sizes = [8, 10], strides = [1, 1]} : vector<8x384xf32> to vector<8x10xf32>
    %355 = vector.extract_strided_slice %333 {offsets = [0, 256], sizes = [8, 10], strides = [1, 1]} : vector<8x384xf32> to vector<8x10xf32>
    %356 = vector.broadcast %56 : vector<1x10xf32> to vector<8x10xf32>
    %357 = arith.addf %355, %356 : vector<8x10xf32>
    %358 = arith.mulf %343, %357 : vector<8x10xf32>
    %359 = arith.addf %354, %358 : vector<8x10xf32>
    %360 = math.tanh %359 : vector<8x10xf32>
    %cst_120 = arith.constant 1.000000e+00 : f32
    %361 = vector.broadcast %cst_120 : f32 to vector<8x10xf32>
    %362 = arith.subf %361, %353 : vector<8x10xf32>
    %363 = arith.mulf %362, %360 : vector<8x10xf32>
    %364 = arith.mulf %353, %331 : vector<8x10xf32>
    %365 = arith.addf %363, %364 : vector<8x10xf32>
    %c72_121 = arith.constant 72 : index
    %c0_122 = arith.constant 0 : index
    %366 = vector.load %arg6[%c72_121, %c0_122] : memref<112x384xf32, #tpu.memory_space<vmem>>, vector<8x384xf32>
    %cst_123 = arith.constant dense<0.000000e+00> : vector<8x384xf32>
    %367 = tpu.matmul %365, %55, %cst_123 {dimension_numbers = #tpu.dot_dimension_numbers<[1], [0], [0], [1], [0, 0, 1, 1], [], []>} : vector<8x10xf32>, vector<10x384xf32>, vector<8x384xf32> -> vector<8x384xf32>
    %368 = vector.extract_strided_slice %366 {offsets = [0, 0], sizes = [8, 10], strides = [1, 1]} : vector<8x384xf32> to vector<8x10xf32>
    %369 = vector.extract_strided_slice %367 {offsets = [0, 0], sizes = [8, 10], strides = [1, 1]} : vector<8x384xf32> to vector<8x10xf32>
    %370 = arith.addf %368, %369 : vector<8x10xf32>
    %cst_124 = arith.constant 5.000000e-01 : f32
    %371 = vector.broadcast %cst_124 : f32 to vector<8x10xf32>
    %372 = arith.mulf %371, %370 : vector<8x10xf32>
    %373 = math.tanh %372 : vector<8x10xf32>
    %cst_125 = arith.constant 5.000000e-01 : f32
    %374 = vector.broadcast %cst_125 : f32 to vector<8x10xf32>
    %375 = arith.mulf %374, %373 : vector<8x10xf32>
    %cst_126 = arith.constant 5.000000e-01 : f32
    %376 = vector.broadcast %cst_126 : f32 to vector<8x10xf32>
    %377 = arith.addf %375, %376 : vector<8x10xf32>
    %378 = vector.extract_strided_slice %366 {offsets = [0, 128], sizes = [8, 10], strides = [1, 1]} : vector<8x384xf32> to vector<8x10xf32>
    %379 = vector.extract_strided_slice %367 {offsets = [0, 128], sizes = [8, 10], strides = [1, 1]} : vector<8x384xf32> to vector<8x10xf32>
    %380 = arith.addf %378, %379 : vector<8x10xf32>
    %cst_127 = arith.constant 5.000000e-01 : f32
    %381 = vector.broadcast %cst_127 : f32 to vector<8x10xf32>
    %382 = arith.mulf %381, %380 : vector<8x10xf32>
    %383 = math.tanh %382 : vector<8x10xf32>
    %cst_128 = arith.constant 5.000000e-01 : f32
    %384 = vector.broadcast %cst_128 : f32 to vector<8x10xf32>
    %385 = arith.mulf %384, %383 : vector<8x10xf32>
    %cst_129 = arith.constant 5.000000e-01 : f32
    %386 = vector.broadcast %cst_129 : f32 to vector<8x10xf32>
    %387 = arith.addf %385, %386 : vector<8x10xf32>
    %388 = vector.extract_strided_slice %366 {offsets = [0, 256], sizes = [8, 10], strides = [1, 1]} : vector<8x384xf32> to vector<8x10xf32>
    %389 = vector.extract_strided_slice %367 {offsets = [0, 256], sizes = [8, 10], strides = [1, 1]} : vector<8x384xf32> to vector<8x10xf32>
    %390 = vector.broadcast %56 : vector<1x10xf32> to vector<8x10xf32>
    %391 = arith.addf %389, %390 : vector<8x10xf32>
    %392 = arith.mulf %377, %391 : vector<8x10xf32>
    %393 = arith.addf %388, %392 : vector<8x10xf32>
    %394 = math.tanh %393 : vector<8x10xf32>
    %cst_130 = arith.constant 1.000000e+00 : f32
    %395 = vector.broadcast %cst_130 : f32 to vector<8x10xf32>
    %396 = arith.subf %395, %387 : vector<8x10xf32>
    %397 = arith.mulf %396, %394 : vector<8x10xf32>
    %398 = arith.mulf %387, %365 : vector<8x10xf32>
    %399 = arith.addf %397, %398 : vector<8x10xf32>
    %c80 = arith.constant 80 : index
    %c0_131 = arith.constant 0 : index
    %400 = vector.load %arg6[%c80, %c0_131] : memref<112x384xf32, #tpu.memory_space<vmem>>, vector<8x384xf32>
    %cst_132 = arith.constant dense<0.000000e+00> : vector<8x384xf32>
    %401 = tpu.matmul %399, %55, %cst_132 {dimension_numbers = #tpu.dot_dimension_numbers<[1], [0], [0], [1], [0, 0, 1, 1], [], []>} : vector<8x10xf32>, vector<10x384xf32>, vector<8x384xf32> -> vector<8x384xf32>
    %402 = vector.extract_strided_slice %400 {offsets = [0, 0], sizes = [8, 10], strides = [1, 1]} : vector<8x384xf32> to vector<8x10xf32>
    %403 = vector.extract_strided_slice %401 {offsets = [0, 0], sizes = [8, 10], strides = [1, 1]} : vector<8x384xf32> to vector<8x10xf32>
    %404 = arith.addf %402, %403 : vector<8x10xf32>
    %cst_133 = arith.constant 5.000000e-01 : f32
    %405 = vector.broadcast %cst_133 : f32 to vector<8x10xf32>
    %406 = arith.mulf %405, %404 : vector<8x10xf32>
    %407 = math.tanh %406 : vector<8x10xf32>
    %cst_134 = arith.constant 5.000000e-01 : f32
    %408 = vector.broadcast %cst_134 : f32 to vector<8x10xf32>
    %409 = arith.mulf %408, %407 : vector<8x10xf32>
    %cst_135 = arith.constant 5.000000e-01 : f32
    %410 = vector.broadcast %cst_135 : f32 to vector<8x10xf32>
    %411 = arith.addf %409, %410 : vector<8x10xf32>
    %412 = vector.extract_strided_slice %400 {offsets = [0, 128], sizes = [8, 10], strides = [1, 1]} : vector<8x384xf32> to vector<8x10xf32>
    %413 = vector.extract_strided_slice %401 {offsets = [0, 128], sizes = [8, 10], strides = [1, 1]} : vector<8x384xf32> to vector<8x10xf32>
    %414 = arith.addf %412, %413 : vector<8x10xf32>
    %cst_136 = arith.constant 5.000000e-01 : f32
    %415 = vector.broadcast %cst_136 : f32 to vector<8x10xf32>
    %416 = arith.mulf %415, %414 : vector<8x10xf32>
    %417 = math.tanh %416 : vector<8x10xf32>
    %cst_137 = arith.constant 5.000000e-01 : f32
    %418 = vector.broadcast %cst_137 : f32 to vector<8x10xf32>
    %419 = arith.mulf %418, %417 : vector<8x10xf32>
    %cst_138 = arith.constant 5.000000e-01 : f32
    %420 = vector.broadcast %cst_138 : f32 to vector<8x10xf32>
    %421 = arith.addf %419, %420 : vector<8x10xf32>
    %422 = vector.extract_strided_slice %400 {offsets = [0, 256], sizes = [8, 10], strides = [1, 1]} : vector<8x384xf32> to vector<8x10xf32>
    %423 = vector.extract_strided_slice %401 {offsets = [0, 256], sizes = [8, 10], strides = [1, 1]} : vector<8x384xf32> to vector<8x10xf32>
    %424 = vector.broadcast %56 : vector<1x10xf32> to vector<8x10xf32>
    %425 = arith.addf %423, %424 : vector<8x10xf32>
    %426 = arith.mulf %411, %425 : vector<8x10xf32>
    %427 = arith.addf %422, %426 : vector<8x10xf32>
    %428 = math.tanh %427 : vector<8x10xf32>
    %cst_139 = arith.constant 1.000000e+00 : f32
    %429 = vector.broadcast %cst_139 : f32 to vector<8x10xf32>
    %430 = arith.subf %429, %421 : vector<8x10xf32>
    %431 = arith.mulf %430, %428 : vector<8x10xf32>
    %432 = arith.mulf %421, %399 : vector<8x10xf32>
    %433 = arith.addf %431, %432 : vector<8x10xf32>
    %c88_140 = arith.constant 88 : index
    %c0_141 = arith.constant 0 : index
    %434 = vector.load %arg6[%c88_140, %c0_141] : memref<112x384xf32, #tpu.memory_space<vmem>>, vector<8x384xf32>
    %cst_142 = arith.constant dense<0.000000e+00> : vector<8x384xf32>
    %435 = tpu.matmul %433, %55, %cst_142 {dimension_numbers = #tpu.dot_dimension_numbers<[1], [0], [0], [1], [0, 0, 1, 1], [], []>} : vector<8x10xf32>, vector<10x384xf32>, vector<8x384xf32> -> vector<8x384xf32>
    %436 = vector.extract_strided_slice %434 {offsets = [0, 0], sizes = [8, 10], strides = [1, 1]} : vector<8x384xf32> to vector<8x10xf32>
    %437 = vector.extract_strided_slice %435 {offsets = [0, 0], sizes = [8, 10], strides = [1, 1]} : vector<8x384xf32> to vector<8x10xf32>
    %438 = arith.addf %436, %437 : vector<8x10xf32>
    %cst_143 = arith.constant 5.000000e-01 : f32
    %439 = vector.broadcast %cst_143 : f32 to vector<8x10xf32>
    %440 = arith.mulf %439, %438 : vector<8x10xf32>
    %441 = math.tanh %440 : vector<8x10xf32>
    %cst_144 = arith.constant 5.000000e-01 : f32
    %442 = vector.broadcast %cst_144 : f32 to vector<8x10xf32>
    %443 = arith.mulf %442, %441 : vector<8x10xf32>
    %cst_145 = arith.constant 5.000000e-01 : f32
    %444 = vector.broadcast %cst_145 : f32 to vector<8x10xf32>
    %445 = arith.addf %443, %444 : vector<8x10xf32>
    %446 = vector.extract_strided_slice %434 {offsets = [0, 128], sizes = [8, 10], strides = [1, 1]} : vector<8x384xf32> to vector<8x10xf32>
    %447 = vector.extract_strided_slice %435 {offsets = [0, 128], sizes = [8, 10], strides = [1, 1]} : vector<8x384xf32> to vector<8x10xf32>
    %448 = arith.addf %446, %447 : vector<8x10xf32>
    %cst_146 = arith.constant 5.000000e-01 : f32
    %449 = vector.broadcast %cst_146 : f32 to vector<8x10xf32>
    %450 = arith.mulf %449, %448 : vector<8x10xf32>
    %451 = math.tanh %450 : vector<8x10xf32>
    %cst_147 = arith.constant 5.000000e-01 : f32
    %452 = vector.broadcast %cst_147 : f32 to vector<8x10xf32>
    %453 = arith.mulf %452, %451 : vector<8x10xf32>
    %cst_148 = arith.constant 5.000000e-01 : f32
    %454 = vector.broadcast %cst_148 : f32 to vector<8x10xf32>
    %455 = arith.addf %453, %454 : vector<8x10xf32>
    %456 = vector.extract_strided_slice %434 {offsets = [0, 256], sizes = [8, 10], strides = [1, 1]} : vector<8x384xf32> to vector<8x10xf32>
    %457 = vector.extract_strided_slice %435 {offsets = [0, 256], sizes = [8, 10], strides = [1, 1]} : vector<8x384xf32> to vector<8x10xf32>
    %458 = vector.broadcast %56 : vector<1x10xf32> to vector<8x10xf32>
    %459 = arith.addf %457, %458 : vector<8x10xf32>
    %460 = arith.mulf %445, %459 : vector<8x10xf32>
    %461 = arith.addf %456, %460 : vector<8x10xf32>
    %462 = math.tanh %461 : vector<8x10xf32>
    %cst_149 = arith.constant 1.000000e+00 : f32
    %463 = vector.broadcast %cst_149 : f32 to vector<8x10xf32>
    %464 = arith.subf %463, %455 : vector<8x10xf32>
    %465 = arith.mulf %464, %462 : vector<8x10xf32>
    %466 = arith.mulf %455, %433 : vector<8x10xf32>
    %467 = arith.addf %465, %466 : vector<8x10xf32>
    %c96 = arith.constant 96 : index
    %c0_150 = arith.constant 0 : index
    %468 = vector.load %arg6[%c96, %c0_150] : memref<112x384xf32, #tpu.memory_space<vmem>>, vector<8x384xf32>
    %cst_151 = arith.constant dense<0.000000e+00> : vector<8x384xf32>
    %469 = tpu.matmul %467, %55, %cst_151 {dimension_numbers = #tpu.dot_dimension_numbers<[1], [0], [0], [1], [0, 0, 1, 1], [], []>} : vector<8x10xf32>, vector<10x384xf32>, vector<8x384xf32> -> vector<8x384xf32>
    %470 = vector.extract_strided_slice %468 {offsets = [0, 0], sizes = [8, 10], strides = [1, 1]} : vector<8x384xf32> to vector<8x10xf32>
    %471 = vector.extract_strided_slice %469 {offsets = [0, 0], sizes = [8, 10], strides = [1, 1]} : vector<8x384xf32> to vector<8x10xf32>
    %472 = arith.addf %470, %471 : vector<8x10xf32>
    %cst_152 = arith.constant 5.000000e-01 : f32
    %473 = vector.broadcast %cst_152 : f32 to vector<8x10xf32>
    %474 = arith.mulf %473, %472 : vector<8x10xf32>
    %475 = math.tanh %474 : vector<8x10xf32>
    %cst_153 = arith.constant 5.000000e-01 : f32
    %476 = vector.broadcast %cst_153 : f32 to vector<8x10xf32>
    %477 = arith.mulf %476, %475 : vector<8x10xf32>
    %cst_154 = arith.constant 5.000000e-01 : f32
    %478 = vector.broadcast %cst_154 : f32 to vector<8x10xf32>
    %479 = arith.addf %477, %478 : vector<8x10xf32>
    %480 = vector.extract_strided_slice %468 {offsets = [0, 128], sizes = [8, 10], strides = [1, 1]} : vector<8x384xf32> to vector<8x10xf32>
    %481 = vector.extract_strided_slice %469 {offsets = [0, 128], sizes = [8, 10], strides = [1, 1]} : vector<8x384xf32> to vector<8x10xf32>
    %482 = arith.addf %480, %481 : vector<8x10xf32>
    %cst_155 = arith.constant 5.000000e-01 : f32
    %483 = vector.broadcast %cst_155 : f32 to vector<8x10xf32>
    %484 = arith.mulf %483, %482 : vector<8x10xf32>
    %485 = math.tanh %484 : vector<8x10xf32>
    %cst_156 = arith.constant 5.000000e-01 : f32
    %486 = vector.broadcast %cst_156 : f32 to vector<8x10xf32>
    %487 = arith.mulf %486, %485 : vector<8x10xf32>
    %cst_157 = arith.constant 5.000000e-01 : f32
    %488 = vector.broadcast %cst_157 : f32 to vector<8x10xf32>
    %489 = arith.addf %487, %488 : vector<8x10xf32>
    %490 = vector.extract_strided_slice %468 {offsets = [0, 256], sizes = [8, 10], strides = [1, 1]} : vector<8x384xf32> to vector<8x10xf32>
    %491 = vector.extract_strided_slice %469 {offsets = [0, 256], sizes = [8, 10], strides = [1, 1]} : vector<8x384xf32> to vector<8x10xf32>
    %492 = vector.broadcast %56 : vector<1x10xf32> to vector<8x10xf32>
    %493 = arith.addf %491, %492 : vector<8x10xf32>
    %494 = arith.mulf %479, %493 : vector<8x10xf32>
    %495 = arith.addf %490, %494 : vector<8x10xf32>
    %496 = math.tanh %495 : vector<8x10xf32>
    %cst_158 = arith.constant 1.000000e+00 : f32
    %497 = vector.broadcast %cst_158 : f32 to vector<8x10xf32>
    %498 = arith.subf %497, %489 : vector<8x10xf32>
    %499 = arith.mulf %498, %496 : vector<8x10xf32>
    %500 = arith.mulf %489, %467 : vector<8x10xf32>
    %501 = arith.addf %499, %500 : vector<8x10xf32>
    %c104 = arith.constant 104 : index
    %c0_159 = arith.constant 0 : index
    %502 = vector.load %arg6[%c104, %c0_159] : memref<112x384xf32, #tpu.memory_space<vmem>>, vector<8x384xf32>
    %cst_160 = arith.constant dense<0.000000e+00> : vector<8x384xf32>
    %503 = tpu.matmul %501, %55, %cst_160 {dimension_numbers = #tpu.dot_dimension_numbers<[1], [0], [0], [1], [0, 0, 1, 1], [], []>} : vector<8x10xf32>, vector<10x384xf32>, vector<8x384xf32> -> vector<8x384xf32>
    %504 = vector.extract_strided_slice %502 {offsets = [0, 0], sizes = [8, 10], strides = [1, 1]} : vector<8x384xf32> to vector<8x10xf32>
    %505 = vector.extract_strided_slice %503 {offsets = [0, 0], sizes = [8, 10], strides = [1, 1]} : vector<8x384xf32> to vector<8x10xf32>
    %506 = arith.addf %504, %505 : vector<8x10xf32>
    %cst_161 = arith.constant 5.000000e-01 : f32
    %507 = vector.broadcast %cst_161 : f32 to vector<8x10xf32>
    %508 = arith.mulf %507, %506 : vector<8x10xf32>
    %509 = math.tanh %508 : vector<8x10xf32>
    %cst_162 = arith.constant 5.000000e-01 : f32
    %510 = vector.broadcast %cst_162 : f32 to vector<8x10xf32>
    %511 = arith.mulf %510, %509 : vector<8x10xf32>
    %cst_163 = arith.constant 5.000000e-01 : f32
    %512 = vector.broadcast %cst_163 : f32 to vector<8x10xf32>
    %513 = arith.addf %511, %512 : vector<8x10xf32>
    %514 = vector.extract_strided_slice %502 {offsets = [0, 128], sizes = [8, 10], strides = [1, 1]} : vector<8x384xf32> to vector<8x10xf32>
    %515 = vector.extract_strided_slice %503 {offsets = [0, 128], sizes = [8, 10], strides = [1, 1]} : vector<8x384xf32> to vector<8x10xf32>
    %516 = arith.addf %514, %515 : vector<8x10xf32>
    %cst_164 = arith.constant 5.000000e-01 : f32
    %517 = vector.broadcast %cst_164 : f32 to vector<8x10xf32>
    %518 = arith.mulf %517, %516 : vector<8x10xf32>
    %519 = math.tanh %518 : vector<8x10xf32>
    %cst_165 = arith.constant 5.000000e-01 : f32
    %520 = vector.broadcast %cst_165 : f32 to vector<8x10xf32>
    %521 = arith.mulf %520, %519 : vector<8x10xf32>
    %cst_166 = arith.constant 5.000000e-01 : f32
    %522 = vector.broadcast %cst_166 : f32 to vector<8x10xf32>
    %523 = arith.addf %521, %522 : vector<8x10xf32>
    %524 = vector.extract_strided_slice %502 {offsets = [0, 256], sizes = [8, 10], strides = [1, 1]} : vector<8x384xf32> to vector<8x10xf32>
    %525 = vector.extract_strided_slice %503 {offsets = [0, 256], sizes = [8, 10], strides = [1, 1]} : vector<8x384xf32> to vector<8x10xf32>
    %526 = vector.broadcast %56 : vector<1x10xf32> to vector<8x10xf32>
    %527 = arith.addf %525, %526 : vector<8x10xf32>
    %528 = arith.mulf %513, %527 : vector<8x10xf32>
    %529 = arith.addf %524, %528 : vector<8x10xf32>
    %530 = math.tanh %529 : vector<8x10xf32>
    %cst_167 = arith.constant 1.000000e+00 : f32
    %531 = vector.broadcast %cst_167 : f32 to vector<8x10xf32>
    %532 = arith.subf %531, %523 : vector<8x10xf32>
    %533 = arith.mulf %532, %530 : vector<8x10xf32>
    %534 = arith.mulf %523, %501 : vector<8x10xf32>
    %535 = arith.addf %533, %534 : vector<8x10xf32>
    %cst_168 = arith.constant 0.000000e+00 : f32
    %536 = vector.broadcast %cst_168 : f32 to vector<16x5xf32>
    %c0_169 = arith.constant 0 : index
    %c0_170 = arith.constant 0 : index
    %537 = vector.load %arg7[%c0_169, %c0_170] : memref<96x384xf32, #tpu.memory_space<vmem>>, vector<16x384xf32>
    %cst_171 = arith.constant dense<0.000000e+00> : vector<16x384xf32>
    %538 = tpu.matmul %536, %57, %cst_171 {dimension_numbers = #tpu.dot_dimension_numbers<[1], [0], [0], [1], [0, 0, 1, 1], [], []>} : vector<16x5xf32>, vector<5x384xf32>, vector<16x384xf32> -> vector<16x384xf32>
    %539 = vector.extract_strided_slice %537 {offsets = [0, 0], sizes = [16, 5], strides = [1, 1]} : vector<16x384xf32> to vector<16x5xf32>
    %540 = vector.extract_strided_slice %538 {offsets = [0, 0], sizes = [16, 5], strides = [1, 1]} : vector<16x384xf32> to vector<16x5xf32>
    %541 = arith.addf %539, %540 : vector<16x5xf32>
    %cst_172 = arith.constant 5.000000e-01 : f32
    %542 = vector.broadcast %cst_172 : f32 to vector<16x5xf32>
    %543 = arith.mulf %542, %541 : vector<16x5xf32>
    %544 = math.tanh %543 : vector<16x5xf32>
    %cst_173 = arith.constant 5.000000e-01 : f32
    %545 = vector.broadcast %cst_173 : f32 to vector<16x5xf32>
    %546 = arith.mulf %545, %544 : vector<16x5xf32>
    %cst_174 = arith.constant 5.000000e-01 : f32
    %547 = vector.broadcast %cst_174 : f32 to vector<16x5xf32>
    %548 = arith.addf %546, %547 : vector<16x5xf32>
    %549 = vector.extract_strided_slice %537 {offsets = [0, 128], sizes = [16, 5], strides = [1, 1]} : vector<16x384xf32> to vector<16x5xf32>
    %550 = vector.extract_strided_slice %538 {offsets = [0, 128], sizes = [16, 5], strides = [1, 1]} : vector<16x384xf32> to vector<16x5xf32>
    %551 = arith.addf %549, %550 : vector<16x5xf32>
    %cst_175 = arith.constant 5.000000e-01 : f32
    %552 = vector.broadcast %cst_175 : f32 to vector<16x5xf32>
    %553 = arith.mulf %552, %551 : vector<16x5xf32>
    %554 = math.tanh %553 : vector<16x5xf32>
    %cst_176 = arith.constant 5.000000e-01 : f32
    %555 = vector.broadcast %cst_176 : f32 to vector<16x5xf32>
    %556 = arith.mulf %555, %554 : vector<16x5xf32>
    %cst_177 = arith.constant 5.000000e-01 : f32
    %557 = vector.broadcast %cst_177 : f32 to vector<16x5xf32>
    %558 = arith.addf %556, %557 : vector<16x5xf32>
    %559 = vector.extract_strided_slice %537 {offsets = [0, 256], sizes = [16, 5], strides = [1, 1]} : vector<16x384xf32> to vector<16x5xf32>
    %560 = vector.extract_strided_slice %538 {offsets = [0, 256], sizes = [16, 5], strides = [1, 1]} : vector<16x384xf32> to vector<16x5xf32>
    %561 = vector.broadcast %58 : vector<1x5xf32> to vector<16x5xf32>
    %562 = arith.addf %560, %561 : vector<16x5xf32>
    %563 = arith.mulf %548, %562 : vector<16x5xf32>
    %564 = arith.addf %559, %563 : vector<16x5xf32>
    %565 = math.tanh %564 : vector<16x5xf32>
    %cst_178 = arith.constant 1.000000e+00 : f32
    %566 = vector.broadcast %cst_178 : f32 to vector<16x5xf32>
    %567 = arith.subf %566, %558 : vector<16x5xf32>
    %568 = arith.mulf %567, %565 : vector<16x5xf32>
    %569 = arith.mulf %558, %536 : vector<16x5xf32>
    %570 = arith.addf %568, %569 : vector<16x5xf32>
    %c16_179 = arith.constant 16 : index
    %c0_180 = arith.constant 0 : index
    %571 = vector.load %arg7[%c16_179, %c0_180] : memref<96x384xf32, #tpu.memory_space<vmem>>, vector<16x384xf32>
    %cst_181 = arith.constant dense<0.000000e+00> : vector<16x384xf32>
    %572 = tpu.matmul %570, %57, %cst_181 {dimension_numbers = #tpu.dot_dimension_numbers<[1], [0], [0], [1], [0, 0, 1, 1], [], []>} : vector<16x5xf32>, vector<5x384xf32>, vector<16x384xf32> -> vector<16x384xf32>
    %573 = vector.extract_strided_slice %571 {offsets = [0, 0], sizes = [16, 5], strides = [1, 1]} : vector<16x384xf32> to vector<16x5xf32>
    %574 = vector.extract_strided_slice %572 {offsets = [0, 0], sizes = [16, 5], strides = [1, 1]} : vector<16x384xf32> to vector<16x5xf32>
    %575 = arith.addf %573, %574 : vector<16x5xf32>
    %cst_182 = arith.constant 5.000000e-01 : f32
    %576 = vector.broadcast %cst_182 : f32 to vector<16x5xf32>
    %577 = arith.mulf %576, %575 : vector<16x5xf32>
    %578 = math.tanh %577 : vector<16x5xf32>
    %cst_183 = arith.constant 5.000000e-01 : f32
    %579 = vector.broadcast %cst_183 : f32 to vector<16x5xf32>
    %580 = arith.mulf %579, %578 : vector<16x5xf32>
    %cst_184 = arith.constant 5.000000e-01 : f32
    %581 = vector.broadcast %cst_184 : f32 to vector<16x5xf32>
    %582 = arith.addf %580, %581 : vector<16x5xf32>
    %583 = vector.extract_strided_slice %571 {offsets = [0, 128], sizes = [16, 5], strides = [1, 1]} : vector<16x384xf32> to vector<16x5xf32>
    %584 = vector.extract_strided_slice %572 {offsets = [0, 128], sizes = [16, 5], strides = [1, 1]} : vector<16x384xf32> to vector<16x5xf32>
    %585 = arith.addf %583, %584 : vector<16x5xf32>
    %cst_185 = arith.constant 5.000000e-01 : f32
    %586 = vector.broadcast %cst_185 : f32 to vector<16x5xf32>
    %587 = arith.mulf %586, %585 : vector<16x5xf32>
    %588 = math.tanh %587 : vector<16x5xf32>
    %cst_186 = arith.constant 5.000000e-01 : f32
    %589 = vector.broadcast %cst_186 : f32 to vector<16x5xf32>
    %590 = arith.mulf %589, %588 : vector<16x5xf32>
    %cst_187 = arith.constant 5.000000e-01 : f32
    %591 = vector.broadcast %cst_187 : f32 to vector<16x5xf32>
    %592 = arith.addf %590, %591 : vector<16x5xf32>
    %593 = vector.extract_strided_slice %571 {offsets = [0, 256], sizes = [16, 5], strides = [1, 1]} : vector<16x384xf32> to vector<16x5xf32>
    %594 = vector.extract_strided_slice %572 {offsets = [0, 256], sizes = [16, 5], strides = [1, 1]} : vector<16x384xf32> to vector<16x5xf32>
    %595 = vector.broadcast %58 : vector<1x5xf32> to vector<16x5xf32>
    %596 = arith.addf %594, %595 : vector<16x5xf32>
    %597 = arith.mulf %582, %596 : vector<16x5xf32>
    %598 = arith.addf %593, %597 : vector<16x5xf32>
    %599 = math.tanh %598 : vector<16x5xf32>
    %cst_188 = arith.constant 1.000000e+00 : f32
    %600 = vector.broadcast %cst_188 : f32 to vector<16x5xf32>
    %601 = arith.subf %600, %592 : vector<16x5xf32>
    %602 = arith.mulf %601, %599 : vector<16x5xf32>
    %603 = arith.mulf %592, %570 : vector<16x5xf32>
    %604 = arith.addf %602, %603 : vector<16x5xf32>
    %c32_189 = arith.constant 32 : index
    %c0_190 = arith.constant 0 : index
    %605 = vector.load %arg7[%c32_189, %c0_190] : memref<96x384xf32, #tpu.memory_space<vmem>>, vector<16x384xf32>
    %cst_191 = arith.constant dense<0.000000e+00> : vector<16x384xf32>
    %606 = tpu.matmul %604, %57, %cst_191 {dimension_numbers = #tpu.dot_dimension_numbers<[1], [0], [0], [1], [0, 0, 1, 1], [], []>} : vector<16x5xf32>, vector<5x384xf32>, vector<16x384xf32> -> vector<16x384xf32>
    %607 = vector.extract_strided_slice %605 {offsets = [0, 0], sizes = [16, 5], strides = [1, 1]} : vector<16x384xf32> to vector<16x5xf32>
    %608 = vector.extract_strided_slice %606 {offsets = [0, 0], sizes = [16, 5], strides = [1, 1]} : vector<16x384xf32> to vector<16x5xf32>
    %609 = arith.addf %607, %608 : vector<16x5xf32>
    %cst_192 = arith.constant 5.000000e-01 : f32
    %610 = vector.broadcast %cst_192 : f32 to vector<16x5xf32>
    %611 = arith.mulf %610, %609 : vector<16x5xf32>
    %612 = math.tanh %611 : vector<16x5xf32>
    %cst_193 = arith.constant 5.000000e-01 : f32
    %613 = vector.broadcast %cst_193 : f32 to vector<16x5xf32>
    %614 = arith.mulf %613, %612 : vector<16x5xf32>
    %cst_194 = arith.constant 5.000000e-01 : f32
    %615 = vector.broadcast %cst_194 : f32 to vector<16x5xf32>
    %616 = arith.addf %614, %615 : vector<16x5xf32>
    %617 = vector.extract_strided_slice %605 {offsets = [0, 128], sizes = [16, 5], strides = [1, 1]} : vector<16x384xf32> to vector<16x5xf32>
    %618 = vector.extract_strided_slice %606 {offsets = [0, 128], sizes = [16, 5], strides = [1, 1]} : vector<16x384xf32> to vector<16x5xf32>
    %619 = arith.addf %617, %618 : vector<16x5xf32>
    %cst_195 = arith.constant 5.000000e-01 : f32
    %620 = vector.broadcast %cst_195 : f32 to vector<16x5xf32>
    %621 = arith.mulf %620, %619 : vector<16x5xf32>
    %622 = math.tanh %621 : vector<16x5xf32>
    %cst_196 = arith.constant 5.000000e-01 : f32
    %623 = vector.broadcast %cst_196 : f32 to vector<16x5xf32>
    %624 = arith.mulf %623, %622 : vector<16x5xf32>
    %cst_197 = arith.constant 5.000000e-01 : f32
    %625 = vector.broadcast %cst_197 : f32 to vector<16x5xf32>
    %626 = arith.addf %624, %625 : vector<16x5xf32>
    %627 = vector.extract_strided_slice %605 {offsets = [0, 256], sizes = [16, 5], strides = [1, 1]} : vector<16x384xf32> to vector<16x5xf32>
    %628 = vector.extract_strided_slice %606 {offsets = [0, 256], sizes = [16, 5], strides = [1, 1]} : vector<16x384xf32> to vector<16x5xf32>
    %629 = vector.broadcast %58 : vector<1x5xf32> to vector<16x5xf32>
    %630 = arith.addf %628, %629 : vector<16x5xf32>
    %631 = arith.mulf %616, %630 : vector<16x5xf32>
    %632 = arith.addf %627, %631 : vector<16x5xf32>
    %633 = math.tanh %632 : vector<16x5xf32>
    %cst_198 = arith.constant 1.000000e+00 : f32
    %634 = vector.broadcast %cst_198 : f32 to vector<16x5xf32>
    %635 = arith.subf %634, %626 : vector<16x5xf32>
    %636 = arith.mulf %635, %633 : vector<16x5xf32>
    %637 = arith.mulf %626, %604 : vector<16x5xf32>
    %638 = arith.addf %636, %637 : vector<16x5xf32>
    %c48_199 = arith.constant 48 : index
    %c0_200 = arith.constant 0 : index
    %639 = vector.load %arg7[%c48_199, %c0_200] : memref<96x384xf32, #tpu.memory_space<vmem>>, vector<16x384xf32>
    %cst_201 = arith.constant dense<0.000000e+00> : vector<16x384xf32>
    %640 = tpu.matmul %638, %57, %cst_201 {dimension_numbers = #tpu.dot_dimension_numbers<[1], [0], [0], [1], [0, 0, 1, 1], [], []>} : vector<16x5xf32>, vector<5x384xf32>, vector<16x384xf32> -> vector<16x384xf32>
    %641 = vector.extract_strided_slice %639 {offsets = [0, 0], sizes = [16, 5], strides = [1, 1]} : vector<16x384xf32> to vector<16x5xf32>
    %642 = vector.extract_strided_slice %640 {offsets = [0, 0], sizes = [16, 5], strides = [1, 1]} : vector<16x384xf32> to vector<16x5xf32>
    %643 = arith.addf %641, %642 : vector<16x5xf32>
    %cst_202 = arith.constant 5.000000e-01 : f32
    %644 = vector.broadcast %cst_202 : f32 to vector<16x5xf32>
    %645 = arith.mulf %644, %643 : vector<16x5xf32>
    %646 = math.tanh %645 : vector<16x5xf32>
    %cst_203 = arith.constant 5.000000e-01 : f32
    %647 = vector.broadcast %cst_203 : f32 to vector<16x5xf32>
    %648 = arith.mulf %647, %646 : vector<16x5xf32>
    %cst_204 = arith.constant 5.000000e-01 : f32
    %649 = vector.broadcast %cst_204 : f32 to vector<16x5xf32>
    %650 = arith.addf %648, %649 : vector<16x5xf32>
    %651 = vector.extract_strided_slice %639 {offsets = [0, 128], sizes = [16, 5], strides = [1, 1]} : vector<16x384xf32> to vector<16x5xf32>
    %652 = vector.extract_strided_slice %640 {offsets = [0, 128], sizes = [16, 5], strides = [1, 1]} : vector<16x384xf32> to vector<16x5xf32>
    %653 = arith.addf %651, %652 : vector<16x5xf32>
    %cst_205 = arith.constant 5.000000e-01 : f32
    %654 = vector.broadcast %cst_205 : f32 to vector<16x5xf32>
    %655 = arith.mulf %654, %653 : vector<16x5xf32>
    %656 = math.tanh %655 : vector<16x5xf32>
    %cst_206 = arith.constant 5.000000e-01 : f32
    %657 = vector.broadcast %cst_206 : f32 to vector<16x5xf32>
    %658 = arith.mulf %657, %656 : vector<16x5xf32>
    %cst_207 = arith.constant 5.000000e-01 : f32
    %659 = vector.broadcast %cst_207 : f32 to vector<16x5xf32>
    %660 = arith.addf %658, %659 : vector<16x5xf32>
    %661 = vector.extract_strided_slice %639 {offsets = [0, 256], sizes = [16, 5], strides = [1, 1]} : vector<16x384xf32> to vector<16x5xf32>
    %662 = vector.extract_strided_slice %640 {offsets = [0, 256], sizes = [16, 5], strides = [1, 1]} : vector<16x384xf32> to vector<16x5xf32>
    %663 = vector.broadcast %58 : vector<1x5xf32> to vector<16x5xf32>
    %664 = arith.addf %662, %663 : vector<16x5xf32>
    %665 = arith.mulf %650, %664 : vector<16x5xf32>
    %666 = arith.addf %661, %665 : vector<16x5xf32>
    %667 = math.tanh %666 : vector<16x5xf32>
    %cst_208 = arith.constant 1.000000e+00 : f32
    %668 = vector.broadcast %cst_208 : f32 to vector<16x5xf32>
    %669 = arith.subf %668, %660 : vector<16x5xf32>
    %670 = arith.mulf %669, %667 : vector<16x5xf32>
    %671 = arith.mulf %660, %638 : vector<16x5xf32>
    %672 = arith.addf %670, %671 : vector<16x5xf32>
    %c64_209 = arith.constant 64 : index
    %c0_210 = arith.constant 0 : index
    %673 = vector.load %arg7[%c64_209, %c0_210] : memref<96x384xf32, #tpu.memory_space<vmem>>, vector<16x384xf32>
    %cst_211 = arith.constant dense<0.000000e+00> : vector<16x384xf32>
    %674 = tpu.matmul %672, %57, %cst_211 {dimension_numbers = #tpu.dot_dimension_numbers<[1], [0], [0], [1], [0, 0, 1, 1], [], []>} : vector<16x5xf32>, vector<5x384xf32>, vector<16x384xf32> -> vector<16x384xf32>
    %675 = vector.extract_strided_slice %673 {offsets = [0, 0], sizes = [16, 5], strides = [1, 1]} : vector<16x384xf32> to vector<16x5xf32>
    %676 = vector.extract_strided_slice %674 {offsets = [0, 0], sizes = [16, 5], strides = [1, 1]} : vector<16x384xf32> to vector<16x5xf32>
    %677 = arith.addf %675, %676 : vector<16x5xf32>
    %cst_212 = arith.constant 5.000000e-01 : f32
    %678 = vector.broadcast %cst_212 : f32 to vector<16x5xf32>
    %679 = arith.mulf %678, %677 : vector<16x5xf32>
    %680 = math.tanh %679 : vector<16x5xf32>
    %cst_213 = arith.constant 5.000000e-01 : f32
    %681 = vector.broadcast %cst_213 : f32 to vector<16x5xf32>
    %682 = arith.mulf %681, %680 : vector<16x5xf32>
    %cst_214 = arith.constant 5.000000e-01 : f32
    %683 = vector.broadcast %cst_214 : f32 to vector<16x5xf32>
    %684 = arith.addf %682, %683 : vector<16x5xf32>
    %685 = vector.extract_strided_slice %673 {offsets = [0, 128], sizes = [16, 5], strides = [1, 1]} : vector<16x384xf32> to vector<16x5xf32>
    %686 = vector.extract_strided_slice %674 {offsets = [0, 128], sizes = [16, 5], strides = [1, 1]} : vector<16x384xf32> to vector<16x5xf32>
    %687 = arith.addf %685, %686 : vector<16x5xf32>
    %cst_215 = arith.constant 5.000000e-01 : f32
    %688 = vector.broadcast %cst_215 : f32 to vector<16x5xf32>
    %689 = arith.mulf %688, %687 : vector<16x5xf32>
    %690 = math.tanh %689 : vector<16x5xf32>
    %cst_216 = arith.constant 5.000000e-01 : f32
    %691 = vector.broadcast %cst_216 : f32 to vector<16x5xf32>
    %692 = arith.mulf %691, %690 : vector<16x5xf32>
    %cst_217 = arith.constant 5.000000e-01 : f32
    %693 = vector.broadcast %cst_217 : f32 to vector<16x5xf32>
    %694 = arith.addf %692, %693 : vector<16x5xf32>
    %695 = vector.extract_strided_slice %673 {offsets = [0, 256], sizes = [16, 5], strides = [1, 1]} : vector<16x384xf32> to vector<16x5xf32>
    %696 = vector.extract_strided_slice %674 {offsets = [0, 256], sizes = [16, 5], strides = [1, 1]} : vector<16x384xf32> to vector<16x5xf32>
    %697 = vector.broadcast %58 : vector<1x5xf32> to vector<16x5xf32>
    %698 = arith.addf %696, %697 : vector<16x5xf32>
    %699 = arith.mulf %684, %698 : vector<16x5xf32>
    %700 = arith.addf %695, %699 : vector<16x5xf32>
    %701 = math.tanh %700 : vector<16x5xf32>
    %cst_218 = arith.constant 1.000000e+00 : f32
    %702 = vector.broadcast %cst_218 : f32 to vector<16x5xf32>
    %703 = arith.subf %702, %694 : vector<16x5xf32>
    %704 = arith.mulf %703, %701 : vector<16x5xf32>
    %705 = arith.mulf %694, %672 : vector<16x5xf32>
    %706 = arith.addf %704, %705 : vector<16x5xf32>
    %c80_219 = arith.constant 80 : index
    %c0_220 = arith.constant 0 : index
    %707 = vector.load %arg7[%c80_219, %c0_220] : memref<96x384xf32, #tpu.memory_space<vmem>>, vector<16x384xf32>
    %cst_221 = arith.constant dense<0.000000e+00> : vector<16x384xf32>
    %708 = tpu.matmul %706, %57, %cst_221 {dimension_numbers = #tpu.dot_dimension_numbers<[1], [0], [0], [1], [0, 0, 1, 1], [], []>} : vector<16x5xf32>, vector<5x384xf32>, vector<16x384xf32> -> vector<16x384xf32>
    %709 = vector.extract_strided_slice %707 {offsets = [0, 0], sizes = [16, 5], strides = [1, 1]} : vector<16x384xf32> to vector<16x5xf32>
    %710 = vector.extract_strided_slice %708 {offsets = [0, 0], sizes = [16, 5], strides = [1, 1]} : vector<16x384xf32> to vector<16x5xf32>
    %711 = arith.addf %709, %710 : vector<16x5xf32>
    %cst_222 = arith.constant 5.000000e-01 : f32
    %712 = vector.broadcast %cst_222 : f32 to vector<16x5xf32>
    %713 = arith.mulf %712, %711 : vector<16x5xf32>
    %714 = math.tanh %713 : vector<16x5xf32>
    %cst_223 = arith.constant 5.000000e-01 : f32
    %715 = vector.broadcast %cst_223 : f32 to vector<16x5xf32>
    %716 = arith.mulf %715, %714 : vector<16x5xf32>
    %cst_224 = arith.constant 5.000000e-01 : f32
    %717 = vector.broadcast %cst_224 : f32 to vector<16x5xf32>
    %718 = arith.addf %716, %717 : vector<16x5xf32>
    %719 = vector.extract_strided_slice %707 {offsets = [0, 128], sizes = [16, 5], strides = [1, 1]} : vector<16x384xf32> to vector<16x5xf32>
    %720 = vector.extract_strided_slice %708 {offsets = [0, 128], sizes = [16, 5], strides = [1, 1]} : vector<16x384xf32> to vector<16x5xf32>
    %721 = arith.addf %719, %720 : vector<16x5xf32>
    %cst_225 = arith.constant 5.000000e-01 : f32
    %722 = vector.broadcast %cst_225 : f32 to vector<16x5xf32>
    %723 = arith.mulf %722, %721 : vector<16x5xf32>
    %724 = math.tanh %723 : vector<16x5xf32>
    %cst_226 = arith.constant 5.000000e-01 : f32
    %725 = vector.broadcast %cst_226 : f32 to vector<16x5xf32>
    %726 = arith.mulf %725, %724 : vector<16x5xf32>
    %cst_227 = arith.constant 5.000000e-01 : f32
    %727 = vector.broadcast %cst_227 : f32 to vector<16x5xf32>
    %728 = arith.addf %726, %727 : vector<16x5xf32>
    %729 = vector.extract_strided_slice %707 {offsets = [0, 256], sizes = [16, 5], strides = [1, 1]} : vector<16x384xf32> to vector<16x5xf32>
    %730 = vector.extract_strided_slice %708 {offsets = [0, 256], sizes = [16, 5], strides = [1, 1]} : vector<16x384xf32> to vector<16x5xf32>
    %731 = vector.broadcast %58 : vector<1x5xf32> to vector<16x5xf32>
    %732 = arith.addf %730, %731 : vector<16x5xf32>
    %733 = arith.mulf %718, %732 : vector<16x5xf32>
    %734 = arith.addf %729, %733 : vector<16x5xf32>
    %735 = math.tanh %734 : vector<16x5xf32>
    %cst_228 = arith.constant 1.000000e+00 : f32
    %736 = vector.broadcast %cst_228 : f32 to vector<16x5xf32>
    %737 = arith.subf %736, %728 : vector<16x5xf32>
    %738 = arith.mulf %737, %735 : vector<16x5xf32>
    %739 = arith.mulf %728, %706 : vector<16x5xf32>
    %740 = arith.addf %738, %739 : vector<16x5xf32>
    %741 = vector.extract_strided_slice %740 {offsets = [0, 0], sizes = [8, 5], strides = [1, 1]} : vector<16x5xf32> to vector<8x5xf32>
    %742 = vector.extract_strided_slice %740 {offsets = [8, 0], sizes = [8, 5], strides = [1, 1]} : vector<16x5xf32> to vector<8x5xf32>
    %743 = tpu.concatenate %535, %741, %742 in 1 : vector<8x10xf32>, vector<8x5xf32>, vector<8x5xf32> -> vector<8x20xf32>
    %c96_229 = arith.constant 96 : index
    %c0_230 = arith.constant 0 : index
    %744 = vector.load %arg3[%c96_229, %c0_230] : memref<128x384xf32, #tpu.memory_space<vmem>>, vector<20x4xf32>
    %c120 = arith.constant 120 : index
    %c0_231 = arith.constant 0 : index
    %745 = vector.load %arg3[%c120, %c0_231] : memref<128x384xf32, #tpu.memory_space<vmem>>, vector<1x4xf32>
    %cst_232 = arith.constant dense<0.000000e+00> : vector<8x4xf32>
    %746 = tpu.matmul %743, %744, %cst_232 {dimension_numbers = #tpu.dot_dimension_numbers<[1], [0], [0], [1], [0, 0, 1, 1], [], []>} : vector<8x20xf32>, vector<20x4xf32>, vector<8x4xf32> -> vector<8x4xf32>
    %747 = vector.broadcast %745 : vector<1x4xf32> to vector<8x4xf32>
    %748 = arith.addf %746, %747 : vector<8x4xf32>
    %cst_233 = arith.constant 0.000000e+00 : f32
    %749 = vector.broadcast %cst_233 : f32 to vector<8x4xf32>
    %c0_234 = arith.constant 0 : index
    %c0_235 = arith.constant 0 : index
    %750 = memref.load %arg4[%c0_234, %c0_235] : memref<1x8xf32, #tpu.memory_space<smem>>
    %751 = vector.extract_strided_slice %27 {offsets = [12, 0, 0], sizes = [1, 8, 4], strides = [1, 1, 1]} : vector<16x8x4xf32> to vector<1x8x4xf32>
    %752 = vector.shape_cast %751 : vector<1x8x4xf32> to vector<8x4xf32>
    %753 = vector.broadcast %750 : f32 to vector<8x4xf32>
    %754 = arith.mulf %753, %752 : vector<8x4xf32>
    %755 = arith.addf %749, %754 : vector<8x4xf32>
    %c0_236 = arith.constant 0 : index
    %c1 = arith.constant 1 : index
    %756 = memref.load %arg4[%c0_236, %c1] : memref<1x8xf32, #tpu.memory_space<smem>>
    %757 = vector.extract_strided_slice %27 {offsets = [13, 0, 0], sizes = [1, 8, 4], strides = [1, 1, 1]} : vector<16x8x4xf32> to vector<1x8x4xf32>
    %758 = vector.shape_cast %757 : vector<1x8x4xf32> to vector<8x4xf32>
    %759 = vector.broadcast %756 : f32 to vector<8x4xf32>
    %760 = arith.mulf %759, %758 : vector<8x4xf32>
    %761 = arith.addf %755, %760 : vector<8x4xf32>
    %c0_237 = arith.constant 0 : index
    %c2 = arith.constant 2 : index
    %762 = memref.load %arg4[%c0_237, %c2] : memref<1x8xf32, #tpu.memory_space<smem>>
    %763 = vector.extract_strided_slice %27 {offsets = [14, 0, 0], sizes = [1, 8, 4], strides = [1, 1, 1]} : vector<16x8x4xf32> to vector<1x8x4xf32>
    %764 = vector.shape_cast %763 : vector<1x8x4xf32> to vector<8x4xf32>
    %765 = vector.broadcast %762 : f32 to vector<8x4xf32>
    %766 = arith.mulf %765, %764 : vector<8x4xf32>
    %767 = arith.addf %761, %766 : vector<8x4xf32>
    %c0_238 = arith.constant 0 : index
    %c3 = arith.constant 3 : index
    %768 = memref.load %arg4[%c0_238, %c3] : memref<1x8xf32, #tpu.memory_space<smem>>
    %769 = vector.extract_strided_slice %27 {offsets = [15, 0, 0], sizes = [1, 8, 4], strides = [1, 1, 1]} : vector<16x8x4xf32> to vector<1x8x4xf32>
    %770 = vector.shape_cast %769 : vector<1x8x4xf32> to vector<8x4xf32>
    %771 = vector.broadcast %768 : f32 to vector<8x4xf32>
    %772 = arith.mulf %771, %770 : vector<8x4xf32>
    %773 = arith.addf %767, %772 : vector<8x4xf32>
    %c0_239 = arith.constant 0 : index
    %c4 = arith.constant 4 : index
    %774 = memref.load %arg4[%c0_239, %c4] : memref<1x8xf32, #tpu.memory_space<smem>>
    %775 = vector.broadcast %774 : f32 to vector<8x4xf32>
    %776 = arith.addf %773, %775 : vector<8x4xf32>
    %777 = arith.addf %748, %776 : vector<8x4xf32>
    %778 = arith.mulf %777, %22 : vector<8x4xf32>
    %c0_240 = arith.constant 0 : index
    %c0_241 = arith.constant 0 : index
    %779 = vector.load %arg2[%c0_240, %c0_241] : memref<8x4xf32, #tpu.memory_space<vmem>>, vector<8x4xf32>
    %780 = arith.subf %778, %779 : vector<8x4xf32>
    %781 = math.absf %780 : vector<8x4xf32>
    %782 = vector.shape_cast %781 : vector<8x4xf32> to vector<1x8x4xf32>
    %cst_242 = arith.constant dense<0.000000e+00> : vector<1xf32>
    %783 = vector.multi_reduction <add>, %782, %cst_242 [1, 2] : vector<1x8x4xf32> to vector<1xf32>
    %784 = vector.shape_cast %783 : vector<1xf32> to vector<1x1x1xf32>
    %785 = vector.extract %784[0, 0, 0] : f32 from vector<1x1x1xf32>
    %cst_243 = arith.constant 3.200000e+01 : f32
    %786 = arith.divf %785, %cst_243 : f32
    %c0_244 = arith.constant 0 : index
    %c0_245 = arith.constant 0 : index
    %787 = memref.load %arg5[%c0_244, %c0_245] : memref<1x1xf32, #tpu.memory_space<smem>>
    memref.store %786, %arg5[%c0_244, %c0_245] : memref<1x1xf32, #tpu.memory_space<smem>>
    return
  }
}

</mosaic_0001>

<llo_original>
// kernel: lstnet_train_loss.1
$region0: #{lstnet_train_loss.1}
  #allocation0 [shape = 'u32[]', space=smem, size = 0x4, offset = 0x4, fixed_abs, tag = 'smem constant byte address 0x4 - core index']
  #allocation1 [shape = 'u32[72,128]{1,0:T(1,128)}', space=vmem, size = 0x9000, scoped, tag = 'internal scratch']
  #allocation2 [shape = 'f32[112,384]{1,0:T(8,128)}', space=vmem, size = 0x2a000, scoped, tag = 'scratch operand']
  #allocation3 [shape = 'f32[96,384]{1,0:T(8,128)}', space=vmem, size = 0x24000, scoped, tag = 'scratch operand']
  %s0 = inlined_call_operand.vmem [shape: f32[16,8,4], index: 0, kind: input, shape index: {}]
  %s1 = inlined_call_operand.vmem [shape: f32[16,8,4], index: 1, kind: input, shape index: {}]
  %s2 = inlined_call_operand.vmem [shape: f32[8,4], index: 2, kind: input, shape index: {}]
  %s3 = inlined_call_operand.vmem [shape: f32[128,384], index: 3, kind: input, shape index: {}]
  %s4 = inlined_call_operand.vmem [shape: f32[1,8], index: 4, kind: input, shape index: {}]
  %s5 = inlined_call_operand.hbm [shape: f32[1,1], index: 5, kind: output, shape index: {}]
  %s6 = sld [smem:[#allocation0]]
  $region34: #{lstnet_train_loss.1} parent=0
    _
  %s8 = ssub.s32 1, %s6
  %s9 = scalar_select 0, %s8, %s6
  $region1: #{lstnet_train_loss.1} parent=0
    #allocation4 [shape = 'u8[512]{0}', space=smem, size = 0x200, scoped, tag = 'input window, operand 4, single buffered']
    #allocation5 [shape = 's32[1]{0}', space=sflag, size = 0x4, scoped, tag = 'scoped memory for lstnet_train_loss.1']
    #allocation6 [shape = 's32[1]{0}', space=sflag, size = 0x4, scoped, tag = 'scoped memory for lstnet_train_loss.1']
    #allocation7 [shape = 'u8[512]{0}', space=smem, size = 0x200, scoped, tag = 'output window, operand 0, single buffered']
    %10 = vsyncpa [#allocation6], 0
    %11 = vsyncpa [#allocation5], 0
    // Predicated region
    $region2: #{lstnet_train_loss.1} parent=1 // pred_check
      _
    $region3: #{lstnet_train_loss.1} parent=1 // pred_check_branch
      %13 = sbr.rel (0) target = $region5
    $region4: #{lstnet_train_loss.1} parent=1 // pred_region
      _
    $region5: #{lstnet_train_loss.1} parent=1 // pred_fallthru
      _
    // Predicated region
    $region6: #{lstnet_train_loss.1} parent=1 // pred_check
      _
    $region7: #{lstnet_train_loss.1} parent=1 // pred_check_branch
      %15 = sbr.rel (0) target = $region9
    $region8: #{lstnet_train_loss.1} parent=1 // pred_region
      _
    $region9: #{lstnet_train_loss.1} parent=1 // pred_fallthru
      _
    // Predicated region
    $region10: #{lstnet_train_loss.1} parent=1 // pred_check
      _
    $region11: #{lstnet_train_loss.1} parent=1 // pred_check_branch
      %17 = sbr.rel (0) target = $region13
    $region12: #{lstnet_train_loss.1} parent=1 // pred_region
      _
    $region13: #{lstnet_train_loss.1} parent=1 // pred_fallthru
      _
    // Predicated region
    $region14: #{lstnet_train_loss.1} parent=1 // pred_check
      _
    $region15: #{lstnet_train_loss.1} parent=1 // pred_check_branch
      %19 = sbr.rel (0) target = $region17
    $region16: #{lstnet_train_loss.1} parent=1 // pred_region
      _
    $region17: #{lstnet_train_loss.1} parent=1 // pred_fallthru
      _
    // Predicated region
    $region18: #{lstnet_train_loss.1} parent=1 // pred_check
      _
    $region19: #{lstnet_train_loss.1} parent=1 // pred_check_branch
      %21 = sbr.rel (0) target = $region21
    $region20: #{lstnet_train_loss.1} parent=1 // pred_region
      %23 = vsyncadd [#allocation6], 0
      %s25 = sshll.u32 %s4, 4
      %s26 = int_to_ptr.vmem [resolvable:$true] %s25
      %28 = dma.vmem_to_smem %s26, 16, [#allocation4], [#allocation6]
    $region21: #{lstnet_train_loss.1} parent=1 // pred_fallthru
      _
    // Predicated region
    $region22: #{lstnet_train_loss.1} parent=1 // pred_check
      _
    $region23: #{lstnet_train_loss.1} parent=1 // pred_check_branch
      %30 = sbr.rel (0) target = $region25
    $region24: #{lstnet_train_loss.1} parent=1 // pred_region
      %32 = dma.done [#allocation6], 16
    $region25: #{lstnet_train_loss.1} parent=1 // pred_fallthru
      _
    %33 = sfence
    %v34 = vld [vmem:[%s0] sm:$0xff]
    %v35 = vld [vmem:[%s0 + $0x8] sm:$0xff]
    %v36 = vld [vmem:[%s0 + $0x10] sm:$0xff]
    %v37 = vld [vmem:[%s0 + $0x18] sm:$0xff]
    %v38 = vld [vmem:[%s0 + $0x20] sm:$0xff]
    %v39 = vld [vmem:[%s0 + $0x28] sm:$0xff]
    %v40 = vld [vmem:[%s0 + $0x30] sm:$0xff]
    %v41 = vld [vmem:[%s0 + $0x38] sm:$0xff]
    %v42 = vld [vmem:[%s0 + $0x40] sm:$0xff]
    %v43 = vld [vmem:[%s0 + $0x48] sm:$0xff]
    %v44 = vld [vmem:[%s0 + $0x50] sm:$0xff]
    %v45 = vld [vmem:[%s0 + $0x58] sm:$0xff]
    %v46 = vld [vmem:[%s0 + $0x60] sm:$0xff]
    %v47 = vld [vmem:[%s0 + $0x68] sm:$0xff]
    %v48 = vld [vmem:[%s0 + $0x70] sm:$0xff]
    %v49 = vld [vmem:[%s0 + $0x78] sm:$0xff]
    %v50 = vld [vmem:[%s1] sm:$0xff]
    %v51 = vld [vmem:[%s1 + $0x8] sm:$0xff]
    %v52 = vld [vmem:[%s1 + $0x10] sm:$0xff]
    %v53 = vld [vmem:[%s1 + $0x18] sm:$0xff]
    %v54 = vld [vmem:[%s1 + $0x20] sm:$0xff]
    %v55 = vld [vmem:[%s1 + $0x28] sm:$0xff]
    %v56 = vld [vmem:[%s1 + $0x30] sm:$0xff]
    %v57 = vld [vmem:[%s1 + $0x38] sm:$0xff]
    %v58 = vld [vmem:[%s1 + $0x40] sm:$0xff]
    %v59 = vld [vmem:[%s1 + $0x48] sm:$0xff]
    %v60 = vld [vmem:[%s1 + $0x50] sm:$0xff]
    %v61 = vld [vmem:[%s1 + $0x58] sm:$0xff]
    %v62 = vld [vmem:[%s1 + $0x60] sm:$0xff]
    %v63 = vld [vmem:[%s1 + $0x68] sm:$0xff]
    %v64 = vld [vmem:[%s1 + $0x70] sm:$0xff]
    %v65 = vld [vmem:[%s1 + $0x78] sm:$0xff]
    %vm66 = vcmask 31744
    %v67 = vsel %vm66, %v50, 0.0
    %v68 = vsel %vm66, %v51, 0.0
    %v69 = vadd.f32 %v67, %v68
    %v70 = vsel %vm66, %v52, 0.0
    %v71 = vadd.f32 %v69, %v70
    %v72 = vsel %vm66, %v53, 0.0
    %v73 = vadd.f32 %v71, %v72
    %v74 = vsel %vm66, %v54, 0.0
    %v75 = vadd.f32 %v73, %v74
    %v76 = vsel %vm66, %v55, 0.0
    %v77 = vadd.f32 %v75, %v76
    %v78 = vsel %vm66, %v56, 0.0
    %v79 = vadd.f32 %v77, %v78
    %v80 = vsel %vm66, %v57, 0.0
    %v81 = vadd.f32 %v79, %v80
    %v82 = vsel %vm66, %v58, 0.0
    %v83 = vadd.f32 %v81, %v82
    %v84 = vsel %vm66, %v59, 0.0
    %v85 = vadd.f32 %v83, %v84
    %v86 = vsel %vm66, %v60, 0.0
    %v87 = vadd.f32 %v85, %v86
    %v88 = vsel %vm66, %v61, 0.0
    %v89 = vadd.f32 %v87, %v88
    %v90 = vsel %vm66, %v62, 0.0
    %v91 = vadd.f32 %v89, %v90
    %v92 = vsel %vm66, %v63, 0.0
    %v93 = vadd.f32 %v91, %v92
    %v94 = vsel %vm66, %v64, 0.0
    %v95 = vadd.f32 %v93, %v94
    %v96 = vsel %vm66, %v65, 0.0
    %v97 = vadd.f32 %v95, %v96
    %v98 = vand.u32 2147483647, %v34
    %v99 = vand.u32 2147483647, %v35
    %v100 = vand.u32 2147483647, %v36
    %v101 = vand.u32 2147483647, %v37
    %v102 = vand.u32 2147483647, %v38
    %v103 = vand.u32 2147483647, %v39
    %v104 = vand.u32 2147483647, %v40
    %v105 = vand.u32 2147483647, %v41
    %v106 = vand.u32 2147483647, %v42
    %v107 = vand.u32 2147483647, %v43
    %v108 = vand.u32 2147483647, %v44
    %v109 = vand.u32 2147483647, %v45
    %v110 = vand.u32 2147483647, %v46
    %v111 = vand.u32 2147483647, %v47
    %v112 = vand.u32 2147483647, %v48
    %v113 = vand.u32 2147483647, %v49
    %v114 = vmul.f32 %v98, %v50
    %v115 = vmul.f32 %v99, %v51
    %v116 = vmul.f32 %v100, %v52
    %v117 = vmul.f32 %v101, %v53
    %v118 = vmul.f32 %v102, %v54
    %v119 = vmul.f32 %v103, %v55
    %v120 = vmul.f32 %v104, %v56
    %v121 = vmul.f32 %v105, %v57
    %v122 = vmul.f32 %v106, %v58
    %v123 = vmul.f32 %v107, %v59
    %v124 = vmul.f32 %v108, %v60
    %v125 = vmul.f32 %v109, %v61
    %v126 = vmul.f32 %v110, %v62
    %v127 = vmul.f32 %v111, %v63
    %v128 = vmul.f32 %v112, %v64
    %v129 = vmul.f32 %v113, %v65
    %v130 = vsel %vm66, %v114, 0.0
    %v131 = vsel %vm66, %v115, 0.0
    %v132 = vadd.f32 %v130, %v131
    %v133 = vsel %vm66, %v116, 0.0
    %v134 = vadd.f32 %v132, %v133
    %v135 = vsel %vm66, %v117, 0.0
    %v136 = vadd.f32 %v134, %v135
    %v137 = vsel %vm66, %v118, 0.0
    %v138 = vadd.f32 %v136, %v137
    %v139 = vsel %vm66, %v119, 0.0
    %v140 = vadd.f32 %v138, %v139
    %v141 = vsel %vm66, %v120, 0.0
    %v142 = vadd.f32 %v140, %v141
    %v143 = vsel %vm66, %v121, 0.0
    %v144 = vadd.f32 %v142, %v143
    %v145 = vsel %vm66, %v122, 0.0
    %v146 = vadd.f32 %v144, %v145
    %v147 = vsel %vm66, %v123, 0.0
    %v148 = vadd.f32 %v146, %v147
    %v149 = vsel %vm66, %v124, 0.0
    %v150 = vadd.f32 %v148, %v149
    %v151 = vsel %vm66, %v125, 0.0
    %v152 = vadd.f32 %v150, %v151
    %v153 = vsel %vm66, %v126, 0.0
    %v154 = vadd.f32 %v152, %v153
    %v155 = vsel %vm66, %v127, 0.0
    %v156 = vadd.f32 %v154, %v155
    %v157 = vsel %vm66, %v128, 0.0
    %v158 = vadd.f32 %v156, %v157
    %v159 = vsel %vm66, %v129, 0.0
    %v160 = vadd.f32 %v158, %v159
    %v161 = vsel %vm66, %v97, 0.0
    %v162 = vrot.slane %v161, 4
    %v163 = vadd.f32 %v161, %v162
    %v164 = vrot.slane %v163, 2
    %v165 = vadd.f32 %v163, %v164
    %v166 = vrot.slane %v165, 1
    %v167 = vadd.f32 %v165, %v166
    %v168 = vsel %vm66, %v160, 0.0
    %v169 = vrot.slane %v168, 4
    %v170 = vadd.f32 %v168, %v169
    %v171 = vrot.slane %v170, 2
    %v172 = vadd.f32 %v170, %v171
    %v173 = vrot.slane %v172, 1
    %v174 = vadd.f32 %v172, %v173
    %v175 = vmax.f32 %v167, 1.0
    %v176 = vrcp.pop %v175
    %v177 = vmul.f32 %v175, %v176
    %v178 = vsub.f32 1.0, %v177
    %v179 = vmul.f32 %v176, %v178
    %v180 = vadd.f32 %v176, %v179
    %vm181 = vweird.f32 %v175
    %vm182 = vweird.f32 %v176
    %vm183 = vmor %vm181, %vm182
    %v184 = vsel %vm183, %v176, %v180
    %v185 = vand.u32 2147483647, %v175
    %vm186 = vcmp.eq.f32.partialorder %v185, 8.507059e+37
    %v187 = vand.u32 %v175, 2147483648
    %v188 = vor.u32 1.1754944e-38, %v187
    %v189 = vsel %vm186, %v188, %v184
    %v190 = vmul.f32 %v174, %v189
    %v191 = vmax.f32 %v97, 1.0
    %v192 = vrcp.pop %v191
    %v193 = vmul.f32 %v191, %v192
    %v194 = vsub.f32 1.0, %v193
    %v195 = vmul.f32 %v192, %v194
    %v196 = vadd.f32 %v192, %v195
    %vm197 = vweird.f32 %v191
    %vm198 = vweird.f32 %v192
    %vm199 = vmor %vm197, %vm198
    %v200 = vsel %vm199, %v192, %v196
    %v201 = vand.u32 2147483647, %v191
    %vm202 = vcmp.eq.f32.partialorder %v201, 8.507059e+37
    %v203 = vand.u32 %v191, 2147483648
    %v204 = vor.u32 1.1754944e-38, %v203
    %v205 = vsel %vm202, %v204, %v200
    %v206 = vmul.f32 %v160, %v205
    %vm207 = vcmp.gt.f32.partialorder %v160, 0.0
    %v208 = vsel %vm207, %v206, %v190
    %v209 = vmax.f32 %v208, 1e-10
    %v210 = vrcp.pop %v209
    %v211 = vmul.f32 %v209, %v210
    %v212 = vsub.f32 1.0, %v211
    %v213 = vmul.f32 %v210, %v212
    %v214 = vadd.f32 %v210, %v213
    %vm215 = vweird.f32 %v209
    %vm216 = vweird.f32 %v210
    %vm217 = vmor %vm215, %vm216
    %v218 = vsel %vm217, %v210, %v214
    %v219 = vand.u32 2147483647, %v209
    %vm220 = vcmp.eq.f32.partialorder %v219, 8.507059e+37
    %v221 = vand.u32 %v209, 2147483648
    %v222 = vor.u32 1.1754944e-38, %v221
    %v223 = vsel %vm220, %v222, %v218
    %v224 = vmul.f32 1.0, %v223
    %v225 = vmul.f32 %v34, %v224
    %v226 = vmul.f32 %v35, %v224
    %v227 = vmul.f32 %v36, %v224
    %v228 = vmul.f32 %v37, %v224
    %v229 = vmul.f32 %v38, %v224
    %v230 = vmul.f32 %v39, %v224
    %v231 = vmul.f32 %v40, %v224
    %v232 = vmul.f32 %v41, %v224
    %v233 = vmul.f32 %v42, %v224
    %v234 = vmul.f32 %v43, %v224
    %v235 = vmul.f32 %v44, %v224
    %v236 = vmul.f32 %v45, %v224
    %v237 = vmul.f32 %v46, %v224
    %v238 = vmul.f32 %v47, %v224
    %v239 = vmul.f32 %v48, %v224
    %v240 = vmul.f32 %v49, %v224
    %255 = vrot.lane.b32.xlu0 %v226, 4
    %v256 = vpop.permute.xlu0 %255
    %257 = vrot.lane.b32.xlu0 %v227, 4
    %v258 = vpop.permute.xlu0 %257
    %259 = vrot.lane.b32.xlu0 %v228, 4
    %v260 = vpop.permute.xlu0 %259
    %261 = vrot.lane.b32.xlu0 %v229, 4
    %v262 = vpop.permute.xlu0 %261
    %263 = vrot.lane.b32.xlu0 %v230, 4
    %v264 = vpop.permute.xlu0 %263
    %265 = vrot.lane.b32.xlu0 %v231, 4
    %v266 = vpop.permute.xlu0 %265
    %267 = vrot.lane.b32.xlu0 %v232, 4
    %v268 = vpop.permute.xlu0 %267
    %269 = vrot.lane.b32.xlu0 %v233, 4
    %v270 = vpop.permute.xlu0 %269
    %271 = vrot.lane.b32.xlu0 %v234, 4
    %v272 = vpop.permute.xlu0 %271
    %273 = vrot.lane.b32.xlu0 %v235, 4
    %v274 = vpop.permute.xlu0 %273
    %275 = vrot.lane.b32.xlu0 %v236, 4
    %v276 = vpop.permute.xlu0 %275
    %277 = vrot.lane.b32.xlu0 %v237, 4
    %v278 = vpop.permute.xlu0 %277
    %279 = vrot.lane.b32.xlu0 %v238, 4
    %v280 = vpop.permute.xlu0 %279
    %281 = vrot.lane.b32.xlu0 %v239, 4
    %v282 = vpop.permute.xlu0 %281
    %298 = vrot.lane.b32.xlu0 %v227, 8
    %v299 = vpop.permute.xlu0 %298
    %300 = vrot.lane.b32.xlu0 %v228, 8
    %v301 = vpop.permute.xlu0 %300
    %302 = vrot.lane.b32.xlu0 %v229, 8
    %v303 = vpop.permute.xlu0 %302
    %304 = vrot.lane.b32.xlu0 %v230, 8
    %v305 = vpop.permute.xlu0 %304
    %306 = vrot.lane.b32.xlu0 %v231, 8
    %v307 = vpop.permute.xlu0 %306
    %308 = vrot.lane.b32.xlu0 %v232, 8
    %v309 = vpop.permute.xlu0 %308
    %310 = vrot.lane.b32.xlu0 %v233, 8
    %v311 = vpop.permute.xlu0 %310
    %312 = vrot.lane.b32.xlu0 %v234, 8
    %v313 = vpop.permute.xlu0 %312
    %314 = vrot.lane.b32.xlu0 %v235, 8
    %v315 = vpop.permute.xlu0 %314
    %316 = vrot.lane.b32.xlu0 %v236, 8
    %v317 = vpop.permute.xlu0 %316
    %318 = vrot.lane.b32.xlu0 %v237, 8
    %v319 = vpop.permute.xlu0 %318
    %320 = vrot.lane.b32.xlu0 %v238, 8
    %v321 = vpop.permute.xlu0 %320
    %322 = vrot.lane.b32.xlu0 %v239, 8
    %v323 = vpop.permute.xlu0 %322
    %324 = vrot.lane.b32.xlu0 %v240, 8
    %v325 = vpop.permute.xlu0 %324
    %v340 = vsel %vm66, %v225, %v256
    %v341 = vsel %vm66, %v226, %v258
    %v342 = vsel %vm66, %v227, %v260
    %v343 = vsel %vm66, %v228, %v262
    %v344 = vsel %vm66, %v229, %v264
    %v345 = vsel %vm66, %v230, %v266
    %v346 = vsel %vm66, %v231, %v268
    %v347 = vsel %vm66, %v232, %v270
    %v348 = vsel %vm66, %v233, %v272
    %v349 = vsel %vm66, %v234, %v274
    %v350 = vsel %vm66, %v235, %v276
    %v351 = vsel %vm66, %v236, %v278
    %v352 = vsel %vm66, %v237, %v280
    %v353 = vsel %vm66, %v238, %v282
    %vm354 = vcmask 64512
    %v355 = vsel %vm354, %v340, %v299
    %v356 = vsel %vm354, %v341, %v301
    %v357 = vsel %vm354, %v342, %v303
    %v358 = vsel %vm354, %v343, %v305
    %v359 = vsel %vm354, %v344, %v307
    %v360 = vsel %vm354, %v345, %v309
    %v361 = vsel %vm354, %v346, %v311
    %v362 = vsel %vm354, %v347, %v313
    %v363 = vsel %vm354, %v348, %v315
    %v364 = vsel %vm354, %v349, %v317
    %v365 = vsel %vm354, %v350, %v319
    %v366 = vsel %vm354, %v351, %v321
    %v367 = vsel %vm354, %v352, %v323
    %v368 = vsel %vm354, %v353, %v325
    %v369 = vld [vmem:[%s3 + $0xd8] sm:$0xff]
    %v370 = vld [vmem:[%s3 + $0xf0] sm:$0xf]
    %v371 = vld [vmem:[%s3 + $0x108] ss:$0 sm:$0xff]
    %vm372 = vcmask 97280
    %v374 = vsel %vm372, %v355, 0
    %v377 = vsel %vm372, %v356, 0
    %v380 = vsel %vm372, %v357, 0
    %v383 = vsel %vm372, %v358, 0
    %v386 = vsel %vm372, %v359, 0
    %v389 = vsel %vm372, %v360, 0
    %v392 = vsel %vm372, %v361, 0
    %v395 = vsel %vm372, %v362, 0
    %v398 = vsel %vm372, %v363, 0
    %v401 = vsel %vm372, %v364, 0
    %v404 = vsel %vm372, %v365, 0
    %v407 = vsel %vm372, %v366, 0
    %v410 = vsel %vm372, %v367, 0
    %v413 = vsel %vm372, %v368, 0
    %vm415 = vcmask 1043456
    %v417 = vsel %vm415, %v370, 0
    %419 = vmatpush.msra.mxu0 0.0
    %420 = vmatpush.msra.mxu0 0.0
    %421 = vmatpush.msra.mxu0 0.0
    %422 = vmatpush.msra.mxu0 0.0
    %423 = vmatpush.msra.mxu0 0.0
    %424 = vmatpush.msra.mxu0 0.0
    %425 = vmatpush.msra.mxu0 0.0
    %426 = vmatpush.msra.mxu0 0.0
    %427 = vmatpush.msra.mxu0 0.0
    %428 = vmatpush.msra.mxu0 0.0
    %429 = vmatpush.msra.mxu0 0.0
    %430 = vmatpush.msra.mxu0 0.0
    %431 = vmatpush.msra.mxu0 0.0
    %432 = vmatpush.msra.mxu0 0.0
    %433 = vmatpush.msra.mxu0 %v417
    %434 = vmatpush.msra.mxu0 %v369
    %435 = vmatmul.f32.gmra.mxu0 %v374
    %v436 = vpop.f32.mrf.mxu0
    %v437 = vadd.f32 %v371, %v436
    %438 = vmatmul.f32.gmra.mxu0 %v377
    %v439 = vpop.f32.mrf.mxu0
    %v440 = vadd.f32 %v371, %v439
    %441 = vmatmul.f32.gmra.mxu0 %v380
    %v442 = vpop.f32.mrf.mxu0
    %v443 = vadd.f32 %v371, %v442
    %444 = vmatmul.f32.gmra.mxu0 %v383
    %v445 = vpop.f32.mrf.mxu0
    %v446 = vadd.f32 %v371, %v445
    %447 = vmatmul.f32.gmra.mxu0 %v386
    %v448 = vpop.f32.mrf.mxu0
    %v449 = vadd.f32 %v371, %v448
    %450 = vmatmul.f32.gmra.mxu0 %v389
    %v451 = vpop.f32.mrf.mxu0
    %v452 = vadd.f32 %v371, %v451
    %453 = vmatmul.f32.gmra.mxu0 %v392
    %v454 = vpop.f32.mrf.mxu0
    %v455 = vadd.f32 %v371, %v454
    %456 = vmatmul.f32.gmra.mxu0 %v395
    %v457 = vpop.f32.mrf.mxu0
    %v458 = vadd.f32 %v371, %v457
    %459 = vmatmul.f32.gmra.mxu0 %v398
    %v460 = vpop.f32.mrf.mxu0
    %v461 = vadd.f32 %v371, %v460
    %462 = vmatmul.f32.gmra.mxu0 %v401
    %v463 = vpop.f32.mrf.mxu0
    %v464 = vadd.f32 %v371, %v463
    %465 = vmatmul.f32.gmra.mxu0 %v404
    %v466 = vpop.f32.mrf.mxu0
    %v467 = vadd.f32 %v371, %v466
    %468 = vmatmul.f32.gmra.mxu0 %v407
    %v469 = vpop.f32.mrf.mxu0
    %v470 = vadd.f32 %v371, %v469
    %471 = vmatmul.f32.gmra.mxu0 %v410
    %v472 = vpop.f32.mrf.mxu0
    %v473 = vadd.f32 %v371, %v472
    %474 = vmatmul.f32.gmra.mxu0 %v413
    %v475 = vpop.f32.mrf.mxu0
    %v476 = vadd.f32 %v371, %v475
    %477 = vdwg.mxu0
    %v478 = vmax.f32 %v437, 0.0
    %v479 = vmax.f32 %v440, 0.0
    %v480 = vmax.f32 %v443, 0.0
    %v481 = vmax.f32 %v446, 0.0
    %v482 = vmax.f32 %v449, 0.0
    %v483 = vmax.f32 %v452, 0.0
    %v484 = vmax.f32 %v455, 0.0
    %v485 = vmax.f32 %v458, 0.0
    %v486 = vmax.f32 %v461, 0.0
    %v487 = vmax.f32 %v464, 0.0
    %v488 = vmax.f32 %v467, 0.0
    %v489 = vmax.f32 %v470, 0.0
    %v490 = vmax.f32 %v473, 0.0
    %v491 = vmax.f32 %v476, 0.0
    %v492 = vld [vmem:[%s3] sm:$0x3f]
    %v493 = vld [vmem:[%s3 + $0x8] sm:$0x3f]
    %v494 = vld [vmem:[%s3 + $0x10] sm:$0x3f]
    %s495 = scalar_lea.vmem %s3, 72
    %v496 = vld [vmem:[%s495] ss:$8 sm:$0x7]
    %v498 = vperm.slane %v496, 0
    %v499 = vperm.slane %v496, 1
    %v500 = vperm.slane %v496, 2
    %vm504 = vcmask 48128
    %v506 = vsel %vm504, %v478, 0
    %v509 = vsel %vm504, %v479, 0
    %v512 = vsel %vm504, %v480, 0
    %v515 = vsel %vm504, %v481, 0
    %v518 = vsel %vm504, %v482, 0
    %v521 = vsel %vm504, %v483, 0
    %v524 = vsel %vm504, %v484, 0
    %v527 = vsel %vm504, %v485, 0
    %v530 = vsel %vm504, %v486, 0
    %v533 = vsel %vm504, %v487, 0
    %v536 = vsel %vm504, %v488, 0
    %v539 = vsel %vm504, %v489, 0
    %v542 = vsel %vm504, %v490, 0
    %v545 = vsel %vm504, %v491, 0
    %vm547 = vcmask 1045504
    %v549 = vsel %vm547, %v492, 0
    %v552 = vsel %vm547, %v493, 0
    %v555 = vsel %vm547, %v494, 0
    %557 = vmatpush.msra.mxu0 0.0
    %558 = vmatpush.msra.mxu0 0.0
    %559 = vmatpush.msra.mxu0 0.0
    %560 = vmatpush.msra.mxu0 0.0
    %561 = vmatpush.msra.mxu0 0.0
    %562 = vmatpush.msra.mxu0 0.0
    %563 = vmatpush.msra.mxu0 0.0
    %564 = vmatpush.msra.mxu0 0.0
    %565 = vmatpush.msra.mxu0 0.0
    %566 = vmatpush.msra.mxu0 0.0
    %567 = vmatpush.msra.mxu0 0.0
    %568 = vmatpush.msra.mxu0 0.0
    %569 = vmatpush.msra.mxu0 0.0
    %570 = vmatpush.msra.mxu0 0.0
    %571 = vmatpush.msra.mxu0 0.0
    %572 = vmatpush.msra.mxu0 %v549
    %573 = vmatmul.f32.gmra.mxu0 %v506
    %v574 = vpop.f32.mrf.mxu0
    %v575 = vadd.f32 %v498, %v574
    %576 = vmatmul.f32.gmra.mxu0 %v509
    %v577 = vpop.f32.mrf.mxu0
    %v578 = vadd.f32 %v498, %v577
    %579 = vmatmul.f32.gmra.mxu0 %v512
    %v580 = vpop.f32.mrf.mxu0
    %v581 = vadd.f32 %v498, %v580
    %582 = vmatmul.f32.gmra.mxu0 %v515
    %v583 = vpop.f32.mrf.mxu0
    %v584 = vadd.f32 %v498, %v583
    %585 = vmatmul.f32.gmra.mxu0 %v518
    %v586 = vpop.f32.mrf.mxu0
    %v587 = vadd.f32 %v498, %v586
    %588 = vmatmul.f32.gmra.mxu0 %v521
    %v589 = vpop.f32.mrf.mxu0
    %v590 = vadd.f32 %v498, %v589
    %591 = vmatmul.f32.gmra.mxu0 %v524
    %v592 = vpop.f32.mrf.mxu0
    %v593 = vadd.f32 %v498, %v592
    %594 = vmatmul.f32.gmra.mxu0 %v527
    %v595 = vpop.f32.mrf.mxu0
    %v596 = vadd.f32 %v498, %v595
    %597 = vmatmul.f32.gmra.mxu0 %v530
    %v598 = vpop.f32.mrf.mxu0
    %v599 = vadd.f32 %v498, %v598
    %600 = vmatmul.f32.gmra.mxu0 %v533
    %v601 = vpop.f32.mrf.mxu0
    %v602 = vadd.f32 %v498, %v601
    %603 = vmatmul.f32.gmra.mxu0 %v536
    %v604 = vpop.f32.mrf.mxu0
    %v605 = vadd.f32 %v498, %v604
    %606 = vmatmul.f32.gmra.mxu0 %v539
    %v607 = vpop.f32.mrf.mxu0
    %v608 = vadd.f32 %v498, %v607
    %609 = vmatmul.f32.gmra.mxu0 %v542
    %v610 = vpop.f32.mrf.mxu0
    %v611 = vadd.f32 %v498, %v610
    %612 = vmatmul.f32.gmra.mxu0 %v545
    %v613 = vpop.f32.mrf.mxu0
    %v614 = vadd.f32 %v498, %v613
    %615 = vdwg.mxu0
    %616 = vmatpush.msra.mxu0 0.0
    %617 = vmatpush.msra.mxu0 0.0
    %618 = vmatpush.msra.mxu0 0.0
    %619 = vmatpush.msra.mxu0 0.0
    %620 = vmatpush.msra.mxu0 0.0
    %621 = vmatpush.msra.mxu0 0.0
    %622 = vmatpush.msra.mxu0 0.0
    %623 = vmatpush.msra.mxu0 0.0
    %624 = vmatpush.msra.mxu0 0.0
    %625 = vmatpush.msra.mxu0 0.0
    %626 = vmatpush.msra.mxu0 0.0
    %627 = vmatpush.msra.mxu0 0.0
    %628 = vmatpush.msra.mxu0 0.0
    %629 = vmatpush.msra.mxu0 0.0
    %630 = vmatpush.msra.mxu0 0.0
    %631 = vmatpush.msra.mxu0 %v552
    %632 = vmatmul.f32.gmra.mxu0 %v506
    %v633 = vpop.f32.mrf.mxu0
    %v634 = vadd.f32 %v499, %v633
    %635 = vmatmul.f32.gmra.mxu0 %v509
    %v636 = vpop.f32.mrf.mxu0
    %v637 = vadd.f32 %v499, %v636
    %638 = vmatmul.f32.gmra.mxu0 %v512
    %v639 = vpop.f32.mrf.mxu0
    %v640 = vadd.f32 %v499, %v639
    %641 = vmatmul.f32.gmra.mxu0 %v515
    %v642 = vpop.f32.mrf.mxu0
    %v643 = vadd.f32 %v499, %v642
    %644 = vmatmul.f32.gmra.mxu0 %v518
    %v645 = vpop.f32.mrf.mxu0
    %v646 = vadd.f32 %v499, %v645
    %647 = vmatmul.f32.gmra.mxu0 %v521
    %v648 = vpop.f32.mrf.mxu0
    %v649 = vadd.f32 %v499, %v648
    %650 = vmatmul.f32.gmra.mxu0 %v524
    %v651 = vpop.f32.mrf.mxu0
    %v652 = vadd.f32 %v499, %v651
    %653 = vmatmul.f32.gmra.mxu0 %v527
    %v654 = vpop.f32.mrf.mxu0
    %v655 = vadd.f32 %v499, %v654
    %656 = vmatmul.f32.gmra.mxu0 %v530
    %v657 = vpop.f32.mrf.mxu0
    %v658 = vadd.f32 %v499, %v657
    %659 = vmatmul.f32.gmra.mxu0 %v533
    %v660 = vpop.f32.mrf.mxu0
    %v661 = vadd.f32 %v499, %v660
    %662 = vmatmul.f32.gmra.mxu0 %v536
    %v663 = vpop.f32.mrf.mxu0
    %v664 = vadd.f32 %v499, %v663
    %665 = vmatmul.f32.gmra.mxu0 %v539
    %v666 = vpop.f32.mrf.mxu0
    %v667 = vadd.f32 %v499, %v666
    %668 = vmatmul.f32.gmra.mxu0 %v542
    %v669 = vpop.f32.mrf.mxu0
    %v670 = vadd.f32 %v499, %v669
    %671 = vmatmul.f32.gmra.mxu0 %v545
    %v672 = vpop.f32.mrf.mxu0
    %v673 = vadd.f32 %v499, %v672
    %674 = vdwg.mxu0
    %675 = vmatpush.msra.mxu0 0.0
    %676 = vmatpush.msra.mxu0 0.0
    %677 = vmatpush.msra.mxu0 0.0
    %678 = vmatpush.msra.mxu0 0.0
    %679 = vmatpush.msra.mxu0 0.0
    %680 = vmatpush.msra.mxu0 0.0
    %681 = vmatpush.msra.mxu0 0.0
    %682 = vmatpush.msra.mxu0 0.0
    %683 = vmatpush.msra.mxu0 0.0
    %684 = vmatpush.msra.mxu0 0.0
    %685 = vmatpush.msra.mxu0 0.0
    %686 = vmatpush.msra.mxu0 0.0
    %687 = vmatpush.msra.mxu0 0.0
    %688 = vmatpush.msra.mxu0 0.0
    %689 = vmatpush.msra.mxu0 0.0
    %690 = vmatpush.msra.mxu0 %v555
    %691 = vmatmul.f32.gmra.mxu0 %v506
    %v692 = vpop.f32.mrf.mxu0
    %v693 = vadd.f32 %v500, %v692
    %694 = vmatmul.f32.gmra.mxu0 %v509
    %v695 = vpop.f32.mrf.mxu0
    %v696 = vadd.f32 %v500, %v695
    %697 = vmatmul.f32.gmra.mxu0 %v512
    %v698 = vpop.f32.mrf.mxu0
    %v699 = vadd.f32 %v500, %v698
    %700 = vmatmul.f32.gmra.mxu0 %v515
    %v701 = vpop.f32.mrf.mxu0
    %v702 = vadd.f32 %v500, %v701
    %703 = vmatmul.f32.gmra.mxu0 %v518
    %v704 = vpop.f32.mrf.mxu0
    %v705 = vadd.f32 %v500, %v704
    %706 = vmatmul.f32.gmra.mxu0 %v521
    %v707 = vpop.f32.mrf.mxu0
    %v708 = vadd.f32 %v500, %v707
    %709 = vmatmul.f32.gmra.mxu0 %v524
    %v710 = vpop.f32.mrf.mxu0
    %v711 = vadd.f32 %v500, %v710
    %712 = vmatmul.f32.gmra.mxu0 %v527
    %v713 = vpop.f32.mrf.mxu0
    %v714 = vadd.f32 %v500, %v713
    %715 = vmatmul.f32.gmra.mxu0 %v530
    %v716 = vpop.f32.mrf.mxu0
    %v717 = vadd.f32 %v500, %v716
    %718 = vmatmul.f32.gmra.mxu0 %v533
    %v719 = vpop.f32.mrf.mxu0
    %v720 = vadd.f32 %v500, %v719
    %721 = vmatmul.f32.gmra.mxu0 %v536
    %v722 = vpop.f32.mrf.mxu0
    %v723 = vadd.f32 %v500, %v722
    %724 = vmatmul.f32.gmra.mxu0 %v539
    %v725 = vpop.f32.mrf.mxu0
    %v726 = vadd.f32 %v500, %v725
    %727 = vmatmul.f32.gmra.mxu0 %v542
    %v728 = vpop.f32.mrf.mxu0
    %v729 = vadd.f32 %v500, %v728
    %730 = vmatmul.f32.gmra.mxu0 %v545
    %v731 = vpop.f32.mrf.mxu0
    %v732 = vadd.f32 %v500, %v731
    %733 = vdwg.mxu0
    %734 = vst [vmem:[#allocation2] sm:$0xff] %v575
    %735 = vst [vmem:[#allocation2 + $0x8] sm:$0xff] %v634
    %736 = vst [vmem:[#allocation2 + $0x10] sm:$0xff] %v693
    %737 = vst [vmem:[#allocation2 + $0x18] sm:$0xff] %v578
    %738 = vst [vmem:[#allocation2 + $0x20] sm:$0xff] %v637
    %739 = vst [vmem:[#allocation2 + $0x28] sm:$0xff] %v696
    %740 = vst [vmem:[#allocation2 + $0x30] sm:$0xff] %v581
    %741 = vst [vmem:[#allocation2 + $0x38] sm:$0xff] %v640
    %742 = vst [vmem:[#allocation2 + $0x40] sm:$0xff] %v699
    %743 = vst [vmem:[#allocation2 + $0x48] sm:$0xff] %v584
    %744 = vst [vmem:[#allocation2 + $0x50] sm:$0xff] %v643
    %745 = vst [vmem:[#allocation2 + $0x58] sm:$0xff] %v702
    %746 = vst [vmem:[#allocation2 + $0x60] sm:$0xff] %v587
    %747 = vst [vmem:[#allocation2 + $0x68] sm:$0xff] %v646
    %748 = vst [vmem:[#allocation2 + $0x70] sm:$0xff] %v705
    %749 = vst [vmem:[#allocation2 + $0x78] sm:$0xff] %v590
    %750 = vst [vmem:[#allocation2 + $0x80] sm:$0xff] %v649
    %751 = vst [vmem:[#allocation2 + $0x88] sm:$0xff] %v708
    %752 = vst [vmem:[#allocation2 + $0x90] sm:$0xff] %v593
    %753 = vst [vmem:[#allocation2 + $0x98] sm:$0xff] %v652
    %754 = vst [vmem:[#allocation2 + $0xa0] sm:$0xff] %v711
    %755 = vst [vmem:[#allocation2 + $0xa8] sm:$0xff] %v596
    %756 = vst [vmem:[#allocation2 + $0xb0] sm:$0xff] %v655
    %757 = vst [vmem:[#allocation2 + $0xb8] sm:$0xff] %v714
    %758 = vst [vmem:[#allocation2 + $0xc0] sm:$0xff] %v599
    %759 = vst [vmem:[#allocation2 + $0xc8] sm:$0xff] %v658
    %760 = vst [vmem:[#allocation2 + $0xd0] sm:$0xff] %v717
    %761 = vst [vmem:[#allocation2 + $0xd8] sm:$0xff] %v602
    %762 = vst [vmem:[#allocation2 + $0xe0] sm:$0xff] %v661
    %763 = vst [vmem:[#allocation2 + $0xe8] sm:$0xff] %v720
    %764 = vst [vmem:[#allocation2 + $0xf0] sm:$0xff] %v605
    %765 = vst [vmem:[#allocation2 + $0xf8] sm:$0xff] %v664
    %766 = vst [vmem:[#allocation2 + $0x100] sm:$0xff] %v723
    %767 = vst [vmem:[#allocation2 + $0x108] sm:$0xff] %v608
    %768 = vst [vmem:[#allocation2 + $0x110] sm:$0xff] %v667
    %769 = vst [vmem:[#allocation2 + $0x118] sm:$0xff] %v726
    %770 = vst [vmem:[#allocation2 + $0x120] sm:$0xff] %v611
    %771 = vst [vmem:[#allocation2 + $0x128] sm:$0xff] %v670
    %772 = vst [vmem:[#allocation2 + $0x130] sm:$0xff] %v729
    %773 = vst [vmem:[#allocation2 + $0x138] sm:$0xff] %v614
    %774 = vst [vmem:[#allocation2 + $0x140] sm:$0xff] %v673
    %775 = vst [vmem:[#allocation2 + $0x148] sm:$0xff] %v732
    %v776 = vld [vmem:[%s3 + $0x78] sm:$0x3f]
    %v777 = vld [vmem:[%s3 + $0x80] sm:$0x3f]
    %v778 = vld [vmem:[%s3 + $0x88] sm:$0x3f]
    %s779 = scalar_lea.vmem %s3, 168
    %v780 = vld [vmem:[%s779] ss:$8 sm:$0x7]
    %v782 = vperm.slane %v780, 0
    %v783 = vperm.slane %v780, 1
    %v784 = vperm.slane %v780, 2
    %v789 = vsel %vm547, %v776, 0
    %v792 = vsel %vm547, %v777, 0
    %v795 = vsel %vm547, %v778, 0
    %797 = vmatpush.msra.mxu0 0.0
    %798 = vmatpush.msra.mxu0 0.0
    %799 = vmatpush.msra.mxu0 0.0
    %800 = vmatpush.msra.mxu0 0.0
    %801 = vmatpush.msra.mxu0 0.0
    %802 = vmatpush.msra.mxu0 0.0
    %803 = vmatpush.msra.mxu0 0.0
    %804 = vmatpush.msra.mxu0 0.0
    %805 = vmatpush.msra.mxu0 0.0
    %806 = vmatpush.msra.mxu0 0.0
    %807 = vmatpush.msra.mxu0 0.0
    %808 = vmatpush.msra.mxu0 0.0
    %809 = vmatpush.msra.mxu0 0.0
    %810 = vmatpush.msra.mxu0 0.0
    %811 = vmatpush.msra.mxu0 0.0
    %812 = vmatpush.msra.mxu0 %v789
    %813 = vmatmul.f32.gmra.mxu0 %v512
    %v814 = vpop.f32.mrf.mxu0
    %v815 = vadd.f32 %v782, %v814
    %816 = vmatmul.f32.gmra.mxu0 %v515
    %v817 = vpop.f32.mrf.mxu0
    %v818 = vadd.f32 %v782, %v817
    %819 = vmatmul.f32.gmra.mxu0 %v518
    %v820 = vpop.f32.mrf.mxu0
    %v821 = vadd.f32 %v782, %v820
    %822 = vmatmul.f32.gmra.mxu0 %v521
    %v823 = vpop.f32.mrf.mxu0
    %v824 = vadd.f32 %v782, %v823
    %825 = vmatmul.f32.gmra.mxu0 %v524
    %v826 = vpop.f32.mrf.mxu0
    %v827 = vadd.f32 %v782, %v826
    %828 = vmatmul.f32.gmra.mxu0 %v527
    %v829 = vpop.f32.mrf.mxu0
    %v830 = vadd.f32 %v782, %v829
    %831 = vmatmul.f32.gmra.mxu0 %v530
    %v832 = vpop.f32.mrf.mxu0
    %v833 = vadd.f32 %v782, %v832
    %834 = vmatmul.f32.gmra.mxu0 %v533
    %v835 = vpop.f32.mrf.mxu0
    %v836 = vadd.f32 %v782, %v835
    %837 = vmatmul.f32.gmra.mxu0 %v536
    %v838 = vpop.f32.mrf.mxu0
    %v839 = vadd.f32 %v782, %v838
    %840 = vmatmul.f32.gmra.mxu0 %v539
    %v841 = vpop.f32.mrf.mxu0
    %v842 = vadd.f32 %v782, %v841
    %843 = vmatmul.f32.gmra.mxu0 %v542
    %v844 = vpop.f32.mrf.mxu0
    %v845 = vadd.f32 %v782, %v844
    %846 = vmatmul.f32.gmra.mxu0 %v545
    %v847 = vpop.f32.mrf.mxu0
    %v848 = vadd.f32 %v782, %v847
    %849 = vdwg.mxu0
    %850 = vmatpush.msra.mxu0 0.0
    %851 = vmatpush.msra.mxu0 0.0
    %852 = vmatpush.msra.mxu0 0.0
    %853 = vmatpush.msra.mxu0 0.0
    %854 = vmatpush.msra.mxu0 0.0
    %855 = vmatpush.msra.mxu0 0.0
    %856 = vmatpush.msra.mxu0 0.0
    %857 = vmatpush.msra.mxu0 0.0
    %858 = vmatpush.msra.mxu0 0.0
    %859 = vmatpush.msra.mxu0 0.0
    %860 = vmatpush.msra.mxu0 0.0
    %861 = vmatpush.msra.mxu0 0.0
    %862 = vmatpush.msra.mxu0 0.0
    %863 = vmatpush.msra.mxu0 0.0
    %864 = vmatpush.msra.mxu0 0.0
    %865 = vmatpush.msra.mxu0 %v792
    %866 = vmatmul.f32.gmra.mxu0 %v512
    %v867 = vpop.f32.mrf.mxu0
    %v868 = vadd.f32 %v783, %v867
    %869 = vmatmul.f32.gmra.mxu0 %v515
    %v870 = vpop.f32.mrf.mxu0
    %v871 = vadd.f32 %v783, %v870
    %872 = vmatmul.f32.gmra.mxu0 %v518
    %v873 = vpop.f32.mrf.mxu0
    %v874 = vadd.f32 %v783, %v873
    %875 = vmatmul.f32.gmra.mxu0 %v521
    %v876 = vpop.f32.mrf.mxu0
    %v877 = vadd.f32 %v783, %v876
    %878 = vmatmul.f32.gmra.mxu0 %v524
    %v879 = vpop.f32.mrf.mxu0
    %v880 = vadd.f32 %v783, %v879
    %881 = vmatmul.f32.gmra.mxu0 %v527
    %v882 = vpop.f32.mrf.mxu0
    %v883 = vadd.f32 %v783, %v882
    %884 = vmatmul.f32.gmra.mxu0 %v530
    %v885 = vpop.f32.mrf.mxu0
    %v886 = vadd.f32 %v783, %v885
    %887 = vmatmul.f32.gmra.mxu0 %v533
    %v888 = vpop.f32.mrf.mxu0
    %v889 = vadd.f32 %v783, %v888
    %890 = vmatmul.f32.gmra.mxu0 %v536
    %v891 = vpop.f32.mrf.mxu0
    %v892 = vadd.f32 %v783, %v891
    %893 = vmatmul.f32.gmra.mxu0 %v539
    %v894 = vpop.f32.mrf.mxu0
    %v895 = vadd.f32 %v783, %v894
    %896 = vmatmul.f32.gmra.mxu0 %v542
    %v897 = vpop.f32.mrf.mxu0
    %v898 = vadd.f32 %v783, %v897
    %899 = vmatmul.f32.gmra.mxu0 %v545
    %v900 = vpop.f32.mrf.mxu0
    %v901 = vadd.f32 %v783, %v900
    %902 = vdwg.mxu0
    %903 = vmatpush.msra.mxu0 0.0
    %904 = vmatpush.msra.mxu0 0.0
    %905 = vmatpush.msra.mxu0 0.0
    %906 = vmatpush.msra.mxu0 0.0
    %907 = vmatpush.msra.mxu0 0.0
    %908 = vmatpush.msra.mxu0 0.0
    %909 = vmatpush.msra.mxu0 0.0
    %910 = vmatpush.msra.mxu0 0.0
    %911 = vmatpush.msra.mxu0 0.0
    %912 = vmatpush.msra.mxu0 0.0
    %913 = vmatpush.msra.mxu0 0.0
    %914 = vmatpush.msra.mxu0 0.0
    %915 = vmatpush.msra.mxu0 0.0
    %916 = vmatpush.msra.mxu0 0.0
    %917 = vmatpush.msra.mxu0 0.0
    %918 = vmatpush.msra.mxu0 %v795
    %919 = vmatmul.f32.gmra.mxu0 %v512
    %v920 = vpop.f32.mrf.mxu0
    %v921 = vadd.f32 %v784, %v920
    %922 = vmatmul.f32.gmra.mxu0 %v515
    %v923 = vpop.f32.mrf.mxu0
    %v924 = vadd.f32 %v784, %v923
    %925 = vmatmul.f32.gmra.mxu0 %v518
    %v926 = vpop.f32.mrf.mxu0
    %v927 = vadd.f32 %v784, %v926
    %928 = vmatmul.f32.gmra.mxu0 %v521
    %v929 = vpop.f32.mrf.mxu0
    %v930 = vadd.f32 %v784, %v929
    %931 = vmatmul.f32.gmra.mxu0 %v524
    %v932 = vpop.f32.mrf.mxu0
    %v933 = vadd.f32 %v784, %v932
    %934 = vmatmul.f32.gmra.mxu0 %v527
    %v935 = vpop.f32.mrf.mxu0
    %v936 = vadd.f32 %v784, %v935
    %937 = vmatmul.f32.gmra.mxu0 %v530
    %v938 = vpop.f32.mrf.mxu0
    %v939 = vadd.f32 %v784, %v938
    %940 = vmatmul.f32.gmra.mxu0 %v533
    %v941 = vpop.f32.mrf.mxu0
    %v942 = vadd.f32 %v784, %v941
    %943 = vmatmul.f32.gmra.mxu0 %v536
    %v944 = vpop.f32.mrf.mxu0
    %v945 = vadd.f32 %v784, %v944
    %946 = vmatmul.f32.gmra.mxu0 %v539
    %v947 = vpop.f32.mrf.mxu0
    %v948 = vadd.f32 %v784, %v947
    %949 = vmatmul.f32.gmra.mxu0 %v542
    %v950 = vpop.f32.mrf.mxu0
    %v951 = vadd.f32 %v784, %v950
    %952 = vmatmul.f32.gmra.mxu0 %v545
    %v953 = vpop.f32.mrf.mxu0
    %v954 = vadd.f32 %v784, %v953
    %955 = vdwg.mxu0
    %956 = vst [vmem:[#allocation3] sm:$0xff] %v815
    %957 = vst [vmem:[#allocation3 + $0x8] sm:$0xff] %v868
    %958 = vst [vmem:[#allocation3 + $0x10] sm:$0xff] %v921
    %959 = vst [vmem:[#allocation3 + $0x18] sm:$0xff] %v818
    %960 = vst [vmem:[#allocation3 + $0x20] sm:$0xff] %v871
    %961 = vst [vmem:[#allocation3 + $0x28] sm:$0xff] %v924
    %962 = vst [vmem:[#allocation3 + $0x30] sm:$0xff] %v821
    %963 = vst [vmem:[#allocation3 + $0x38] sm:$0xff] %v874
    %964 = vst [vmem:[#allocation3 + $0x40] sm:$0xff] %v927
    %965 = vst [vmem:[#allocation3 + $0x48] sm:$0xff] %v824
    %966 = vst [vmem:[#allocation3 + $0x50] sm:$0xff] %v877
    %967 = vst [vmem:[#allocation3 + $0x58] sm:$0xff] %v930
    %968 = vst [vmem:[#allocation3 + $0x60] sm:$0xff] %v827
    %969 = vst [vmem:[#allocation3 + $0x68] sm:$0xff] %v880
    %970 = vst [vmem:[#allocation3 + $0x70] sm:$0xff] %v933
    %971 = vst [vmem:[#allocation3 + $0x78] sm:$0xff] %v830
    %972 = vst [vmem:[#allocation3 + $0x80] sm:$0xff] %v883
    %973 = vst [vmem:[#allocation3 + $0x88] sm:$0xff] %v936
    %974 = vst [vmem:[#allocation3 + $0x90] sm:$0xff] %v833
    %975 = vst [vmem:[#allocation3 + $0x98] sm:$0xff] %v886
    %976 = vst [vmem:[#allocation3 + $0xa0] sm:$0xff] %v939
    %977 = vst [vmem:[#allocation3 + $0xa8] sm:$0xff] %v836
    %978 = vst [vmem:[#allocation3 + $0xb0] sm:$0xff] %v889
    %979 = vst [vmem:[#allocation3 + $0xb8] sm:$0xff] %v942
    %980 = vst [vmem:[#allocation3 + $0xc0] sm:$0xff] %v839
    %981 = vst [vmem:[#allocation3 + $0xc8] sm:$0xff] %v892
    %982 = vst [vmem:[#allocation3 + $0xd0] sm:$0xff] %v945
    %983 = vst [vmem:[#allocation3 + $0xd8] sm:$0xff] %v842
    %984 = vst [vmem:[#allocation3 + $0xe0] sm:$0xff] %v895
    %985 = vst [vmem:[#allocation3 + $0xe8] sm:$0xff] %v948
    %986 = vst [vmem:[#allocation3 + $0xf0] sm:$0xff] %v845
    %987 = vst [vmem:[#allocation3 + $0xf8] sm:$0xff] %v898
    %988 = vst [vmem:[#allocation3 + $0x100] sm:$0xff] %v951
    %989 = vst [vmem:[#allocation3 + $0x108] sm:$0xff] %v848
    %990 = vst [vmem:[#allocation3 + $0x110] sm:$0xff] %v901
    %991 = vst [vmem:[#allocation3 + $0x118] sm:$0xff] %v954
    %v992 = vld [vmem:[%s3 + $0x18] sm:$0xff]
    %v993 = vld [vmem:[%s3 + $0x20] sm:$0xff]
    %v994 = vld [vmem:[%s3 + $0x28] sm:$0xff]
    %v995 = vld [vmem:[%s3 + $0x30] sm:$0x3]
    %v996 = vld [vmem:[%s3 + $0x38] sm:$0x3]
    %v997 = vld [vmem:[%s3 + $0x40] sm:$0x3]
    %v998 = vld [vmem:[%s3 + $0x70] ss:$0 sm:$0xff]
    %v999 = vld [vmem:[%s3 + $0x90] sm:$0x1f]
    %v1000 = vld [vmem:[%s3 + $0x98] sm:$0x1f]
    %v1001 = vld [vmem:[%s3 + $0xa0] sm:$0x1f]
    %v1002 = vld [vmem:[%s3 + $0xd0] ss:$0 sm:$0xff]
    %v1003 = vld [vmem:[#allocation2] sm:$0xff]
    %v1004 = vld [vmem:[#allocation2 + $0x8] sm:$0xff]
    %v1005 = vld [vmem:[#allocation2 + $0x10] sm:$0xff]
    %vm1006 = vcmask 80896
    %v1008 = vsel %vm1006, 0.0, 0
    %vm1010 = vcmask 1041408
    %v1012 = vsel %vm1010, %v995, 0
    %v1015 = vsel %vm1010, %v996, 0
    %v1018 = vsel %vm1010, %v997, 0
    %1020 = vmatpush.msra.mxu0 0.0
    %1021 = vmatpush.msra.mxu0 0.0
    %1022 = vmatpush.msra.mxu0 0.0
    %1023 = vmatpush.msra.mxu0 0.0
    %1024 = vmatpush.msra.mxu0 0.0
    %1025 = vmatpush.msra.mxu0 0.0
    %1026 = vmatpush.msra.mxu0 0.0
    %1027 = vmatpush.msra.mxu0 0.0
    %1028 = vmatpush.msra.mxu0 0.0
    %1029 = vmatpush.msra.mxu0 0.0
    %1030 = vmatpush.msra.mxu0 0.0
    %1031 = vmatpush.msra.mxu0 0.0
    %1032 = vmatpush.msra.mxu0 0.0
    %1033 = vmatpush.msra.mxu0 0.0
    %1034 = vmatpush.msra.mxu0 %v1012
    %1035 = vmatpush.msra.mxu0 %v992
    %1036 = vmatmul.f32.gmra.mxu0 %v1008
    %v1037 = vpop.f32.mrf.mxu0
    %v1038 = vadd.f32 0.0, %v1037
    %1039 = vdwg.mxu0
    %1040 = vmatpush.msra.mxu0 0.0
    %1041 = vmatpush.msra.mxu0 0.0
    %1042 = vmatpush.msra.mxu0 0.0
    %1043 = vmatpush.msra.mxu0 0.0
    %1044 = vmatpush.msra.mxu0 0.0
    %1045 = vmatpush.msra.mxu0 0.0
    %1046 = vmatpush.msra.mxu0 0.0
    %1047 = vmatpush.msra.mxu0 0.0
    %1048 = vmatpush.msra.mxu0 0.0
    %1049 = vmatpush.msra.mxu0 0.0
    %1050 = vmatpush.msra.mxu0 0.0
    %1051 = vmatpush.msra.mxu0 0.0
    %1052 = vmatpush.msra.mxu0 0.0
    %1053 = vmatpush.msra.mxu0 0.0
    %1054 = vmatpush.msra.mxu0 %v1015
    %1055 = vmatpush.msra.mxu0 %v993
    %1056 = vmatmul.f32.gmra.mxu0 %v1008
    %v1057 = vpop.f32.mrf.mxu0
    %v1058 = vadd.f32 0.0, %v1057
    %1059 = vdwg.mxu0
    %1060 = vmatpush.msra.mxu0 0.0
    %1061 = vmatpush.msra.mxu0 0.0
    %1062 = vmatpush.msra.mxu0 0.0
    %1063 = vmatpush.msra.mxu0 0.0
    %1064 = vmatpush.msra.mxu0 0.0
    %1065 = vmatpush.msra.mxu0 0.0
    %1066 = vmatpush.msra.mxu0 0.0
    %1067 = vmatpush.msra.mxu0 0.0
    %1068 = vmatpush.msra.mxu0 0.0
    %1069 = vmatpush.msra.mxu0 0.0
    %1070 = vmatpush.msra.mxu0 0.0
    %1071 = vmatpush.msra.mxu0 0.0
    %1072 = vmatpush.msra.mxu0 0.0
    %1073 = vmatpush.msra.mxu0 0.0
    %1074 = vmatpush.msra.mxu0 %v1018
    %1075 = vmatpush.msra.mxu0 %v994
    %1076 = vmatmul.f32.gmra.mxu0 %v1008
    %v1077 = vpop.f32.mrf.mxu0
    %v1078 = vadd.f32 0.0, %v1077
    %1079 = vdwg.mxu0
    %v1080 = vadd.f32 %v1003, %v1038
    %v1081 = vmul.f32 %v1080, 0.5
    %v1082 = vtanh.pop %v1081
    %v1083 = vmul.f32 %v1082, 0.5
    %v1084 = vadd.f32 %v1083, 0.5
    %v1085 = vadd.f32 %v1004, %v1058
    %v1086 = vmul.f32 %v1085, 0.5
    %v1087 = vtanh.pop %v1086
    %v1088 = vmul.f32 %v1087, 0.5
    %v1089 = vadd.f32 %v1088, 0.5
    %v1090 = vadd.f32 %v1078, %v998
    %v1091 = vmul.f32 %v1084, %v1090
    %v1092 = vadd.f32 %v1005, %v1091
    %v1093 = vtanh.pop %v1092
    %v1094 = vsub.f32 1.0, %v1089
    %v1095 = vmul.f32 %v1094, %v1093
    %v1096 = vmul.f32 %v1089, 0.0
    %v1097 = vadd.f32 %v1095, %v1096
    %v1098 = vld [vmem:[#allocation2 + $0x18] sm:$0xff]
    %v1099 = vld [vmem:[#allocation2 + $0x20] sm:$0xff]
    %v1100 = vld [vmem:[#allocation2 + $0x28] sm:$0xff]
    %v1102 = vsel %vm1006, %v1097, 0
    %1104 = vmatpush.msra.mxu0 0.0
    %1105 = vmatpush.msra.mxu0 0.0
    %1106 = vmatpush.msra.mxu0 0.0
    %1107 = vmatpush.msra.mxu0 0.0
    %1108 = vmatpush.msra.mxu0 0.0
    %1109 = vmatpush.msra.mxu0 0.0
    %1110 = vmatpush.msra.mxu0 0.0
    %1111 = vmatpush.msra.mxu0 0.0
    %1112 = vmatpush.msra.mxu0 0.0
    %1113 = vmatpush.msra.mxu0 0.0
    %1114 = vmatpush.msra.mxu0 0.0
    %1115 = vmatpush.msra.mxu0 0.0
    %1116 = vmatpush.msra.mxu0 0.0
    %1117 = vmatpush.msra.mxu0 0.0
    %1118 = vmatpush.msra.mxu0 %v1012
    %1119 = vmatpush.msra.mxu0 %v992
    %1120 = vmatmul.f32.gmra.mxu0 %v1102
    %v1121 = vpop.f32.mrf.mxu0
    %v1122 = vadd.f32 0.0, %v1121
    %1123 = vdwg.mxu0
    %1124 = vmatpush.msra.mxu0 0.0
    %1125 = vmatpush.msra.mxu0 0.0
    %1126 = vmatpush.msra.mxu0 0.0
    %1127 = vmatpush.msra.mxu0 0.0
    %1128 = vmatpush.msra.mxu0 0.0
    %1129 = vmatpush.msra.mxu0 0.0
    %1130 = vmatpush.msra.mxu0 0.0
    %1131 = vmatpush.msra.mxu0 0.0
    %1132 = vmatpush.msra.mxu0 0.0
    %1133 = vmatpush.msra.mxu0 0.0
    %1134 = vmatpush.msra.mxu0 0.0
    %1135 = vmatpush.msra.mxu0 0.0
    %1136 = vmatpush.msra.mxu0 0.0
    %1137 = vmatpush.msra.mxu0 0.0
    %1138 = vmatpush.msra.mxu0 %v1015
    %1139 = vmatpush.msra.mxu0 %v993
    %1140 = vmatmul.f32.gmra.mxu0 %v1102
    %v1141 = vpop.f32.mrf.mxu0
    %v1142 = vadd.f32 0.0, %v1141
    %1143 = vdwg.mxu0
    %1144 = vmatpush.msra.mxu0 0.0
    %1145 = vmatpush.msra.mxu0 0.0
    %1146 = vmatpush.msra.mxu0 0.0
    %1147 = vmatpush.msra.mxu0 0.0
    %1148 = vmatpush.msra.mxu0 0.0
    %1149 = vmatpush.msra.mxu0 0.0
    %1150 = vmatpush.msra.mxu0 0.0
    %1151 = vmatpush.msra.mxu0 0.0
    %1152 = vmatpush.msra.mxu0 0.0
    %1153 = vmatpush.msra.mxu0 0.0
    %1154 = vmatpush.msra.mxu0 0.0
    %1155 = vmatpush.msra.mxu0 0.0
    %1156 = vmatpush.msra.mxu0 0.0
    %1157 = vmatpush.msra.mxu0 0.0
    %1158 = vmatpush.msra.mxu0 %v1018
    %1159 = vmatpush.msra.mxu0 %v994
    %1160 = vmatmul.f32.gmra.mxu0 %v1102
    %v1161 = vpop.f32.mrf.mxu0
    %v1162 = vadd.f32 0.0, %v1161
    %1163 = vdwg.mxu0
    %v1164 = vadd.f32 %v1098, %v1122
    %v1165 = vmul.f32 %v1164, 0.5
    %v1166 = vtanh.pop %v1165
    %v1167 = vmul.f32 %v1166, 0.5
    %v1168 = vadd.f32 %v1167, 0.5
    %v1169 = vadd.f32 %v1099, %v1142
    %v1170 = vmul.f32 %v1169, 0.5
    %v1171 = vtanh.pop %v1170
    %v1172 = vmul.f32 %v1171, 0.5
    %v1173 = vadd.f32 %v1172, 0.5
    %v1174 = vadd.f32 %v1162, %v998
    %v1175 = vmul.f32 %v1168, %v1174
    %v1176 = vadd.f32 %v1100, %v1175
    %v1177 = vtanh.pop %v1176
    %v1178 = vsub.f32 1.0, %v1173
    %v1179 = vmul.f32 %v1178, %v1177
    %v1180 = vmul.f32 %v1173, %v1097
    %v1181 = vadd.f32 %v1179, %v1180
    %v1182 = vld [vmem:[#allocation2 + $0x30] sm:$0xff]
    %v1183 = vld [vmem:[#allocation2 + $0x38] sm:$0xff]
    %v1184 = vld [vmem:[#allocation2 + $0x40] sm:$0xff]
    %v1186 = vsel %vm1006, %v1181, 0
    %1188 = vmatpush.msra.mxu0 0.0
    %1189 = vmatpush.msra.mxu0 0.0
    %1190 = vmatpush.msra.mxu0 0.0
    %1191 = vmatpush.msra.mxu0 0.0
    %1192 = vmatpush.msra.mxu0 0.0
    %1193 = vmatpush.msra.mxu0 0.0
    %1194 = vmatpush.msra.mxu0 0.0
    %1195 = vmatpush.msra.mxu0 0.0
    %1196 = vmatpush.msra.mxu0 0.0
    %1197 = vmatpush.msra.mxu0 0.0
    %1198 = vmatpush.msra.mxu0 0.0
    %1199 = vmatpush.msra.mxu0 0.0
    %1200 = vmatpush.msra.mxu0 0.0
    %1201 = vmatpush.msra.mxu0 0.0
    %1202 = vmatpush.msra.mxu0 %v1012
    %1203 = vmatpush.msra.mxu0 %v992
    %1204 = vmatmul.f32.gmra.mxu0 %v1186
    %v1205 = vpop.f32.mrf.mxu0
    %v1206 = vadd.f32 0.0, %v1205
    %1207 = vdwg.mxu0
    %1208 = vmatpush.msra.mxu0 0.0
    %1209 = vmatpush.msra.mxu0 0.0
    %1210 = vmatpush.msra.mxu0 0.0
    %1211 = vmatpush.msra.mxu0 0.0
    %1212 = vmatpush.msra.mxu0 0.0
    %1213 = vmatpush.msra.mxu0 0.0
    %1214 = vmatpush.msra.mxu0 0.0
    %1215 = vmatpush.msra.mxu0 0.0
    %1216 = vmatpush.msra.mxu0 0.0
    %1217 = vmatpush.msra.mxu0 0.0
    %1218 = vmatpush.msra.mxu0 0.0
    %1219 = vmatpush.msra.mxu0 0.0
    %1220 = vmatpush.msra.mxu0 0.0
    %1221 = vmatpush.msra.mxu0 0.0
    %1222 = vmatpush.msra.mxu0 %v1015
    %1223 = vmatpush.msra.mxu0 %v993
    %1224 = vmatmul.f32.gmra.mxu0 %v1186
    %v1225 = vpop.f32.mrf.mxu0
    %v1226 = vadd.f32 0.0, %v1225
    %1227 = vdwg.mxu0
    %1228 = vmatpush.msra.mxu0 0.0
    %1229 = vmatpush.msra.mxu0 0.0
    %1230 = vmatpush.msra.mxu0 0.0
    %1231 = vmatpush.msra.mxu0 0.0
    %1232 = vmatpush.msra.mxu0 0.0
    %1233 = vmatpush.msra.mxu0 0.0
    %1234 = vmatpush.msra.mxu0 0.0
    %1235 = vmatpush.msra.mxu0 0.0
    %1236 = vmatpush.msra.mxu0 0.0
    %1237 = vmatpush.msra.mxu0 0.0
    %1238 = vmatpush.msra.mxu0 0.0
    %1239 = vmatpush.msra.mxu0 0.0
    %1240 = vmatpush.msra.mxu0 0.0
    %1241 = vmatpush.msra.mxu0 0.0
    %1242 = vmatpush.msra.mxu0 %v1018
    %1243 = vmatpush.msra.mxu0 %v994
    %1244 = vmatmul.f32.gmra.mxu0 %v1186
    %v1245 = vpop.f32.mrf.mxu0
    %v1246 = vadd.f32 0.0, %v1245
    %1247 = vdwg.mxu0
    %v1248 = vadd.f32 %v1182, %v1206
    %v1249 = vmul.f32 %v1248, 0.5
    %v1250 = vtanh.pop %v1249
    %v1251 = vmul.f32 %v1250, 0.5
    %v1252 = vadd.f32 %v1251, 0.5
    %v1253 = vadd.f32 %v1183, %v1226
    %v1254 = vmul.f32 %v1253, 0.5
    %v1255 = vtanh.pop %v1254
    %v1256 = vmul.f32 %v1255, 0.5
    %v1257 = vadd.f32 %v1256, 0.5
    %v1258 = vadd.f32 %v1246, %v998
    %v1259 = vmul.f32 %v1252, %v1258
    %v1260 = vadd.f32 %v1184, %v1259
    %v1261 = vtanh.pop %v1260
    %v1262 = vsub.f32 1.0, %v1257
    %v1263 = vmul.f32 %v1262, %v1261
    %v1264 = vmul.f32 %v1257, %v1181
    %v1265 = vadd.f32 %v1263, %v1264
    %v1266 = vld [vmem:[#allocation2 + $0x48] sm:$0xff]
    %v1267 = vld [vmem:[#allocation2 + $0x50] sm:$0xff]
    %v1268 = vld [vmem:[#allocation2 + $0x58] sm:$0xff]
    %v1270 = vsel %vm1006, %v1265, 0
    %1272 = vmatpush.msra.mxu0 0.0
    %1273 = vmatpush.msra.mxu0 0.0
    %1274 = vmatpush.msra.mxu0 0.0
    %1275 = vmatpush.msra.mxu0 0.0
    %1276 = vmatpush.msra.mxu0 0.0
    %1277 = vmatpush.msra.mxu0 0.0
    %1278 = vmatpush.msra.mxu0 0.0
    %1279 = vmatpush.msra.mxu0 0.0
    %1280 = vmatpush.msra.mxu0 0.0
    %1281 = vmatpush.msra.mxu0 0.0
    %1282 = vmatpush.msra.mxu0 0.0
    %1283 = vmatpush.msra.mxu0 0.0
    %1284 = vmatpush.msra.mxu0 0.0
    %1285 = vmatpush.msra.mxu0 0.0
    %1286 = vmatpush.msra.mxu0 %v1012
    %1287 = vmatpush.msra.mxu0 %v992
    %1288 = vmatmul.f32.gmra.mxu0 %v1270
    %v1289 = vpop.f32.mrf.mxu0
    %v1290 = vadd.f32 0.0, %v1289
    %1291 = vdwg.mxu0
    %1292 = vmatpush.msra.mxu0 0.0
    %1293 = vmatpush.msra.mxu0 0.0
    %1294 = vmatpush.msra.mxu0 0.0
    %1295 = vmatpush.msra.mxu0 0.0
    %1296 = vmatpush.msra.mxu0 0.0
    %1297 = vmatpush.msra.mxu0 0.0
    %1298 = vmatpush.msra.mxu0 0.0
    %1299 = vmatpush.msra.mxu0 0.0
    %1300 = vmatpush.msra.mxu0 0.0
    %1301 = vmatpush.msra.mxu0 0.0
    %1302 = vmatpush.msra.mxu0 0.0
    %1303 = vmatpush.msra.mxu0 0.0
    %1304 = vmatpush.msra.mxu0 0.0
    %1305 = vmatpush.msra.mxu0 0.0
    %1306 = vmatpush.msra.mxu0 %v1015
    %1307 = vmatpush.msra.mxu0 %v993
    %1308 = vmatmul.f32.gmra.mxu0 %v1270
    %v1309 = vpop.f32.mrf.mxu0
    %v1310 = vadd.f32 0.0, %v1309
    %1311 = vdwg.mxu0
    %1312 = vmatpush.msra.mxu0 0.0
    %1313 = vmatpush.msra.mxu0 0.0
    %1314 = vmatpush.msra.mxu0 0.0
    %1315 = vmatpush.msra.mxu0 0.0
    %1316 = vmatpush.msra.mxu0 0.0
    %1317 = vmatpush.msra.mxu0 0.0
    %1318 = vmatpush.msra.mxu0 0.0
    %1319 = vmatpush.msra.mxu0 0.0
    %1320 = vmatpush.msra.mxu0 0.0
    %1321 = vmatpush.msra.mxu0 0.0
    %1322 = vmatpush.msra.mxu0 0.0
    %1323 = vmatpush.msra.mxu0 0.0
    %1324 = vmatpush.msra.mxu0 0.0
    %1325 = vmatpush.msra.mxu0 0.0
    %1326 = vmatpush.msra.mxu0 %v1018
    %1327 = vmatpush.msra.mxu0 %v994
    %1328 = vmatmul.f32.gmra.mxu0 %v1270
    %v1329 = vpop.f32.mrf.mxu0
    %v1330 = vadd.f32 0.0, %v1329
    %1331 = vdwg.mxu0
    %v1332 = vadd.f32 %v1266, %v1290
    %v1333 = vmul.f32 %v1332, 0.5
    %v1334 = vtanh.pop %v1333
    %v1335 = vmul.f32 %v1334, 0.5
    %v1336 = vadd.f32 %v1335, 0.5
    %v1337 = vadd.f32 %v1267, %v1310
    %v1338 = vmul.f32 %v1337, 0.5
    %v1339 = vtanh.pop %v1338
    %v1340 = vmul.f32 %v1339, 0.5
    %v1341 = vadd.f32 %v1340, 0.5
    %v1342 = vadd.f32 %v1330, %v998
    %v1343 = vmul.f32 %v1336, %v1342
    %v1344 = vadd.f32 %v1268, %v1343
    %v1345 = vtanh.pop %v1344
    %v1346 = vsub.f32 1.0, %v1341
    %v1347 = vmul.f32 %v1346, %v1345
    %v1348 = vmul.f32 %v1341, %v1265
    %v1349 = vadd.f32 %v1347, %v1348
    %v1350 = vld [vmem:[#allocation2 + $0x60] sm:$0xff]
    %v1351 = vld [vmem:[#allocation2 + $0x68] sm:$0xff]
    %v1352 = vld [vmem:[#allocation2 + $0x70] sm:$0xff]
    %v1354 = vsel %vm1006, %v1349, 0
    %1356 = vmatpush.msra.mxu0 0.0
    %1357 = vmatpush.msra.mxu0 0.0
    %1358 = vmatpush.msra.mxu0 0.0
    %1359 = vmatpush.msra.mxu0 0.0
    %1360 = vmatpush.msra.mxu0 0.0
    %1361 = vmatpush.msra.mxu0 0.0
    %1362 = vmatpush.msra.mxu0 0.0
    %1363 = vmatpush.msra.mxu0 0.0
    %1364 = vmatpush.msra.mxu0 0.0
    %1365 = vmatpush.msra.mxu0 0.0
    %1366 = vmatpush.msra.mxu0 0.0
    %1367 = vmatpush.msra.mxu0 0.0
    %1368 = vmatpush.msra.mxu0 0.0
    %1369 = vmatpush.msra.mxu0 0.0
    %1370 = vmatpush.msra.mxu0 %v1012
    %1371 = vmatpush.msra.mxu0 %v992
    %1372 = vmatmul.f32.gmra.mxu0 %v1354
    %v1373 = vpop.f32.mrf.mxu0
    %v1374 = vadd.f32 0.0, %v1373
    %1375 = vdwg.mxu0
    %1376 = vmatpush.msra.mxu0 0.0
    %1377 = vmatpush.msra.mxu0 0.0
    %1378 = vmatpush.msra.mxu0 0.0
    %1379 = vmatpush.msra.mxu0 0.0
    %1380 = vmatpush.msra.mxu0 0.0
    %1381 = vmatpush.msra.mxu0 0.0
    %1382 = vmatpush.msra.mxu0 0.0
    %1383 = vmatpush.msra.mxu0 0.0
    %1384 = vmatpush.msra.mxu0 0.0
    %1385 = vmatpush.msra.mxu0 0.0
    %1386 = vmatpush.msra.mxu0 0.0
    %1387 = vmatpush.msra.mxu0 0.0
    %1388 = vmatpush.msra.mxu0 0.0
    %1389 = vmatpush.msra.mxu0 0.0
    %1390 = vmatpush.msra.mxu0 %v1015
    %1391 = vmatpush.msra.mxu0 %v993
    %1392 = vmatmul.f32.gmra.mxu0 %v1354
    %v1393 = vpop.f32.mrf.mxu0
    %v1394 = vadd.f32 0.0, %v1393
    %1395 = vdwg.mxu0
    %1396 = vmatpush.msra.mxu0 0.0
    %1397 = vmatpush.msra.mxu0 0.0
    %1398 = vmatpush.msra.mxu0 0.0
    %1399 = vmatpush.msra.mxu0 0.0
    %1400 = vmatpush.msra.mxu0 0.0
    %1401 = vmatpush.msra.mxu0 0.0
    %1402 = vmatpush.msra.mxu0 0.0
    %1403 = vmatpush.msra.mxu0 0.0
    %1404 = vmatpush.msra.mxu0 0.0
    %1405 = vmatpush.msra.mxu0 0.0
    %1406 = vmatpush.msra.mxu0 0.0
    %1407 = vmatpush.msra.mxu0 0.0
    %1408 = vmatpush.msra.mxu0 0.0
    %1409 = vmatpush.msra.mxu0 0.0
    %1410 = vmatpush.msra.mxu0 %v1018
    %1411 = vmatpush.msra.mxu0 %v994
    %1412 = vmatmul.f32.gmra.mxu0 %v1354
    %v1413 = vpop.f32.mrf.mxu0
    %v1414 = vadd.f32 0.0, %v1413
    %1415 = vdwg.mxu0
    %v1416 = vadd.f32 %v1350, %v1374
    %v1417 = vmul.f32 %v1416, 0.5
    %v1418 = vtanh.pop %v1417
    %v1419 = vmul.f32 %v1418, 0.5
    %v1420 = vadd.f32 %v1419, 0.5
    %v1421 = vadd.f32 %v1351, %v1394
    %v1422 = vmul.f32 %v1421, 0.5
    %v1423 = vtanh.pop %v1422
    %v1424 = vmul.f32 %v1423, 0.5
    %v1425 = vadd.f32 %v1424, 0.5
    %v1426 = vadd.f32 %v1414, %v998
    %v1427 = vmul.f32 %v1420, %v1426
    %v1428 = vadd.f32 %v1352, %v1427
    %v1429 = vtanh.pop %v1428
    %v1430 = vsub.f32 1.0, %v1425
    %v1431 = vmul.f32 %v1430, %v1429
    %v1432 = vmul.f32 %v1425, %v1349
    %v1433 = vadd.f32 %v1431, %v1432
    %v1434 = vld [vmem:[#allocation2 + $0x78] sm:$0xff]
    %v1435 = vld [vmem:[#allocation2 + $0x80] sm:$0xff]
    %v1436 = vld [vmem:[#allocation2 + $0x88] sm:$0xff]
    %v1438 = vsel %vm1006, %v1433, 0
    %1440 = vmatpush.msra.mxu0 0.0
    %1441 = vmatpush.msra.mxu0 0.0
    %1442 = vmatpush.msra.mxu0 0.0
    %1443 = vmatpush.msra.mxu0 0.0
    %1444 = vmatpush.msra.mxu0 0.0
    %1445 = vmatpush.msra.mxu0 0.0
    %1446 = vmatpush.msra.mxu0 0.0
    %1447 = vmatpush.msra.mxu0 0.0
    %1448 = vmatpush.msra.mxu0 0.0
    %1449 = vmatpush.msra.mxu0 0.0
    %1450 = vmatpush.msra.mxu0 0.0
    %1451 = vmatpush.msra.mxu0 0.0
    %1452 = vmatpush.msra.mxu0 0.0
    %1453 = vmatpush.msra.mxu0 0.0
    %1454 = vmatpush.msra.mxu0 %v1012
    %1455 = vmatpush.msra.mxu0 %v992
    %1456 = vmatmul.f32.gmra.mxu0 %v1438
    %v1457 = vpop.f32.mrf.mxu0
    %v1458 = vadd.f32 0.0, %v1457
    %1459 = vdwg.mxu0
    %1460 = vmatpush.msra.mxu0 0.0
    %1461 = vmatpush.msra.mxu0 0.0
    %1462 = vmatpush.msra.mxu0 0.0
    %1463 = vmatpush.msra.mxu0 0.0
    %1464 = vmatpush.msra.mxu0 0.0
    %1465 = vmatpush.msra.mxu0 0.0
    %1466 = vmatpush.msra.mxu0 0.0
    %1467 = vmatpush.msra.mxu0 0.0
    %1468 = vmatpush.msra.mxu0 0.0
    %1469 = vmatpush.msra.mxu0 0.0
    %1470 = vmatpush.msra.mxu0 0.0
    %1471 = vmatpush.msra.mxu0 0.0
    %1472 = vmatpush.msra.mxu0 0.0
    %1473 = vmatpush.msra.mxu0 0.0
    %1474 = vmatpush.msra.mxu0 %v1015
    %1475 = vmatpush.msra.mxu0 %v993
    %1476 = vmatmul.f32.gmra.mxu0 %v1438
    %v1477 = vpop.f32.mrf.mxu0
    %v1478 = vadd.f32 0.0, %v1477
    %1479 = vdwg.mxu0
    %1480 = vmatpush.msra.mxu0 0.0
    %1481 = vmatpush.msra.mxu0 0.0
    %1482 = vmatpush.msra.mxu0 0.0
    %1483 = vmatpush.msra.mxu0 0.0
    %1484 = vmatpush.msra.mxu0 0.0
    %1485 = vmatpush.msra.mxu0 0.0
    %1486 = vmatpush.msra.mxu0 0.0
    %1487 = vmatpush.msra.mxu0 0.0
    %1488 = vmatpush.msra.mxu0 0.0
    %1489 = vmatpush.msra.mxu0 0.0
    %1490 = vmatpush.msra.mxu0 0.0
    %1491 = vmatpush.msra.mxu0 0.0
    %1492 = vmatpush.msra.mxu0 0.0
    %1493 = vmatpush.msra.mxu0 0.0
    %1494 = vmatpush.msra.mxu0 %v1018
    %1495 = vmatpush.msra.mxu0 %v994
    %1496 = vmatmul.f32.gmra.mxu0 %v1438
    %v1497 = vpop.f32.mrf.mxu0
    %v1498 = vadd.f32 0.0, %v1497
    %1499 = vdwg.mxu0
    %v1500 = vadd.f32 %v1434, %v1458
    %v1501 = vmul.f32 %v1500, 0.5
    %v1502 = vtanh.pop %v1501
    %v1503 = vmul.f32 %v1502, 0.5
    %v1504 = vadd.f32 %v1503, 0.5
    %v1505 = vadd.f32 %v1435, %v1478
    %v1506 = vmul.f32 %v1505, 0.5
    %v1507 = vtanh.pop %v1506
    %v1508 = vmul.f32 %v1507, 0.5
    %v1509 = vadd.f32 %v1508, 0.5
    %v1510 = vadd.f32 %v1498, %v998
    %v1511 = vmul.f32 %v1504, %v1510
    %v1512 = vadd.f32 %v1436, %v1511
    %v1513 = vtanh.pop %v1512
    %v1514 = vsub.f32 1.0, %v1509
    %v1515 = vmul.f32 %v1514, %v1513
    %v1516 = vmul.f32 %v1509, %v1433
    %v1517 = vadd.f32 %v1515, %v1516
    %v1518 = vld [vmem:[#allocation2 + $0x90] sm:$0xff]
    %v1519 = vld [vmem:[#allocation2 + $0x98] sm:$0xff]
    %v1520 = vld [vmem:[#allocation2 + $0xa0] sm:$0xff]
    %v1522 = vsel %vm1006, %v1517, 0
    %1524 = vmatpush.msra.mxu0 0.0
    %1525 = vmatpush.msra.mxu0 0.0
    %1526 = vmatpush.msra.mxu0 0.0
    %1527 = vmatpush.msra.mxu0 0.0
    %1528 = vmatpush.msra.mxu0 0.0
    %1529 = vmatpush.msra.mxu0 0.0
    %1530 = vmatpush.msra.mxu0 0.0
    %1531 = vmatpush.msra.mxu0 0.0
    %1532 = vmatpush.msra.mxu0 0.0
    %1533 = vmatpush.msra.mxu0 0.0
    %1534 = vmatpush.msra.mxu0 0.0
    %1535 = vmatpush.msra.mxu0 0.0
    %1536 = vmatpush.msra.mxu0 0.0
    %1537 = vmatpush.msra.mxu0 0.0
    %1538 = vmatpush.msra.mxu0 %v1012
    %1539 = vmatpush.msra.mxu0 %v992
    %1540 = vmatmul.f32.gmra.mxu0 %v1522
    %v1541 = vpop.f32.mrf.mxu0
    %v1542 = vadd.f32 0.0, %v1541
    %1543 = vdwg.mxu0
    %1544 = vmatpush.msra.mxu0 0.0
    %1545 = vmatpush.msra.mxu0 0.0
    %1546 = vmatpush.msra.mxu0 0.0
    %1547 = vmatpush.msra.mxu0 0.0
    %1548 = vmatpush.msra.mxu0 0.0
    %1549 = vmatpush.msra.mxu0 0.0
    %1550 = vmatpush.msra.mxu0 0.0
    %1551 = vmatpush.msra.mxu0 0.0
    %1552 = vmatpush.msra.mxu0 0.0
    %1553 = vmatpush.msra.mxu0 0.0
    %1554 = vmatpush.msra.mxu0 0.0
    %1555 = vmatpush.msra.mxu0 0.0
    %1556 = vmatpush.msra.mxu0 0.0
    %1557 = vmatpush.msra.mxu0 0.0
    %1558 = vmatpush.msra.mxu0 %v1015
    %1559 = vmatpush.msra.mxu0 %v993
    %1560 = vmatmul.f32.gmra.mxu0 %v1522
    %v1561 = vpop.f32.mrf.mxu0
    %v1562 = vadd.f32 0.0, %v1561
    %1563 = vdwg.mxu0
    %1564 = vmatpush.msra.mxu0 0.0
    %1565 = vmatpush.msra.mxu0 0.0
    %1566 = vmatpush.msra.mxu0 0.0
    %1567 = vmatpush.msra.mxu0 0.0
    %1568 = vmatpush.msra.mxu0 0.0
    %1569 = vmatpush.msra.mxu0 0.0
    %1570 = vmatpush.msra.mxu0 0.0
    %1571 = vmatpush.msra.mxu0 0.0
    %1572 = vmatpush.msra.mxu0 0.0
    %1573 = vmatpush.msra.mxu0 0.0
    %1574 = vmatpush.msra.mxu0 0.0
    %1575 = vmatpush.msra.mxu0 0.0
    %1576 = vmatpush.msra.mxu0 0.0
    %1577 = vmatpush.msra.mxu0 0.0
    %1578 = vmatpush.msra.mxu0 %v1018
    %1579 = vmatpush.msra.mxu0 %v994
    %1580 = vmatmul.f32.gmra.mxu0 %v1522
    %v1581 = vpop.f32.mrf.mxu0
    %v1582 = vadd.f32 0.0, %v1581
    %1583 = vdwg.mxu0
    %v1584 = vadd.f32 %v1518, %v1542
    %v1585 = vmul.f32 %v1584, 0.5
    %v1586 = vtanh.pop %v1585
    %v1587 = vmul.f32 %v1586, 0.5
    %v1588 = vadd.f32 %v1587, 0.5
    %v1589 = vadd.f32 %v1519, %v1562
    %v1590 = vmul.f32 %v1589, 0.5
    %v1591 = vtanh.pop %v1590
    %v1592 = vmul.f32 %v1591, 0.5
    %v1593 = vadd.f32 %v1592, 0.5
    %v1594 = vadd.f32 %v1582, %v998
    %v1595 = vmul.f32 %v1588, %v1594
    %v1596 = vadd.f32 %v1520, %v1595
    %v1597 = vtanh.pop %v1596
    %v1598 = vsub.f32 1.0, %v1593
    %v1599 = vmul.f32 %v1598, %v1597
    %v1600 = vmul.f32 %v1593, %v1517
    %v1601 = vadd.f32 %v1599, %v1600
    %v1602 = vld [vmem:[#allocation2 + $0xa8] sm:$0xff]
    %v1603 = vld [vmem:[#allocation2 + $0xb0] sm:$0xff]
    %v1604 = vld [vmem:[#allocation2 + $0xb8] sm:$0xff]
    %v1606 = vsel %vm1006, %v1601, 0
    %1608 = vmatpush.msra.mxu0 0.0
    %1609 = vmatpush.msra.mxu0 0.0
    %1610 = vmatpush.msra.mxu0 0.0
    %1611 = vmatpush.msra.mxu0 0.0
    %1612 = vmatpush.msra.mxu0 0.0
    %1613 = vmatpush.msra.mxu0 0.0
    %1614 = vmatpush.msra.mxu0 0.0
    %1615 = vmatpush.msra.mxu0 0.0
    %1616 = vmatpush.msra.mxu0 0.0
    %1617 = vmatpush.msra.mxu0 0.0
    %1618 = vmatpush.msra.mxu0 0.0
    %1619 = vmatpush.msra.mxu0 0.0
    %1620 = vmatpush.msra.mxu0 0.0
    %1621 = vmatpush.msra.mxu0 0.0
    %1622 = vmatpush.msra.mxu0 %v1012
    %1623 = vmatpush.msra.mxu0 %v992
    %1624 = vmatmul.f32.gmra.mxu0 %v1606
    %v1625 = vpop.f32.mrf.mxu0
    %v1626 = vadd.f32 0.0, %v1625
    %1627 = vdwg.mxu0
    %1628 = vmatpush.msra.mxu0 0.0
    %1629 = vmatpush.msra.mxu0 0.0
    %1630 = vmatpush.msra.mxu0 0.0
    %1631 = vmatpush.msra.mxu0 0.0
    %1632 = vmatpush.msra.mxu0 0.0
    %1633 = vmatpush.msra.mxu0 0.0
    %1634 = vmatpush.msra.mxu0 0.0
    %1635 = vmatpush.msra.mxu0 0.0
    %1636 = vmatpush.msra.mxu0 0.0
    %1637 = vmatpush.msra.mxu0 0.0
    %1638 = vmatpush.msra.mxu0 0.0
    %1639 = vmatpush.msra.mxu0 0.0
    %1640 = vmatpush.msra.mxu0 0.0
    %1641 = vmatpush.msra.mxu0 0.0
    %1642 = vmatpush.msra.mxu0 %v1015
    %1643 = vmatpush.msra.mxu0 %v993
    %1644 = vmatmul.f32.gmra.mxu0 %v1606
    %v1645 = vpop.f32.mrf.mxu0
    %v1646 = vadd.f32 0.0, %v1645
    %1647 = vdwg.mxu0
    %1648 = vmatpush.msra.mxu0 0.0
    %1649 = vmatpush.msra.mxu0 0.0
    %1650 = vmatpush.msra.mxu0 0.0
    %1651 = vmatpush.msra.mxu0 0.0
    %1652 = vmatpush.msra.mxu0 0.0
    %1653 = vmatpush.msra.mxu0 0.0
    %1654 = vmatpush.msra.mxu0 0.0
    %1655 = vmatpush.msra.mxu0 0.0
    %1656 = vmatpush.msra.mxu0 0.0
    %1657 = vmatpush.msra.mxu0 0.0
    %1658 = vmatpush.msra.mxu0 0.0
    %1659 = vmatpush.msra.mxu0 0.0
    %1660 = vmatpush.msra.mxu0 0.0
    %1661 = vmatpush.msra.mxu0 0.0
    %1662 = vmatpush.msra.mxu0 %v1018
    %1663 = vmatpush.msra.mxu0 %v994
    %1664 = vmatmul.f32.gmra.mxu0 %v1606
    %v1665 = vpop.f32.mrf.mxu0
    %v1666 = vadd.f32 0.0, %v1665
    %1667 = vdwg.mxu0
    %v1668 = vadd.f32 %v1602, %v1626
    %v1669 = vmul.f32 %v1668, 0.5
    %v1670 = vtanh.pop %v1669
    %v1671 = vmul.f32 %v1670, 0.5
    %v1672 = vadd.f32 %v1671, 0.5
    %v1673 = vadd.f32 %v1603, %v1646
    %v1674 = vmul.f32 %v1673, 0.5
    %v1675 = vtanh.pop %v1674
    %v1676 = vmul.f32 %v1675, 0.5
    %v1677 = vadd.f32 %v1676, 0.5
    %v1678 = vadd.f32 %v1666, %v998
    %v1679 = vmul.f32 %v1672, %v1678
    %v1680 = vadd.f32 %v1604, %v1679
    %v1681 = vtanh.pop %v1680
    %v1682 = vsub.f32 1.0, %v1677
    %v1683 = vmul.f32 %v1682, %v1681
    %v1684 = vmul.f32 %v1677, %v1601
    %v1685 = vadd.f32 %v1683, %v1684
    %v1686 = vld [vmem:[#allocation2 + $0xc0] sm:$0xff]
    %v1687 = vld [vmem:[#allocation2 + $0xc8] sm:$0xff]
    %v1688 = vld [vmem:[#allocation2 + $0xd0] sm:$0xff]
    %v1690 = vsel %vm1006, %v1685, 0
    %1692 = vmatpush.msra.mxu0 0.0
    %1693 = vmatpush.msra.mxu0 0.0
    %1694 = vmatpush.msra.mxu0 0.0
    %1695 = vmatpush.msra.mxu0 0.0
    %1696 = vmatpush.msra.mxu0 0.0
    %1697 = vmatpush.msra.mxu0 0.0
    %1698 = vmatpush.msra.mxu0 0.0
    %1699 = vmatpush.msra.mxu0 0.0
    %1700 = vmatpush.msra.mxu0 0.0
    %1701 = vmatpush.msra.mxu0 0.0
    %1702 = vmatpush.msra.mxu0 0.0
    %1703 = vmatpush.msra.mxu0 0.0
    %1704 = vmatpush.msra.mxu0 0.0
    %1705 = vmatpush.msra.mxu0 0.0
    %1706 = vmatpush.msra.mxu0 %v1012
    %1707 = vmatpush.msra.mxu0 %v992
    %1708 = vmatmul.f32.gmra.mxu0 %v1690
    %v1709 = vpop.f32.mrf.mxu0
    %v1710 = vadd.f32 0.0, %v1709
    %1711 = vdwg.mxu0
    %1712 = vmatpush.msra.mxu0 0.0
    %1713 = vmatpush.msra.mxu0 0.0
    %1714 = vmatpush.msra.mxu0 0.0
    %1715 = vmatpush.msra.mxu0 0.0
    %1716 = vmatpush.msra.mxu0 0.0
    %1717 = vmatpush.msra.mxu0 0.0
    %1718 = vmatpush.msra.mxu0 0.0
    %1719 = vmatpush.msra.mxu0 0.0
    %1720 = vmatpush.msra.mxu0 0.0
    %1721 = vmatpush.msra.mxu0 0.0
    %1722 = vmatpush.msra.mxu0 0.0
    %1723 = vmatpush.msra.mxu0 0.0
    %1724 = vmatpush.msra.mxu0 0.0
    %1725 = vmatpush.msra.mxu0 0.0
    %1726 = vmatpush.msra.mxu0 %v1015
    %1727 = vmatpush.msra.mxu0 %v993
    %1728 = vmatmul.f32.gmra.mxu0 %v1690
    %v1729 = vpop.f32.mrf.mxu0
    %v1730 = vadd.f32 0.0, %v1729
    %1731 = vdwg.mxu0
    %1732 = vmatpush.msra.mxu0 0.0
    %1733 = vmatpush.msra.mxu0 0.0
    %1734 = vmatpush.msra.mxu0 0.0
    %1735 = vmatpush.msra.mxu0 0.0
    %1736 = vmatpush.msra.mxu0 0.0
    %1737 = vmatpush.msra.mxu0 0.0
    %1738 = vmatpush.msra.mxu0 0.0
    %1739 = vmatpush.msra.mxu0 0.0
    %1740 = vmatpush.msra.mxu0 0.0
    %1741 = vmatpush.msra.mxu0 0.0
    %1742 = vmatpush.msra.mxu0 0.0
    %1743 = vmatpush.msra.mxu0 0.0
    %1744 = vmatpush.msra.mxu0 0.0
    %1745 = vmatpush.msra.mxu0 0.0
    %1746 = vmatpush.msra.mxu0 %v1018
    %1747 = vmatpush.msra.mxu0 %v994
    %1748 = vmatmul.f32.gmra.mxu0 %v1690
    %v1749 = vpop.f32.mrf.mxu0
    %v1750 = vadd.f32 0.0, %v1749
    %1751 = vdwg.mxu0
    %v1752 = vadd.f32 %v1686, %v1710
    %v1753 = vmul.f32 %v1752, 0.5
    %v1754 = vtanh.pop %v1753
    %v1755 = vmul.f32 %v1754, 0.5
    %v1756 = vadd.f32 %v1755, 0.5
    %v1757 = vadd.f32 %v1687, %v1730
    %v1758 = vmul.f32 %v1757, 0.5
    %v1759 = vtanh.pop %v1758
    %v1760 = vmul.f32 %v1759, 0.5
    %v1761 = vadd.f32 %v1760, 0.5
    %v1762 = vadd.f32 %v1750, %v998
    %v1763 = vmul.f32 %v1756, %v1762
    %v1764 = vadd.f32 %v1688, %v1763
    %v1765 = vtanh.pop %v1764
    %v1766 = vsub.f32 1.0, %v1761
    %v1767 = vmul.f32 %v1766, %v1765
    %v1768 = vmul.f32 %v1761, %v1685
    %v1769 = vadd.f32 %v1767, %v1768
    %v1770 = vld [vmem:[#allocation2 + $0xd8] sm:$0xff]
    %v1771 = vld [vmem:[#allocation2 + $0xe0] sm:$0xff]
    %v1772 = vld [vmem:[#allocation2 + $0xe8] sm:$0xff]
    %v1774 = vsel %vm1006, %v1769, 0
    %1776 = vmatpush.msra.mxu0 0.0
    %1777 = vmatpush.msra.mxu0 0.0
    %1778 = vmatpush.msra.mxu0 0.0
    %1779 = vmatpush.msra.mxu0 0.0
    %1780 = vmatpush.msra.mxu0 0.0
    %1781 = vmatpush.msra.mxu0 0.0
    %1782 = vmatpush.msra.mxu0 0.0
    %1783 = vmatpush.msra.mxu0 0.0
    %1784 = vmatpush.msra.mxu0 0.0
    %1785 = vmatpush.msra.mxu0 0.0
    %1786 = vmatpush.msra.mxu0 0.0
    %1787 = vmatpush.msra.mxu0 0.0
    %1788 = vmatpush.msra.mxu0 0.0
    %1789 = vmatpush.msra.mxu0 0.0
    %1790 = vmatpush.msra.mxu0 %v1012
    %1791 = vmatpush.msra.mxu0 %v992
    %1792 = vmatmul.f32.gmra.mxu0 %v1774
    %v1793 = vpop.f32.mrf.mxu0
    %v1794 = vadd.f32 0.0, %v1793
    %1795 = vdwg.mxu0
    %1796 = vmatpush.msra.mxu0 0.0
    %1797 = vmatpush.msra.mxu0 0.0
    %1798 = vmatpush.msra.mxu0 0.0
    %1799 = vmatpush.msra.mxu0 0.0
    %1800 = vmatpush.msra.mxu0 0.0
    %1801 = vmatpush.msra.mxu0 0.0
    %1802 = vmatpush.msra.mxu0 0.0
    %1803 = vmatpush.msra.mxu0 0.0
    %1804 = vmatpush.msra.mxu0 0.0
    %1805 = vmatpush.msra.mxu0 0.0
    %1806 = vmatpush.msra.mxu0 0.0
    %1807 = vmatpush.msra.mxu0 0.0
    %1808 = vmatpush.msra.mxu0 0.0
    %1809 = vmatpush.msra.mxu0 0.0
    %1810 = vmatpush.msra.mxu0 %v1015
    %1811 = vmatpush.msra.mxu0 %v993
    %1812 = vmatmul.f32.gmra.mxu0 %v1774
    %v1813 = vpop.f32.mrf.mxu0
    %v1814 = vadd.f32 0.0, %v1813
    %1815 = vdwg.mxu0
    %1816 = vmatpush.msra.mxu0 0.0
    %1817 = vmatpush.msra.mxu0 0.0
    %1818 = vmatpush.msra.mxu0 0.0
    %1819 = vmatpush.msra.mxu0 0.0
    %1820 = vmatpush.msra.mxu0 0.0
    %1821 = vmatpush.msra.mxu0 0.0
    %1822 = vmatpush.msra.mxu0 0.0
    %1823 = vmatpush.msra.mxu0 0.0
    %1824 = vmatpush.msra.mxu0 0.0
    %1825 = vmatpush.msra.mxu0 0.0
    %1826 = vmatpush.msra.mxu0 0.0
    %1827 = vmatpush.msra.mxu0 0.0
    %1828 = vmatpush.msra.mxu0 0.0
    %1829 = vmatpush.msra.mxu0 0.0
    %1830 = vmatpush.msra.mxu0 %v1018
    %1831 = vmatpush.msra.mxu0 %v994
    %1832 = vmatmul.f32.gmra.mxu0 %v1774
    %v1833 = vpop.f32.mrf.mxu0
    %v1834 = vadd.f32 0.0, %v1833
    %1835 = vdwg.mxu0
    %v1836 = vadd.f32 %v1770, %v1794
    %v1837 = vmul.f32 %v1836, 0.5
    %v1838 = vtanh.pop %v1837
    %v1839 = vmul.f32 %v1838, 0.5
    %v1840 = vadd.f32 %v1839, 0.5
    %v1841 = vadd.f32 %v1771, %v1814
    %v1842 = vmul.f32 %v1841, 0.5
    %v1843 = vtanh.pop %v1842
    %v1844 = vmul.f32 %v1843, 0.5
    %v1845 = vadd.f32 %v1844, 0.5
    %v1846 = vadd.f32 %v1834, %v998
    %v1847 = vmul.f32 %v1840, %v1846
    %v1848 = vadd.f32 %v1772, %v1847
    %v1849 = vtanh.pop %v1848
    %v1850 = vsub.f32 1.0, %v1845
    %v1851 = vmul.f32 %v1850, %v1849
    %v1852 = vmul.f32 %v1845, %v1769
    %v1853 = vadd.f32 %v1851, %v1852
    %v1854 = vld [vmem:[#allocation2 + $0xf0] sm:$0xff]
    %v1855 = vld [vmem:[#allocation2 + $0xf8] sm:$0xff]
    %v1856 = vld [vmem:[#allocation2 + $0x100] sm:$0xff]
    %v1858 = vsel %vm1006, %v1853, 0
    %1860 = vmatpush.msra.mxu0 0.0
    %1861 = vmatpush.msra.mxu0 0.0
    %1862 = vmatpush.msra.mxu0 0.0
    %1863 = vmatpush.msra.mxu0 0.0
    %1864 = vmatpush.msra.mxu0 0.0
    %1865 = vmatpush.msra.mxu0 0.0
    %1866 = vmatpush.msra.mxu0 0.0
    %1867 = vmatpush.msra.mxu0 0.0
    %1868 = vmatpush.msra.mxu0 0.0
    %1869 = vmatpush.msra.mxu0 0.0
    %1870 = vmatpush.msra.mxu0 0.0
    %1871 = vmatpush.msra.mxu0 0.0
    %1872 = vmatpush.msra.mxu0 0.0
    %1873 = vmatpush.msra.mxu0 0.0
    %1874 = vmatpush.msra.mxu0 %v1012
    %1875 = vmatpush.msra.mxu0 %v992
    %1876 = vmatmul.f32.gmra.mxu0 %v1858
    %v1877 = vpop.f32.mrf.mxu0
    %v1878 = vadd.f32 0.0, %v1877
    %1879 = vdwg.mxu0
    %1880 = vmatpush.msra.mxu0 0.0
    %1881 = vmatpush.msra.mxu0 0.0
    %1882 = vmatpush.msra.mxu0 0.0
    %1883 = vmatpush.msra.mxu0 0.0
    %1884 = vmatpush.msra.mxu0 0.0
    %1885 = vmatpush.msra.mxu0 0.0
    %1886 = vmatpush.msra.mxu0 0.0
    %1887 = vmatpush.msra.mxu0 0.0
    %1888 = vmatpush.msra.mxu0 0.0
    %1889 = vmatpush.msra.mxu0 0.0
    %1890 = vmatpush.msra.mxu0 0.0
    %1891 = vmatpush.msra.mxu0 0.0
    %1892 = vmatpush.msra.mxu0 0.0
    %1893 = vmatpush.msra.mxu0 0.0
    %1894 = vmatpush.msra.mxu0 %v1015
    %1895 = vmatpush.msra.mxu0 %v993
    %1896 = vmatmul.f32.gmra.mxu0 %v1858
    %v1897 = vpop.f32.mrf.mxu0
    %v1898 = vadd.f32 0.0, %v1897
    %1899 = vdwg.mxu0
    %1900 = vmatpush.msra.mxu0 0.0
    %1901 = vmatpush.msra.mxu0 0.0
    %1902 = vmatpush.msra.mxu0 0.0
    %1903 = vmatpush.msra.mxu0 0.0
    %1904 = vmatpush.msra.mxu0 0.0
    %1905 = vmatpush.msra.mxu0 0.0
    %1906 = vmatpush.msra.mxu0 0.0
    %1907 = vmatpush.msra.mxu0 0.0
    %1908 = vmatpush.msra.mxu0 0.0
    %1909 = vmatpush.msra.mxu0 0.0
    %1910 = vmatpush.msra.mxu0 0.0
    %1911 = vmatpush.msra.mxu0 0.0
    %1912 = vmatpush.msra.mxu0 0.0
    %1913 = vmatpush.msra.mxu0 0.0
    %1914 = vmatpush.msra.mxu0 %v1018
    %1915 = vmatpush.msra.mxu0 %v994
    %1916 = vmatmul.f32.gmra.mxu0 %v1858
    %v1917 = vpop.f32.mrf.mxu0
    %v1918 = vadd.f32 0.0, %v1917
    %1919 = vdwg.mxu0
    %v1920 = vadd.f32 %v1854, %v1878
    %v1921 = vmul.f32 %v1920, 0.5
    %v1922 = vtanh.pop %v1921
    %v1923 = vmul.f32 %v1922, 0.5
    %v1924 = vadd.f32 %v1923, 0.5
    %v1925 = vadd.f32 %v1855, %v1898
    %v1926 = vmul.f32 %v1925, 0.5
    %v1927 = vtanh.pop %v1926
    %v1928 = vmul.f32 %v1927, 0.5
    %v1929 = vadd.f32 %v1928, 0.5
    %v1930 = vadd.f32 %v1918, %v998
    %v1931 = vmul.f32 %v1924, %v1930
    %v1932 = vadd.f32 %v1856, %v1931
    %v1933 = vtanh.pop %v1932
    %v1934 = vsub.f32 1.0, %v1929
    %v1935 = vmul.f32 %v1934, %v1933
    %v1936 = vmul.f32 %v1929, %v1853
    %v1937 = vadd.f32 %v1935, %v1936
    %v1938 = vld [vmem:[#allocation2 + $0x108] sm:$0xff]
    %v1939 = vld [vmem:[#allocation2 + $0x110] sm:$0xff]
    %v1940 = vld [vmem:[#allocation2 + $0x118] sm:$0xff]
    %v1942 = vsel %vm1006, %v1937, 0
    %1944 = vmatpush.msra.mxu0 0.0
    %1945 = vmatpush.msra.mxu0 0.0
    %1946 = vmatpush.msra.mxu0 0.0
    %1947 = vmatpush.msra.mxu0 0.0
    %1948 = vmatpush.msra.mxu0 0.0
    %1949 = vmatpush.msra.mxu0 0.0
    %1950 = vmatpush.msra.mxu0 0.0
    %1951 = vmatpush.msra.mxu0 0.0
    %1952 = vmatpush.msra.mxu0 0.0
    %1953 = vmatpush.msra.mxu0 0.0
    %1954 = vmatpush.msra.mxu0 0.0
    %1955 = vmatpush.msra.mxu0 0.0
    %1956 = vmatpush.msra.mxu0 0.0
    %1957 = vmatpush.msra.mxu0 0.0
    %1958 = vmatpush.msra.mxu0 %v1012
    %1959 = vmatpush.msra.mxu0 %v992
    %1960 = vmatmul.f32.gmra.mxu0 %v1942
    %v1961 = vpop.f32.mrf.mxu0
    %v1962 = vadd.f32 0.0, %v1961
    %1963 = vdwg.mxu0
    %1964 = vmatpush.msra.mxu0 0.0
    %1965 = vmatpush.msra.mxu0 0.0
    %1966 = vmatpush.msra.mxu0 0.0
    %1967 = vmatpush.msra.mxu0 0.0
    %1968 = vmatpush.msra.mxu0 0.0
    %1969 = vmatpush.msra.mxu0 0.0
    %1970 = vmatpush.msra.mxu0 0.0
    %1971 = vmatpush.msra.mxu0 0.0
    %1972 = vmatpush.msra.mxu0 0.0
    %1973 = vmatpush.msra.mxu0 0.0
    %1974 = vmatpush.msra.mxu0 0.0
    %1975 = vmatpush.msra.mxu0 0.0
    %1976 = vmatpush.msra.mxu0 0.0
    %1977 = vmatpush.msra.mxu0 0.0
    %1978 = vmatpush.msra.mxu0 %v1015
    %1979 = vmatpush.msra.mxu0 %v993
    %1980 = vmatmul.f32.gmra.mxu0 %v1942
    %v1981 = vpop.f32.mrf.mxu0
    %v1982 = vadd.f32 0.0, %v1981
    %1983 = vdwg.mxu0
    %1984 = vmatpush.msra.mxu0 0.0
    %1985 = vmatpush.msra.mxu0 0.0
    %1986 = vmatpush.msra.mxu0 0.0
    %1987 = vmatpush.msra.mxu0 0.0
    %1988 = vmatpush.msra.mxu0 0.0
    %1989 = vmatpush.msra.mxu0 0.0
    %1990 = vmatpush.msra.mxu0 0.0
    %1991 = vmatpush.msra.mxu0 0.0
    %1992 = vmatpush.msra.mxu0 0.0
    %1993 = vmatpush.msra.mxu0 0.0
    %1994 = vmatpush.msra.mxu0 0.0
    %1995 = vmatpush.msra.mxu0 0.0
    %1996 = vmatpush.msra.mxu0 0.0
    %1997 = vmatpush.msra.mxu0 0.0
    %1998 = vmatpush.msra.mxu0 %v1018
    %1999 = vmatpush.msra.mxu0 %v994
    %2000 = vmatmul.f32.gmra.mxu0 %v1942
    %v2001 = vpop.f32.mrf.mxu0
    %v2002 = vadd.f32 0.0, %v2001
    %2003 = vdwg.mxu0
    %v2004 = vadd.f32 %v1938, %v1962
    %v2005 = vmul.f32 %v2004, 0.5
    %v2006 = vtanh.pop %v2005
    %v2007 = vmul.f32 %v2006, 0.5
    %v2008 = vadd.f32 %v2007, 0.5
    %v2009 = vadd.f32 %v1939, %v1982
    %v2010 = vmul.f32 %v2009, 0.5
    %v2011 = vtanh.pop %v2010
    %v2012 = vmul.f32 %v2011, 0.5
    %v2013 = vadd.f32 %v2012, 0.5
    %v2014 = vadd.f32 %v2002, %v998
    %v2015 = vmul.f32 %v2008, %v2014
    %v2016 = vadd.f32 %v1940, %v2015
    %v2017 = vtanh.pop %v2016
    %v2018 = vsub.f32 1.0, %v2013
    %v2019 = vmul.f32 %v2018, %v2017
    %v2020 = vmul.f32 %v2013, %v1937
    %v2021 = vadd.f32 %v2019, %v2020
    %v2022 = vld [vmem:[#allocation2 + $0x120] sm:$0xff]
    %v2023 = vld [vmem:[#allocation2 + $0x128] sm:$0xff]
    %v2024 = vld [vmem:[#allocation2 + $0x130] sm:$0xff]
    %v2026 = vsel %vm1006, %v2021, 0
    %2028 = vmatpush.msra.mxu0 0.0
    %2029 = vmatpush.msra.mxu0 0.0
    %2030 = vmatpush.msra.mxu0 0.0
    %2031 = vmatpush.msra.mxu0 0.0
    %2032 = vmatpush.msra.mxu0 0.0
    %2033 = vmatpush.msra.mxu0 0.0
    %2034 = vmatpush.msra.mxu0 0.0
    %2035 = vmatpush.msra.mxu0 0.0
    %2036 = vmatpush.msra.mxu0 0.0
    %2037 = vmatpush.msra.mxu0 0.0
    %2038 = vmatpush.msra.mxu0 0.0
    %2039 = vmatpush.msra.mxu0 0.0
    %2040 = vmatpush.msra.mxu0 0.0
    %2041 = vmatpush.msra.mxu0 0.0
    %2042 = vmatpush.msra.mxu0 %v1012
    %2043 = vmatpush.msra.mxu0 %v992
    %2044 = vmatmul.f32.gmra.mxu0 %v2026
    %v2045 = vpop.f32.mrf.mxu0
    %v2046 = vadd.f32 0.0, %v2045
    %2047 = vdwg.mxu0
    %2048 = vmatpush.msra.mxu0 0.0
    %2049 = vmatpush.msra.mxu0 0.0
    %2050 = vmatpush.msra.mxu0 0.0
    %2051 = vmatpush.msra.mxu0 0.0
    %2052 = vmatpush.msra.mxu0 0.0
    %2053 = vmatpush.msra.mxu0 0.0
    %2054 = vmatpush.msra.mxu0 0.0
    %2055 = vmatpush.msra.mxu0 0.0
    %2056 = vmatpush.msra.mxu0 0.0
    %2057 = vmatpush.msra.mxu0 0.0
    %2058 = vmatpush.msra.mxu0 0.0
    %2059 = vmatpush.msra.mxu0 0.0
    %2060 = vmatpush.msra.mxu0 0.0
    %2061 = vmatpush.msra.mxu0 0.0
    %2062 = vmatpush.msra.mxu0 %v1015
    %2063 = vmatpush.msra.mxu0 %v993
    %2064 = vmatmul.f32.gmra.mxu0 %v2026
    %v2065 = vpop.f32.mrf.mxu0
    %v2066 = vadd.f32 0.0, %v2065
    %2067 = vdwg.mxu0
    %2068 = vmatpush.msra.mxu0 0.0
    %2069 = vmatpush.msra.mxu0 0.0
    %2070 = vmatpush.msra.mxu0 0.0
    %2071 = vmatpush.msra.mxu0 0.0
    %2072 = vmatpush.msra.mxu0 0.0
    %2073 = vmatpush.msra.mxu0 0.0
    %2074 = vmatpush.msra.mxu0 0.0
    %2075 = vmatpush.msra.mxu0 0.0
    %2076 = vmatpush.msra.mxu0 0.0
    %2077 = vmatpush.msra.mxu0 0.0
    %2078 = vmatpush.msra.mxu0 0.0
    %2079 = vmatpush.msra.mxu0 0.0
    %2080 = vmatpush.msra.mxu0 0.0
    %2081 = vmatpush.msra.mxu0 0.0
    %2082 = vmatpush.msra.mxu0 %v1018
    %2083 = vmatpush.msra.mxu0 %v994
    %2084 = vmatmul.f32.gmra.mxu0 %v2026
    %v2085 = vpop.f32.mrf.mxu0
    %v2086 = vadd.f32 0.0, %v2085
    %2087 = vdwg.mxu0
    %v2088 = vadd.f32 %v2022, %v2046
    %v2089 = vmul.f32 %v2088, 0.5
    %v2090 = vtanh.pop %v2089
    %v2091 = vmul.f32 %v2090, 0.5
    %v2092 = vadd.f32 %v2091, 0.5
    %v2093 = vadd.f32 %v2023, %v2066
    %v2094 = vmul.f32 %v2093, 0.5
    %v2095 = vtanh.pop %v2094
    %v2096 = vmul.f32 %v2095, 0.5
    %v2097 = vadd.f32 %v2096, 0.5
    %v2098 = vadd.f32 %v2086, %v998
    %v2099 = vmul.f32 %v2092, %v2098
    %v2100 = vadd.f32 %v2024, %v2099
    %v2101 = vtanh.pop %v2100
    %v2102 = vsub.f32 1.0, %v2097
    %v2103 = vmul.f32 %v2102, %v2101
    %v2104 = vmul.f32 %v2097, %v2021
    %v2105 = vadd.f32 %v2103, %v2104
    %v2106 = vld [vmem:[#allocation2 + $0x138] sm:$0xff]
    %v2107 = vld [vmem:[#allocation2 + $0x140] sm:$0xff]
    %v2108 = vld [vmem:[#allocation2 + $0x148] sm:$0xff]
    %v2110 = vsel %vm1006, %v2105, 0
    %2112 = vmatpush.msra.mxu0 0.0
    %2113 = vmatpush.msra.mxu0 0.0
    %2114 = vmatpush.msra.mxu0 0.0
    %2115 = vmatpush.msra.mxu0 0.0
    %2116 = vmatpush.msra.mxu0 0.0
    %2117 = vmatpush.msra.mxu0 0.0
    %2118 = vmatpush.msra.mxu0 0.0
    %2119 = vmatpush.msra.mxu0 0.0
    %2120 = vmatpush.msra.mxu0 0.0
    %2121 = vmatpush.msra.mxu0 0.0
    %2122 = vmatpush.msra.mxu0 0.0
    %2123 = vmatpush.msra.mxu0 0.0
    %2124 = vmatpush.msra.mxu0 0.0
    %2125 = vmatpush.msra.mxu0 0.0
    %2126 = vmatpush.msra.mxu0 %v1012
    %2127 = vmatpush.msra.mxu0 %v992
    %2128 = vmatmul.f32.gmra.mxu0 %v2110
    %v2129 = vpop.f32.mrf.mxu0
    %v2130 = vadd.f32 0.0, %v2129
    %2131 = vdwg.mxu0
    %2132 = vmatpush.msra.mxu0 0.0
    %2133 = vmatpush.msra.mxu0 0.0
    %2134 = vmatpush.msra.mxu0 0.0
    %2135 = vmatpush.msra.mxu0 0.0
    %2136 = vmatpush.msra.mxu0 0.0
    %2137 = vmatpush.msra.mxu0 0.0
    %2138 = vmatpush.msra.mxu0 0.0
    %2139 = vmatpush.msra.mxu0 0.0
    %2140 = vmatpush.msra.mxu0 0.0
    %2141 = vmatpush.msra.mxu0 0.0
    %2142 = vmatpush.msra.mxu0 0.0
    %2143 = vmatpush.msra.mxu0 0.0
    %2144 = vmatpush.msra.mxu0 0.0
    %2145 = vmatpush.msra.mxu0 0.0
    %2146 = vmatpush.msra.mxu0 %v1015
    %2147 = vmatpush.msra.mxu0 %v993
    %2148 = vmatmul.f32.gmra.mxu0 %v2110
    %v2149 = vpop.f32.mrf.mxu0
    %v2150 = vadd.f32 0.0, %v2149
    %2151 = vdwg.mxu0
    %2152 = vmatpush.msra.mxu0 0.0
    %2153 = vmatpush.msra.mxu0 0.0
    %2154 = vmatpush.msra.mxu0 0.0
    %2155 = vmatpush.msra.mxu0 0.0
    %2156 = vmatpush.msra.mxu0 0.0
    %2157 = vmatpush.msra.mxu0 0.0
    %2158 = vmatpush.msra.mxu0 0.0
    %2159 = vmatpush.msra.mxu0 0.0
    %2160 = vmatpush.msra.mxu0 0.0
    %2161 = vmatpush.msra.mxu0 0.0
    %2162 = vmatpush.msra.mxu0 0.0
    %2163 = vmatpush.msra.mxu0 0.0
    %2164 = vmatpush.msra.mxu0 0.0
    %2165 = vmatpush.msra.mxu0 0.0
    %2166 = vmatpush.msra.mxu0 %v1018
    %2167 = vmatpush.msra.mxu0 %v994
    %2168 = vmatmul.f32.gmra.mxu0 %v2110
    %v2169 = vpop.f32.mrf.mxu0
    %v2170 = vadd.f32 0.0, %v2169
    %2171 = vdwg.mxu0
    %v2172 = vadd.f32 %v2106, %v2130
    %v2173 = vmul.f32 %v2172, 0.5
    %v2174 = vtanh.pop %v2173
    %v2175 = vmul.f32 %v2174, 0.5
    %v2176 = vadd.f32 %v2175, 0.5
    %v2177 = vadd.f32 %v2107, %v2150
    %v2178 = vmul.f32 %v2177, 0.5
    %v2179 = vtanh.pop %v2178
    %v2180 = vmul.f32 %v2179, 0.5
    %v2181 = vadd.f32 %v2180, 0.5
    %v2182 = vadd.f32 %v2170, %v998
    %v2183 = vmul.f32 %v2176, %v2182
    %v2184 = vadd.f32 %v2108, %v2183
    %v2185 = vtanh.pop %v2184
    %v2186 = vsub.f32 1.0, %v2181
    %v2187 = vmul.f32 %v2186, %v2185
    %v2188 = vmul.f32 %v2181, %v2105
    %v2189 = vadd.f32 %v2187, %v2188
    %v2190 = vld [vmem:[#allocation3] sm:$0xff]
    %v2191 = vld [vmem:[#allocation3 + $0x8] sm:$0xff]
    %v2192 = vld [vmem:[#allocation3 + $0x10] sm:$0xff]
    %v2193 = vld [vmem:[#allocation3 + $0x18] sm:$0xff]
    %v2194 = vld [vmem:[#allocation3 + $0x20] sm:$0xff]
    %v2195 = vld [vmem:[#allocation3 + $0x28] sm:$0xff]
    %vm2196 = vcmask 39936
    %v2197 = vsel %vm2196, 0.0, 0
    %vm2199 = vcmask 1044480
    %v2201 = vsel %vm2199, %v999, 0
    %v2204 = vsel %vm2199, %v1000, 0
    %v2207 = vsel %vm2199, %v1001, 0
    %2209 = vmatpush.msra.mxu0 0.0
    %2210 = vmatpush.msra.mxu0 0.0
    %2211 = vmatpush.msra.mxu0 0.0
    %2212 = vmatpush.msra.mxu0 0.0
    %2213 = vmatpush.msra.mxu0 0.0
    %2214 = vmatpush.msra.mxu0 0.0
    %2215 = vmatpush.msra.mxu0 0.0
    %2216 = vmatpush.msra.mxu0 0.0
    %2217 = vmatpush.msra.mxu0 0.0
    %2218 = vmatpush.msra.mxu0 0.0
    %2219 = vmatpush.msra.mxu0 0.0
    %2220 = vmatpush.msra.mxu0 0.0
    %2221 = vmatpush.msra.mxu0 0.0
    %2222 = vmatpush.msra.mxu0 0.0
    %2223 = vmatpush.msra.mxu0 0.0
    %2224 = vmatpush.msra.mxu0 %v2201
    %2225 = vmatmul.f32.gmra.mxu0 %v2197
    %v2226 = vpop.f32.mrf.mxu0
    %v2227 = vadd.f32 0.0, %v2226
    %2228 = vmatmul.f32.gmra.mxu0 %v2197
    %v2229 = vpop.f32.mrf.mxu0
    %v2230 = vadd.f32 0.0, %v2229
    %2231 = vdwg.mxu0
    %2232 = vmatpush.msra.mxu0 0.0
    %2233 = vmatpush.msra.mxu0 0.0
    %2234 = vmatpush.msra.mxu0 0.0
    %2235 = vmatpush.msra.mxu0 0.0
    %2236 = vmatpush.msra.mxu0 0.0
    %2237 = vmatpush.msra.mxu0 0.0
    %2238 = vmatpush.msra.mxu0 0.0
    %2239 = vmatpush.msra.mxu0 0.0
    %2240 = vmatpush.msra.mxu0 0.0
    %2241 = vmatpush.msra.mxu0 0.0
    %2242 = vmatpush.msra.mxu0 0.0
    %2243 = vmatpush.msra.mxu0 0.0
    %2244 = vmatpush.msra.mxu0 0.0
    %2245 = vmatpush.msra.mxu0 0.0
    %2246 = vmatpush.msra.mxu0 0.0
    %2247 = vmatpush.msra.mxu0 %v2204
    %2248 = vmatmul.f32.gmra.mxu0 %v2197
    %v2249 = vpop.f32.mrf.mxu0
    %v2250 = vadd.f32 0.0, %v2249
    %2251 = vmatmul.f32.gmra.mxu0 %v2197
    %v2252 = vpop.f32.mrf.mxu0
    %v2253 = vadd.f32 0.0, %v2252
    %2254 = vdwg.mxu0
    %2255 = vmatpush.msra.mxu0 0.0
    %2256 = vmatpush.msra.mxu0 0.0
    %2257 = vmatpush.msra.mxu0 0.0
    %2258 = vmatpush.msra.mxu0 0.0
    %2259 = vmatpush.msra.mxu0 0.0
    %2260 = vmatpush.msra.mxu0 0.0
    %2261 = vmatpush.msra.mxu0 0.0
    %2262 = vmatpush.msra.mxu0 0.0
    %2263 = vmatpush.msra.mxu0 0.0
    %2264 = vmatpush.msra.mxu0 0.0
    %2265 = vmatpush.msra.mxu0 0.0
    %2266 = vmatpush.msra.mxu0 0.0
    %2267 = vmatpush.msra.mxu0 0.0
    %2268 = vmatpush.msra.mxu0 0.0
    %2269 = vmatpush.msra.mxu0 0.0
    %2270 = vmatpush.msra.mxu0 %v2207
    %2271 = vmatmul.f32.gmra.mxu0 %v2197
    %v2272 = vpop.f32.mrf.mxu0
    %v2273 = vadd.f32 0.0, %v2272
    %2274 = vmatmul.f32.gmra.mxu0 %v2197
    %v2275 = vpop.f32.mrf.mxu0
    %v2276 = vadd.f32 0.0, %v2275
    %2277 = vdwg.mxu0
    %v2278 = vadd.f32 %v2190, %v2227
    %v2279 = vadd.f32 %v2193, %v2230
    %v2280 = vmul.f32 %v2278, 0.5
    %v2281 = vmul.f32 %v2279, 0.5
    %v2282 = vtanh.pop %v2280
    %v2283 = vtanh.pop %v2281
    %v2284 = vmul.f32 %v2282, 0.5
    %v2285 = vmul.f32 %v2283, 0.5
    %v2286 = vadd.f32 %v2284, 0.5
    %v2287 = vadd.f32 %v2285, 0.5
    %v2288 = vadd.f32 %v2191, %v2250
    %v2289 = vadd.f32 %v2194, %v2253
    %v2290 = vmul.f32 %v2288, 0.5
    %v2291 = vmul.f32 %v2289, 0.5
    %v2292 = vtanh.pop %v2290
    %v2293 = vtanh.pop %v2291
    %v2294 = vmul.f32 %v2292, 0.5
    %v2295 = vmul.f32 %v2293, 0.5
    %v2296 = vadd.f32 %v2294, 0.5
    %v2297 = vadd.f32 %v2295, 0.5
    %v2298 = vadd.f32 %v2273, %v1002
    %v2299 = vadd.f32 %v2276, %v1002
    %v2300 = vmul.f32 %v2286, %v2298
    %v2301 = vmul.f32 %v2287, %v2299
    %v2302 = vadd.f32 %v2192, %v2300
    %v2303 = vadd.f32 %v2195, %v2301
    %v2304 = vtanh.pop %v2302
    %v2305 = vtanh.pop %v2303
    %v2306 = vsub.f32 1.0, %v2296
    %v2307 = vsub.f32 1.0, %v2297
    %v2308 = vmul.f32 %v2306, %v2304
    %v2309 = vmul.f32 %v2307, %v2305
    %v2310 = vmul.f32 %v2296, 0.0
    %v2311 = vmul.f32 %v2297, 0.0
    %v2312 = vadd.f32 %v2308, %v2310
    %v2313 = vadd.f32 %v2309, %v2311
    %v2314 = vld [vmem:[#allocation3 + $0x30] sm:$0xff]
    %v2315 = vld [vmem:[#allocation3 + $0x38] sm:$0xff]
    %v2316 = vld [vmem:[#allocation3 + $0x40] sm:$0xff]
    %v2317 = vld [vmem:[#allocation3 + $0x48] sm:$0xff]
    %v2318 = vld [vmem:[#allocation3 + $0x50] sm:$0xff]
    %v2319 = vld [vmem:[#allocation3 + $0x58] sm:$0xff]
    %v2321 = vsel %vm2196, %v2312, 0
    %v2324 = vsel %vm2196, %v2313, 0
    %2326 = vmatpush.msra.mxu0 0.0
    %2327 = vmatpush.msra.mxu0 0.0
    %2328 = vmatpush.msra.mxu0 0.0
    %2329 = vmatpush.msra.mxu0 0.0
    %2330 = vmatpush.msra.mxu0 0.0
    %2331 = vmatpush.msra.mxu0 0.0
    %2332 = vmatpush.msra.mxu0 0.0
    %2333 = vmatpush.msra.mxu0 0.0
    %2334 = vmatpush.msra.mxu0 0.0
    %2335 = vmatpush.msra.mxu0 0.0
    %2336 = vmatpush.msra.mxu0 0.0
    %2337 = vmatpush.msra.mxu0 0.0
    %2338 = vmatpush.msra.mxu0 0.0
    %2339 = vmatpush.msra.mxu0 0.0
    %2340 = vmatpush.msra.mxu0 0.0
    %2341 = vmatpush.msra.mxu0 %v2201
    %2342 = vmatmul.f32.gmra.mxu0 %v2321
    %v2343 = vpop.f32.mrf.mxu0
    %v2344 = vadd.f32 0.0, %v2343
    %2345 = vmatmul.f32.gmra.mxu0 %v2324
    %v2346 = vpop.f32.mrf.mxu0
    %v2347 = vadd.f32 0.0, %v2346
    %2348 = vdwg.mxu0
    %2349 = vmatpush.msra.mxu0 0.0
    %2350 = vmatpush.msra.mxu0 0.0
    %2351 = vmatpush.msra.mxu0 0.0
    %2352 = vmatpush.msra.mxu0 0.0
    %2353 = vmatpush.msra.mxu0 0.0
    %2354 = vmatpush.msra.mxu0 0.0
    %2355 = vmatpush.msra.mxu0 0.0
    %2356 = vmatpush.msra.mxu0 0.0
    %2357 = vmatpush.msra.mxu0 0.0
    %2358 = vmatpush.msra.mxu0 0.0
    %2359 = vmatpush.msra.mxu0 0.0
    %2360 = vmatpush.msra.mxu0 0.0
    %2361 = vmatpush.msra.mxu0 0.0
    %2362 = vmatpush.msra.mxu0 0.0
    %2363 = vmatpush.msra.mxu0 0.0
    %2364 = vmatpush.msra.mxu0 %v2204
    %2365 = vmatmul.f32.gmra.mxu0 %v2321
    %v2366 = vpop.f32.mrf.mxu0
    %v2367 = vadd.f32 0.0, %v2366
    %2368 = vmatmul.f32.gmra.mxu0 %v2324
    %v2369 = vpop.f32.mrf.mxu0
    %v2370 = vadd.f32 0.0, %v2369
    %2371 = vdwg.mxu0
    %2372 = vmatpush.msra.mxu0 0.0
    %2373 = vmatpush.msra.mxu0 0.0
    %2374 = vmatpush.msra.mxu0 0.0
    %2375 = vmatpush.msra.mxu0 0.0
    %2376 = vmatpush.msra.mxu0 0.0
    %2377 = vmatpush.msra.mxu0 0.0
    %2378 = vmatpush.msra.mxu0 0.0
    %2379 = vmatpush.msra.mxu0 0.0
    %2380 = vmatpush.msra.mxu0 0.0
    %2381 = vmatpush.msra.mxu0 0.0
    %2382 = vmatpush.msra.mxu0 0.0
    %2383 = vmatpush.msra.mxu0 0.0
    %2384 = vmatpush.msra.mxu0 0.0
    %2385 = vmatpush.msra.mxu0 0.0
    %2386 = vmatpush.msra.mxu0 0.0
    %2387 = vmatpush.msra.mxu0 %v2207
    %2388 = vmatmul.f32.gmra.mxu0 %v2321
    %v2389 = vpop.f32.mrf.mxu0
    %v2390 = vadd.f32 0.0, %v2389
    %2391 = vmatmul.f32.gmra.mxu0 %v2324
    %v2392 = vpop.f32.mrf.mxu0
    %v2393 = vadd.f32 0.0, %v2392
    %2394 = vdwg.mxu0
    %v2395 = vadd.f32 %v2314, %v2344
    %v2396 = vadd.f32 %v2317, %v2347
    %v2397 = vmul.f32 %v2395, 0.5
    %v2398 = vmul.f32 %v2396, 0.5
    %v2399 = vtanh.pop %v2397
    %v2400 = vtanh.pop %v2398
    %v2401 = vmul.f32 %v2399, 0.5
    %v2402 = vmul.f32 %v2400, 0.5
    %v2403 = vadd.f32 %v2401, 0.5
    %v2404 = vadd.f32 %v2402, 0.5
    %v2405 = vadd.f32 %v2315, %v2367
    %v2406 = vadd.f32 %v2318, %v2370
    %v2407 = vmul.f32 %v2405, 0.5
    %v2408 = vmul.f32 %v2406, 0.5
    %v2409 = vtanh.pop %v2407
    %v2410 = vtanh.pop %v2408
    %v2411 = vmul.f32 %v2409, 0.5
    %v2412 = vmul.f32 %v2410, 0.5
    %v2413 = vadd.f32 %v2411, 0.5
    %v2414 = vadd.f32 %v2412, 0.5
    %v2415 = vadd.f32 %v2390, %v1002
    %v2416 = vadd.f32 %v2393, %v1002
    %v2417 = vmul.f32 %v2403, %v2415
    %v2418 = vmul.f32 %v2404, %v2416
    %v2419 = vadd.f32 %v2316, %v2417
    %v2420 = vadd.f32 %v2319, %v2418
    %v2421 = vtanh.pop %v2419
    %v2422 = vtanh.pop %v2420
    %v2423 = vsub.f32 1.0, %v2413
    %v2424 = vsub.f32 1.0, %v2414
    %v2425 = vmul.f32 %v2423, %v2421
    %v2426 = vmul.f32 %v2424, %v2422
    %v2427 = vmul.f32 %v2413, %v2312
    %v2428 = vmul.f32 %v2414, %v2313
    %v2429 = vadd.f32 %v2425, %v2427
    %v2430 = vadd.f32 %v2426, %v2428
    %v2431 = vld [vmem:[#allocation3 + $0x60] sm:$0xff]
    %v2432 = vld [vmem:[#allocation3 + $0x68] sm:$0xff]
    %v2433 = vld [vmem:[#allocation3 + $0x70] sm:$0xff]
    %v2434 = vld [vmem:[#allocation3 + $0x78] sm:$0xff]
    %v2435 = vld [vmem:[#allocation3 + $0x80] sm:$0xff]
    %v2436 = vld [vmem:[#allocation3 + $0x88] sm:$0xff]
    %v2438 = vsel %vm2196, %v2429, 0
    %v2441 = vsel %vm2196, %v2430, 0
    %2443 = vmatpush.msra.mxu0 0.0
    %2444 = vmatpush.msra.mxu0 0.0
    %2445 = vmatpush.msra.mxu0 0.0
    %2446 = vmatpush.msra.mxu0 0.0
    %2447 = vmatpush.msra.mxu0 0.0
    %2448 = vmatpush.msra.mxu0 0.0
    %2449 = vmatpush.msra.mxu0 0.0
    %2450 = vmatpush.msra.mxu0 0.0
    %2451 = vmatpush.msra.mxu0 0.0
    %2452 = vmatpush.msra.mxu0 0.0
    %2453 = vmatpush.msra.mxu0 0.0
    %2454 = vmatpush.msra.mxu0 0.0
    %2455 = vmatpush.msra.mxu0 0.0
    %2456 = vmatpush.msra.mxu0 0.0
    %2457 = vmatpush.msra.mxu0 0.0
    %2458 = vmatpush.msra.mxu0 %v2201
    %2459 = vmatmul.f32.gmra.mxu0 %v2438
    %v2460 = vpop.f32.mrf.mxu0
    %v2461 = vadd.f32 0.0, %v2460
    %2462 = vmatmul.f32.gmra.mxu0 %v2441
    %v2463 = vpop.f32.mrf.mxu0
    %v2464 = vadd.f32 0.0, %v2463
    %2465 = vdwg.mxu0
    %2466 = vmatpush.msra.mxu0 0.0
    %2467 = vmatpush.msra.mxu0 0.0
    %2468 = vmatpush.msra.mxu0 0.0
    %2469 = vmatpush.msra.mxu0 0.0
    %2470 = vmatpush.msra.mxu0 0.0
    %2471 = vmatpush.msra.mxu0 0.0
    %2472 = vmatpush.msra.mxu0 0.0
    %2473 = vmatpush.msra.mxu0 0.0
    %2474 = vmatpush.msra.mxu0 0.0
    %2475 = vmatpush.msra.mxu0 0.0
    %2476 = vmatpush.msra.mxu0 0.0
    %2477 = vmatpush.msra.mxu0 0.0
    %2478 = vmatpush.msra.mxu0 0.0
    %2479 = vmatpush.msra.mxu0 0.0
    %2480 = vmatpush.msra.mxu0 0.0
    %2481 = vmatpush.msra.mxu0 %v2204
    %2482 = vmatmul.f32.gmra.mxu0 %v2438
    %v2483 = vpop.f32.mrf.mxu0
    %v2484 = vadd.f32 0.0, %v2483
    %2485 = vmatmul.f32.gmra.mxu0 %v2441
    %v2486 = vpop.f32.mrf.mxu0
    %v2487 = vadd.f32 0.0, %v2486
    %2488 = vdwg.mxu0
    %2489 = vmatpush.msra.mxu0 0.0
    %2490 = vmatpush.msra.mxu0 0.0
    %2491 = vmatpush.msra.mxu0 0.0
    %2492 = vmatpush.msra.mxu0 0.0
    %2493 = vmatpush.msra.mxu0 0.0
    %2494 = vmatpush.msra.mxu0 0.0
    %2495 = vmatpush.msra.mxu0 0.0
    %2496 = vmatpush.msra.mxu0 0.0
    %2497 = vmatpush.msra.mxu0 0.0
    %2498 = vmatpush.msra.mxu0 0.0
    %2499 = vmatpush.msra.mxu0 0.0
    %2500 = vmatpush.msra.mxu0 0.0
    %2501 = vmatpush.msra.mxu0 0.0
    %2502 = vmatpush.msra.mxu0 0.0
    %2503 = vmatpush.msra.mxu0 0.0
    %2504 = vmatpush.msra.mxu0 %v2207
    %2505 = vmatmul.f32.gmra.mxu0 %v2438
    %v2506 = vpop.f32.mrf.mxu0
    %v2507 = vadd.f32 0.0, %v2506
    %2508 = vmatmul.f32.gmra.mxu0 %v2441
    %v2509 = vpop.f32.mrf.mxu0
    %v2510 = vadd.f32 0.0, %v2509
    %2511 = vdwg.mxu0
    %v2512 = vadd.f32 %v2431, %v2461
    %v2513 = vadd.f32 %v2434, %v2464
    %v2514 = vmul.f32 %v2512, 0.5
    %v2515 = vmul.f32 %v2513, 0.5
    %v2516 = vtanh.pop %v2514
    %v2517 = vtanh.pop %v2515
    %v2518 = vmul.f32 %v2516, 0.5
    %v2519 = vmul.f32 %v2517, 0.5
    %v2520 = vadd.f32 %v2518, 0.5
    %v2521 = vadd.f32 %v2519, 0.5
    %v2522 = vadd.f32 %v2432, %v2484
    %v2523 = vadd.f32 %v2435, %v2487
    %v2524 = vmul.f32 %v2522, 0.5
    %v2525 = vmul.f32 %v2523, 0.5
    %v2526 = vtanh.pop %v2524
    %v2527 = vtanh.pop %v2525
    %v2528 = vmul.f32 %v2526, 0.5
    %v2529 = vmul.f32 %v2527, 0.5
    %v2530 = vadd.f32 %v2528, 0.5
    %v2531 = vadd.f32 %v2529, 0.5
    %v2532 = vadd.f32 %v2507, %v1002
    %v2533 = vadd.f32 %v2510, %v1002
    %v2534 = vmul.f32 %v2520, %v2532
    %v2535 = vmul.f32 %v2521, %v2533
    %v2536 = vadd.f32 %v2433, %v2534
    %v2537 = vadd.f32 %v2436, %v2535
    %v2538 = vtanh.pop %v2536
    %v2539 = vtanh.pop %v2537
    %v2540 = vsub.f32 1.0, %v2530
    %v2541 = vsub.f32 1.0, %v2531
    %v2542 = vmul.f32 %v2540, %v2538
    %v2543 = vmul.f32 %v2541, %v2539
    %v2544 = vmul.f32 %v2530, %v2429
    %v2545 = vmul.f32 %v2531, %v2430
    %v2546 = vadd.f32 %v2542, %v2544
    %v2547 = vadd.f32 %v2543, %v2545
    %v2548 = vld [vmem:[#allocation3 + $0x90] sm:$0xff]
    %v2549 = vld [vmem:[#allocation3 + $0x98] sm:$0xff]
    %v2550 = vld [vmem:[#allocation3 + $0xa0] sm:$0xff]
    %v2551 = vld [vmem:[#allocation3 + $0xa8] sm:$0xff]
    %v2552 = vld [vmem:[#allocation3 + $0xb0] sm:$0xff]
    %v2553 = vld [vmem:[#allocation3 + $0xb8] sm:$0xff]
    %v2555 = vsel %vm2196, %v2546, 0
    %v2558 = vsel %vm2196, %v2547, 0
    %2560 = vmatpush.msra.mxu0 0.0
    %2561 = vmatpush.msra.mxu0 0.0
    %2562 = vmatpush.msra.mxu0 0.0
    %2563 = vmatpush.msra.mxu0 0.0
    %2564 = vmatpush.msra.mxu0 0.0
    %2565 = vmatpush.msra.mxu0 0.0
    %2566 = vmatpush.msra.mxu0 0.0
    %2567 = vmatpush.msra.mxu0 0.0
    %2568 = vmatpush.msra.mxu0 0.0
    %2569 = vmatpush.msra.mxu0 0.0
    %2570 = vmatpush.msra.mxu0 0.0
    %2571 = vmatpush.msra.mxu0 0.0
    %2572 = vmatpush.msra.mxu0 0.0
    %2573 = vmatpush.msra.mxu0 0.0
    %2574 = vmatpush.msra.mxu0 0.0
    %2575 = vmatpush.msra.mxu0 %v2201
    %2576 = vmatmul.f32.gmra.mxu0 %v2555
    %v2577 = vpop.f32.mrf.mxu0
    %v2578 = vadd.f32 0.0, %v2577
    %2579 = vmatmul.f32.gmra.mxu0 %v2558
    %v2580 = vpop.f32.mrf.mxu0
    %v2581 = vadd.f32 0.0, %v2580
    %2582 = vdwg.mxu0
    %2583 = vmatpush.msra.mxu0 0.0
    %2584 = vmatpush.msra.mxu0 0.0
    %2585 = vmatpush.msra.mxu0 0.0
    %2586 = vmatpush.msra.mxu0 0.0
    %2587 = vmatpush.msra.mxu0 0.0
    %2588 = vmatpush.msra.mxu0 0.0
    %2589 = vmatpush.msra.mxu0 0.0
    %2590 = vmatpush.msra.mxu0 0.0
    %2591 = vmatpush.msra.mxu0 0.0
    %2592 = vmatpush.msra.mxu0 0.0
    %2593 = vmatpush.msra.mxu0 0.0
    %2594 = vmatpush.msra.mxu0 0.0
    %2595 = vmatpush.msra.mxu0 0.0
    %2596 = vmatpush.msra.mxu0 0.0
    %2597 = vmatpush.msra.mxu0 0.0
    %2598 = vmatpush.msra.mxu0 %v2204
    %2599 = vmatmul.f32.gmra.mxu0 %v2555
    %v2600 = vpop.f32.mrf.mxu0
    %v2601 = vadd.f32 0.0, %v2600
    %2602 = vmatmul.f32.gmra.mxu0 %v2558
    %v2603 = vpop.f32.mrf.mxu0
    %v2604 = vadd.f32 0.0, %v2603
    %2605 = vdwg.mxu0
    %2606 = vmatpush.msra.mxu0 0.0
    %2607 = vmatpush.msra.mxu0 0.0
    %2608 = vmatpush.msra.mxu0 0.0
    %2609 = vmatpush.msra.mxu0 0.0
    %2610 = vmatpush.msra.mxu0 0.0
    %2611 = vmatpush.msra.mxu0 0.0
    %2612 = vmatpush.msra.mxu0 0.0
    %2613 = vmatpush.msra.mxu0 0.0
    %2614 = vmatpush.msra.mxu0 0.0
    %2615 = vmatpush.msra.mxu0 0.0
    %2616 = vmatpush.msra.mxu0 0.0
    %2617 = vmatpush.msra.mxu0 0.0
    %2618 = vmatpush.msra.mxu0 0.0
    %2619 = vmatpush.msra.mxu0 0.0
    %2620 = vmatpush.msra.mxu0 0.0
    %2621 = vmatpush.msra.mxu0 %v2207
    %2622 = vmatmul.f32.gmra.mxu0 %v2555
    %v2623 = vpop.f32.mrf.mxu0
    %v2624 = vadd.f32 0.0, %v2623
    %2625 = vmatmul.f32.gmra.mxu0 %v2558
    %v2626 = vpop.f32.mrf.mxu0
    %v2627 = vadd.f32 0.0, %v2626
    %2628 = vdwg.mxu0
    %v2629 = vadd.f32 %v2548, %v2578
    %v2630 = vadd.f32 %v2551, %v2581
    %v2631 = vmul.f32 %v2629, 0.5
    %v2632 = vmul.f32 %v2630, 0.5
    %v2633 = vtanh.pop %v2631
    %v2634 = vtanh.pop %v2632
    %v2635 = vmul.f32 %v2633, 0.5
    %v2636 = vmul.f32 %v2634, 0.5
    %v2637 = vadd.f32 %v2635, 0.5
    %v2638 = vadd.f32 %v2636, 0.5
    %v2639 = vadd.f32 %v2549, %v2601
    %v2640 = vadd.f32 %v2552, %v2604
    %v2641 = vmul.f32 %v2639, 0.5
    %v2642 = vmul.f32 %v2640, 0.5
    %v2643 = vtanh.pop %v2641
    %v2644 = vtanh.pop %v2642
    %v2645 = vmul.f32 %v2643, 0.5
    %v2646 = vmul.f32 %v2644, 0.5
    %v2647 = vadd.f32 %v2645, 0.5
    %v2648 = vadd.f32 %v2646, 0.5
    %v2649 = vadd.f32 %v2624, %v1002
    %v2650 = vadd.f32 %v2627, %v1002
    %v2651 = vmul.f32 %v2637, %v2649
    %v2652 = vmul.f32 %v2638, %v2650
    %v2653 = vadd.f32 %v2550, %v2651
    %v2654 = vadd.f32 %v2553, %v2652
    %v2655 = vtanh.pop %v2653
    %v2656 = vtanh.pop %v2654
    %v2657 = vsub.f32 1.0, %v2647
    %v2658 = vsub.f32 1.0, %v2648
    %v2659 = vmul.f32 %v2657, %v2655
    %v2660 = vmul.f32 %v2658, %v2656
    %v2661 = vmul.f32 %v2647, %v2546
    %v2662 = vmul.f32 %v2648, %v2547
    %v2663 = vadd.f32 %v2659, %v2661
    %v2664 = vadd.f32 %v2660, %v2662
    %v2665 = vld [vmem:[#allocation3 + $0xc0] sm:$0xff]
    %v2666 = vld [vmem:[#allocation3 + $0xc8] sm:$0xff]
    %v2667 = vld [vmem:[#allocation3 + $0xd0] sm:$0xff]
    %v2668 = vld [vmem:[#allocation3 + $0xd8] sm:$0xff]
    %v2669 = vld [vmem:[#allocation3 + $0xe0] sm:$0xff]
    %v2670 = vld [vmem:[#allocation3 + $0xe8] sm:$0xff]
    %v2672 = vsel %vm2196, %v2663, 0
    %v2675 = vsel %vm2196, %v2664, 0
    %2677 = vmatpush.msra.mxu0 0.0
    %2678 = vmatpush.msra.mxu0 0.0
    %2679 = vmatpush.msra.mxu0 0.0
    %2680 = vmatpush.msra.mxu0 0.0
    %2681 = vmatpush.msra.mxu0 0.0
    %2682 = vmatpush.msra.mxu0 0.0
    %2683 = vmatpush.msra.mxu0 0.0
    %2684 = vmatpush.msra.mxu0 0.0
    %2685 = vmatpush.msra.mxu0 0.0
    %2686 = vmatpush.msra.mxu0 0.0
    %2687 = vmatpush.msra.mxu0 0.0
    %2688 = vmatpush.msra.mxu0 0.0
    %2689 = vmatpush.msra.mxu0 0.0
    %2690 = vmatpush.msra.mxu0 0.0
    %2691 = vmatpush.msra.mxu0 0.0
    %2692 = vmatpush.msra.mxu0 %v2201
    %2693 = vmatmul.f32.gmra.mxu0 %v2672
    %v2694 = vpop.f32.mrf.mxu0
    %v2695 = vadd.f32 0.0, %v2694
    %2696 = vmatmul.f32.gmra.mxu0 %v2675
    %v2697 = vpop.f32.mrf.mxu0
    %v2698 = vadd.f32 0.0, %v2697
    %2699 = vdwg.mxu0
    %2700 = vmatpush.msra.mxu0 0.0
    %2701 = vmatpush.msra.mxu0 0.0
    %2702 = vmatpush.msra.mxu0 0.0
    %2703 = vmatpush.msra.mxu0 0.0
    %2704 = vmatpush.msra.mxu0 0.0
    %2705 = vmatpush.msra.mxu0 0.0
    %2706 = vmatpush.msra.mxu0 0.0
    %2707 = vmatpush.msra.mxu0 0.0
    %2708 = vmatpush.msra.mxu0 0.0
    %2709 = vmatpush.msra.mxu0 0.0
    %2710 = vmatpush.msra.mxu0 0.0
    %2711 = vmatpush.msra.mxu0 0.0
    %2712 = vmatpush.msra.mxu0 0.0
    %2713 = vmatpush.msra.mxu0 0.0
    %2714 = vmatpush.msra.mxu0 0.0
    %2715 = vmatpush.msra.mxu0 %v2204
    %2716 = vmatmul.f32.gmra.mxu0 %v2672
    %v2717 = vpop.f32.mrf.mxu0
    %v2718 = vadd.f32 0.0, %v2717
    %2719 = vmatmul.f32.gmra.mxu0 %v2675
    %v2720 = vpop.f32.mrf.mxu0
    %v2721 = vadd.f32 0.0, %v2720
    %2722 = vdwg.mxu0
    %2723 = vmatpush.msra.mxu0 0.0
    %2724 = vmatpush.msra.mxu0 0.0
    %2725 = vmatpush.msra.mxu0 0.0
    %2726 = vmatpush.msra.mxu0 0.0
    %2727 = vmatpush.msra.mxu0 0.0
    %2728 = vmatpush.msra.mxu0 0.0
    %2729 = vmatpush.msra.mxu0 0.0
    %2730 = vmatpush.msra.mxu0 0.0
    %2731 = vmatpush.msra.mxu0 0.0
    %2732 = vmatpush.msra.mxu0 0.0
    %2733 = vmatpush.msra.mxu0 0.0
    %2734 = vmatpush.msra.mxu0 0.0
    %2735 = vmatpush.msra.mxu0 0.0
    %2736 = vmatpush.msra.mxu0 0.0
    %2737 = vmatpush.msra.mxu0 0.0
    %2738 = vmatpush.msra.mxu0 %v2207
    %2739 = vmatmul.f32.gmra.mxu0 %v2672
    %v2740 = vpop.f32.mrf.mxu0
    %v2741 = vadd.f32 0.0, %v2740
    %2742 = vmatmul.f32.gmra.mxu0 %v2675
    %v2743 = vpop.f32.mrf.mxu0
    %v2744 = vadd.f32 0.0, %v2743
    %2745 = vdwg.mxu0
    %v2746 = vadd.f32 %v2665, %v2695
    %v2747 = vadd.f32 %v2668, %v2698
    %v2748 = vmul.f32 %v2746, 0.5
    %v2749 = vmul.f32 %v2747, 0.5
    %v2750 = vtanh.pop %v2748
    %v2751 = vtanh.pop %v2749
    %v2752 = vmul.f32 %v2750, 0.5
    %v2753 = vmul.f32 %v2751, 0.5
    %v2754 = vadd.f32 %v2752, 0.5
    %v2755 = vadd.f32 %v2753, 0.5
    %v2756 = vadd.f32 %v2666, %v2718
    %v2757 = vadd.f32 %v2669, %v2721
    %v2758 = vmul.f32 %v2756, 0.5
    %v2759 = vmul.f32 %v2757, 0.5
    %v2760 = vtanh.pop %v2758
    %v2761 = vtanh.pop %v2759
    %v2762 = vmul.f32 %v2760, 0.5
    %v2763 = vmul.f32 %v2761, 0.5
    %v2764 = vadd.f32 %v2762, 0.5
    %v2765 = vadd.f32 %v2763, 0.5
    %v2766 = vadd.f32 %v2741, %v1002
    %v2767 = vadd.f32 %v2744, %v1002
    %v2768 = vmul.f32 %v2754, %v2766
    %v2769 = vmul.f32 %v2755, %v2767
    %v2770 = vadd.f32 %v2667, %v2768
    %v2771 = vadd.f32 %v2670, %v2769
    %v2772 = vtanh.pop %v2770
    %v2773 = vtanh.pop %v2771
    %v2774 = vsub.f32 1.0, %v2764
    %v2775 = vsub.f32 1.0, %v2765
    %v2776 = vmul.f32 %v2774, %v2772
    %v2777 = vmul.f32 %v2775, %v2773
    %v2778 = vmul.f32 %v2764, %v2663
    %v2779 = vmul.f32 %v2765, %v2664
    %v2780 = vadd.f32 %v2776, %v2778
    %v2781 = vadd.f32 %v2777, %v2779
    %v2782 = vld [vmem:[#allocation3 + $0xf0] sm:$0xff]
    %v2783 = vld [vmem:[#allocation3 + $0xf8] sm:$0xff]
    %v2784 = vld [vmem:[#allocation3 + $0x100] sm:$0xff]
    %v2785 = vld [vmem:[#allocation3 + $0x108] sm:$0xff]
    %v2786 = vld [vmem:[#allocation3 + $0x110] sm:$0xff]
    %v2787 = vld [vmem:[#allocation3 + $0x118] sm:$0xff]
    %v2789 = vsel %vm2196, %v2780, 0
    %v2792 = vsel %vm2196, %v2781, 0
    %2794 = vmatpush.msra.mxu0 0.0
    %2795 = vmatpush.msra.mxu0 0.0
    %2796 = vmatpush.msra.mxu0 0.0
    %2797 = vmatpush.msra.mxu0 0.0
    %2798 = vmatpush.msra.mxu0 0.0
    %2799 = vmatpush.msra.mxu0 0.0
    %2800 = vmatpush.msra.mxu0 0.0
    %2801 = vmatpush.msra.mxu0 0.0
    %2802 = vmatpush.msra.mxu0 0.0
    %2803 = vmatpush.msra.mxu0 0.0
    %2804 = vmatpush.msra.mxu0 0.0
    %2805 = vmatpush.msra.mxu0 0.0
    %2806 = vmatpush.msra.mxu0 0.0
    %2807 = vmatpush.msra.mxu0 0.0
    %2808 = vmatpush.msra.mxu0 0.0
    %2809 = vmatpush.msra.mxu0 %v2201
    %2810 = vmatmul.f32.gmra.mxu0 %v2789
    %v2811 = vpop.f32.mrf.mxu0
    %v2812 = vadd.f32 0.0, %v2811
    %2813 = vmatmul.f32.gmra.mxu0 %v2792
    %v2814 = vpop.f32.mrf.mxu0
    %v2815 = vadd.f32 0.0, %v2814
    %2816 = vdwg.mxu0
    %2817 = vmatpush.msra.mxu0 0.0
    %2818 = vmatpush.msra.mxu0 0.0
    %2819 = vmatpush.msra.mxu0 0.0
    %2820 = vmatpush.msra.mxu0 0.0
    %2821 = vmatpush.msra.mxu0 0.0
    %2822 = vmatpush.msra.mxu0 0.0
    %2823 = vmatpush.msra.mxu0 0.0
    %2824 = vmatpush.msra.mxu0 0.0
    %2825 = vmatpush.msra.mxu0 0.0
    %2826 = vmatpush.msra.mxu0 0.0
    %2827 = vmatpush.msra.mxu0 0.0
    %2828 = vmatpush.msra.mxu0 0.0
    %2829 = vmatpush.msra.mxu0 0.0
    %2830 = vmatpush.msra.mxu0 0.0
    %2831 = vmatpush.msra.mxu0 0.0
    %2832 = vmatpush.msra.mxu0 %v2204
    %2833 = vmatmul.f32.gmra.mxu0 %v2789
    %v2834 = vpop.f32.mrf.mxu0
    %v2835 = vadd.f32 0.0, %v2834
    %2836 = vmatmul.f32.gmra.mxu0 %v2792
    %v2837 = vpop.f32.mrf.mxu0
    %v2838 = vadd.f32 0.0, %v2837
    %2839 = vdwg.mxu0
    %2840 = vmatpush.msra.mxu0 0.0
    %2841 = vmatpush.msra.mxu0 0.0
    %2842 = vmatpush.msra.mxu0 0.0
    %2843 = vmatpush.msra.mxu0 0.0
    %2844 = vmatpush.msra.mxu0 0.0
    %2845 = vmatpush.msra.mxu0 0.0
    %2846 = vmatpush.msra.mxu0 0.0
    %2847 = vmatpush.msra.mxu0 0.0
    %2848 = vmatpush.msra.mxu0 0.0
    %2849 = vmatpush.msra.mxu0 0.0
    %2850 = vmatpush.msra.mxu0 0.0
    %2851 = vmatpush.msra.mxu0 0.0
    %2852 = vmatpush.msra.mxu0 0.0
    %2853 = vmatpush.msra.mxu0 0.0
    %2854 = vmatpush.msra.mxu0 0.0
    %2855 = vmatpush.msra.mxu0 %v2207
    %2856 = vmatmul.f32.gmra.mxu0 %v2789
    %v2857 = vpop.f32.mrf.mxu0
    %v2858 = vadd.f32 0.0, %v2857
    %2859 = vmatmul.f32.gmra.mxu0 %v2792
    %v2860 = vpop.f32.mrf.mxu0
    %v2861 = vadd.f32 0.0, %v2860
    %2862 = vdwg.mxu0
    %v2863 = vadd.f32 %v2782, %v2812
    %v2864 = vadd.f32 %v2785, %v2815
    %v2865 = vmul.f32 %v2863, 0.5
    %v2866 = vmul.f32 %v2864, 0.5
    %v2867 = vtanh.pop %v2865
    %v2868 = vtanh.pop %v2866
    %v2869 = vmul.f32 %v2867, 0.5
    %v2870 = vmul.f32 %v2868, 0.5
    %v2871 = vadd.f32 %v2869, 0.5
    %v2872 = vadd.f32 %v2870, 0.5
    %v2873 = vadd.f32 %v2783, %v2835
    %v2874 = vadd.f32 %v2786, %v2838
    %v2875 = vmul.f32 %v2873, 0.5
    %v2876 = vmul.f32 %v2874, 0.5
    %v2877 = vtanh.pop %v2875
    %v2878 = vtanh.pop %v2876
    %v2879 = vmul.f32 %v2877, 0.5
    %v2880 = vmul.f32 %v2878, 0.5
    %v2881 = vadd.f32 %v2879, 0.5
    %v2882 = vadd.f32 %v2880, 0.5
    %v2883 = vadd.f32 %v2858, %v1002
    %v2884 = vadd.f32 %v2861, %v1002
    %v2885 = vmul.f32 %v2871, %v2883
    %v2886 = vmul.f32 %v2872, %v2884
    %v2887 = vadd.f32 %v2784, %v2885
    %v2888 = vadd.f32 %v2787, %v2886
    %v2889 = vtanh.pop %v2887
    %v2890 = vtanh.pop %v2888
    %v2891 = vsub.f32 1.0, %v2881
    %v2892 = vsub.f32 1.0, %v2882
    %v2893 = vmul.f32 %v2891, %v2889
    %v2894 = vmul.f32 %v2892, %v2890
    %v2895 = vmul.f32 %v2881, %v2780
    %v2896 = vmul.f32 %v2882, %v2781
    %v2897 = vadd.f32 %v2893, %v2895
    %v2898 = vadd.f32 %v2894, %v2896
    %2900 = vrot.lane.b32.xlu0 %v2897, 10
    %v2901 = vpop.permute.xlu0 %2900
    %2904 = vrot.lane.b32.xlu0 %v2898, 15
    %v2905 = vpop.permute.xlu0 %2904
    %v2907 = vsel %vm1006, %v2189, %v2901
    %vm2908 = vcmask 121856
    %v2909 = vsel %vm2908, %v2907, %v2905
    %v2910 = vld [vmem:[%s3 + $0x120] sm:$0xff]
    %v2911 = vld [vmem:[%s3 + $0x138] sm:$0xff]
    %v2912 = vld [vmem:[%s3 + $0x150] sm:$0xf]
    %v2913 = vld [vmem:[%s3 + $0x168] ss:$0 sm:$0xff]
    %vm2914 = vcmask 162816
    %v2916 = vsel %vm2914, %v2909, 0
    %v2919 = vsel %vm415, %v2912, 0
    %2921 = vmatpush.msra.mxu0 0.0
    %2922 = vmatpush.msra.mxu0 0.0
    %2923 = vmatpush.msra.mxu0 0.0
    %2924 = vmatpush.msra.mxu0 0.0
    %2925 = vmatpush.msra.mxu0 0.0
    %2926 = vmatpush.msra.mxu0 0.0
    %2927 = vmatpush.msra.mxu0 0.0
    %2928 = vmatpush.msra.mxu0 0.0
    %2929 = vmatpush.msra.mxu0 0.0
    %2930 = vmatpush.msra.mxu0 0.0
    %2931 = vmatpush.msra.mxu0 0.0
    %2932 = vmatpush.msra.mxu0 0.0
    %2933 = vmatpush.msra.mxu0 0.0
    %2934 = vmatpush.msra.mxu0 %v2919
    %2935 = vmatpush.msra.mxu0 %v2911
    %2936 = vmatpush.msra.mxu0 %v2910
    %2937 = vmatmul.f32.gmra.mxu0 %v2916
    %v2938 = vpop.f32.mrf.mxu0
    %v2939 = vadd.f32 %v2913, %v2938
    %2940 = vdwg.mxu0
    %s2941 = sld [smem:[#allocation4]]
    %v2942 = vstv %s2941
    %v2943 = vmul.f32 %v2942, %v237
    %v2944 = vadd.f32 %v2943, 0.0
    %s2945 = sld [smem:[#allocation4 + $0x1]]
    %v2946 = vstv %s2945
    %v2947 = vmul.f32 %v2946, %v238
    %v2948 = vadd.f32 %v2944, %v2947
    %s2949 = sld [smem:[#allocation4 + $0x2]]
    %v2950 = vstv %s2949
    %v2951 = vmul.f32 %v2950, %v239
    %v2952 = vadd.f32 %v2948, %v2951
    %s2953 = sld [smem:[#allocation4 + $0x3]]
    %v2954 = vstv %s2953
    %v2955 = vmul.f32 %v2954, %v240
    %v2956 = vadd.f32 %v2952, %v2955
    %s2957 = sld [smem:[#allocation4 + $0x4]]
    %v2958 = vstv %s2957
    %v2959 = vadd.f32 %v2956, %v2958
    %v2960 = vadd.f32 %v2939, %v2959
    %v2961 = vmul.f32 %v2960, %v209
    %v2962 = vld [vmem:[%s2] sm:$0xff]
    %v2963 = vsub.f32 %v2961, %v2962
    %v2964 = vand.u32 2147483647, %v2963
    %v2965 = vsel %vm66, %v2964, 0.0
    %2966 = vadd.xlane.f32.xlu0 %v2965
    %v2967 = vpop.xlane.xlu0 %2966
    %v2968 = vrot.slane %v2967, 4
    %v2969 = vadd.f32 %v2967, %v2968
    %v2970 = vrot.slane %v2969, 2
    %v2971 = vadd.f32 %v2969, %v2970
    %v2972 = vrot.slane %v2971, 1
    %v2973 = vadd.f32 %v2971, %v2972
    %s2974 = vtos %v2973
    %v2975 = vrcp.pop 32.0
    %v2976 = vmul.f32 32.0, %v2975
    %v2977 = vsub.f32 1.0, %v2976
    %v2978 = vmul.f32 %v2975, %v2977
    %v2979 = vadd.f32 %v2975, %v2978
    %vm2980 = vweird.f32 %v2975
    %v2981 = vsel %vm2980, %v2975, %v2979
    %s2982 = vtos %v2981
    %s2983 = smul.f32 %s2974, %s2982
    %s2984 = scalar_lea.smem [#allocation7], 0
    %2985 = sst [smem:[%s2984]] %s2983
    // Predicated region
    $region26: #{lstnet_train_loss.1} parent=1 // pred_check
      _
    $region27: #{lstnet_train_loss.1} parent=1 // pred_check_branch
      %2987 = sbr.rel (0) target = $region29
    $region28: #{lstnet_train_loss.1} parent=1 // pred_region
      %2989 = vsyncadd [#allocation5], 0
      %s2991 = sshll.u32 %s5, 4
      %s2992 = int_to_ptr.hbm [resolvable:$true] %s2991
      %2994 = dma.smem_to_hbm [#allocation7], 16, %s2992, [#allocation5]
    $region29: #{lstnet_train_loss.1} parent=1 // pred_fallthru
      _
    // Predicated region
    $region30: #{lstnet_train_loss.1} parent=1 // pred_check
      _
    $region31: #{lstnet_train_loss.1} parent=1 // pred_check_branch
      %2996 = sbr.rel (0) target = $region33
    $region32: #{lstnet_train_loss.1} parent=1 // pred_region
      %2998 = dma.done [#allocation5], 16
    $region33: #{lstnet_train_loss.1} parent=1 // pred_fallthru
      _
    %2999 = sfence
    %3000 = vsyncpa [#allocation5], 1
    %3001 = vsyncpa [#allocation6], 1

</llo_original>
